<compile_context>
chip_gen: v7x
topology: tpu7x:2x2x1
jax: 0.10.0
libtpu: 0.0.40
codegen_flags: <defaults>
</compile_context>

<pallas_src>
import functools

import jax
import jax.numpy as jnp
from jax.experimental import pallas as pl
from jax.experimental.pallas import tpu as pltpu

# Explicit scoped-VMEM budget: under v7x's 64 MiB/TC with headroom; plenty of
# slack on v5e/v6e (128 MiB).  The actual working set at hw_tile=1024 is far
# smaller (~15-20 MiB including double buffers).
_VMEM_LIMIT_BYTES = 48 * 1024 * 1024


def _round_up(x, m):
    return (x + m - 1) // m * m


# ----------------------------------------------------------------------------
# Fused kernel: stem conv + BN + SiLU -> 1x1 head + BN + SiLU -> pooled mean
#               -> (last tile) SE block + classifier -> sigmoid output
# ----------------------------------------------------------------------------
def fused_forward_kernel(p_ref, sw_ref, ss_ref, sb_ref, hw_ref, hs_ref, hb_ref,
                         w1_ref, w2_ref, wc1_ref, bc1_ref, wc2_ref, bc2_ref,
                         out_ref, acc_ref, *, hw_valid, hw_tile, inv_hw,
                         needs_mask, compute_dtype):
    m = pl.program_id(1)

    @pl.when(m == 0)
    def _init():
        acc_ref[...] = jnp.zeros_like(acc_ref)

    patches = p_ref[0]                                        # (hw_tile, Kp)
    # stem: Conv3x3/s2 as matmul + folded BatchNorm (eval) + SiLU
    y = jnp.dot(patches, sw_ref[...], preferred_element_type=jnp.float32)
    y = y * ss_ref[...] + sb_ref[...]
    y = y * jax.nn.sigmoid(y)                                 # (hw_tile, 32)
    # TODO(synk): 16 pretrained MBConv blocks of efficientnet_b0.features omitted.
    # head: Conv1x1 -> 1280 + folded BatchNorm + SiLU
    z = jnp.dot(y.astype(compute_dtype), hw_ref[...],
                preferred_element_type=jnp.float32)
    z = z * hs_ref[...] + hb_ref[...]
    z = z * jax.nn.sigmoid(z)                                 # (hw_tile, 1280)
    if needs_mask:  # static: only emitted when HW was padded to a tile multiple
        row_ids = (jax.lax.broadcasted_iota(jnp.int32, (hw_tile, 1), 0)
                   + m * hw_tile)
        z = jnp.where(row_ids < hw_valid, z, 0.0)
    # fused adaptive-avg-pool: running spatial sum in a per-b VMEM accumulator
    acc_ref[...] += jnp.sum(z, axis=0, keepdims=True)         # (1, 1280) f32

    @pl.when(m == pl.num_programs(1) - 1)
    def _finish():
        pooled = acc_ref[...] * inv_hw                        # (1, 1280) mean
        # SEBlock: fc1 -> ReLU -> fc2 -> sigmoid on the spatial mean
        h = jnp.dot(pooled.astype(compute_dtype), w1_ref[...],
                    preferred_element_type=jnp.float32)
        h = jnp.maximum(h, 0.0)
        se = jax.nn.sigmoid(jnp.dot(h.astype(compute_dtype), w2_ref[...],
                                    preferred_element_type=jnp.float32))
        # channel rescale + avg pool collapsed exactly: mean(f*se) == mean(f)*se
        pooled = pooled * se
        # classifier (Dropout identity in eval): Linear -> ReLU -> Linear -> Sigmoid
        c = jnp.dot(pooled.astype(compute_dtype), wc1_ref[...],
                    preferred_element_type=jnp.float32) + bc1_ref[...]
        c = jnp.maximum(c, 0.0)                               # (1, 512)
        # 512 -> 1 projection as a VPU mul + lane reduction (N=1 MXU pass wasted)
        logits = jnp.sum(c * wc2_ref[...], axis=-1, keepdims=True) + bc2_ref[...]
        out_ref[...] = jax.nn.sigmoid(logits).reshape(out_ref.shape)


def stem_head_se_classifier(patches, stem_wt, stem_scale, stem_bias,
                            head_wt, head_scale, head_bias,
                            se_w1t, se_w2t, cls_w1t, cls_b1, cls_w2_row, cls_b2,
                            *, hw_tile=1024, compute_dtype=jnp.bfloat16):
    """patches: (B, HW, Kp) f32.  Returns (B, 1) sigmoid outputs (f32)."""
    B, HW, Kp = patches.shape
    Cout = head_wt.shape[1]

    # Tile selection: multiple of 16 sublanes (valid for f32 and bf16), capped
    # at hw_tile (default 1024) so the (tile, 1280) f32 intermediate stays well
    # inside v7x's 64 MiB VMEM.  HW is padded up to a tile multiple; padded
    # rows are masked out of the pooled sum inside the kernel.
    tile = min(hw_tile, _round_up(HW, 16))
    HWp = _round_up(HW, tile)
    if HWp != HW:
        patches = jnp.pad(patches, ((0, 0), (0, HWp - HW), (0, 0)))
    n_hw = HWp // tile

    if compute_dtype != jnp.float32:    # bf16 MXU path: halves operand DMA bytes
        patches = patches.astype(compute_dtype)
        stem_wt = stem_wt.astype(compute_dtype)
        head_wt = head_wt.astype(compute_dtype)
        se_w1t = se_w1t.astype(compute_dtype)
        se_w2t = se_w2t.astype(compute_dtype)
        cls_w1t = cls_w1t.astype(compute_dtype)

    kernel = functools.partial(
        fused_forward_kernel, hw_valid=HW, hw_tile=tile, inv_hw=1.0 / HW,
        needs_mask=(HWp != HW), compute_dtype=compute_dtype)

    def full(a):  # constant-index, full-array block
        return pl.BlockSpec(a.shape, lambda b, m, _nd=a.ndim: (0,) * _nd)

    out = pl.pallas_call(
        kernel,
        out_shape=jax.ShapeDtypeStruct((B, 1, 1), jnp.float32),
        grid_spec=pltpu.PrefetchScalarGridSpec(
            num_scalar_prefetch=0,
            grid=(B, n_hw),
            in_specs=[
                pl.BlockSpec((1, tile, Kp), lambda b, m: (b, m, 0)),
                full(stem_wt), full(stem_scale), full(stem_bias),
                full(head_wt), full(head_scale), full(head_bias),
                full(se_w1t), full(se_w2t),
                full(cls_w1t), full(cls_b1), full(cls_w2_row), full(cls_b2),
            ],
            # per-batch output block: no cross-b read-modify-write, and the
            # batch axis can be safely sharded across TensorCores.
            out_specs=pl.BlockSpec((1, 1, 1), lambda b, m: (b, 0, 0)),
            scratch_shapes=[pltpu.VMEM((1, Cout), jnp.float32)],
        ),
        compiler_params=pltpu.CompilerParams(
            dimension_semantics=("parallel", "arbitrary"),
            vmem_limit_bytes=_VMEM_LIMIT_BYTES),
    )(patches, stem_wt, stem_scale, stem_bias, head_wt, head_scale, head_bias,
      se_w1t, se_w2t, cls_w1t, cls_b1, cls_w2_row, cls_b2)
    return out.reshape(B, 1)


# ----------------------------------------------------------------------------
# Glue: im2col for the 3x3/stride-2/pad-1 stem conv (NCHW input), K padded
#       (27 -> 32) so the lane-axis load of the patch matrix is unmasked.
# ----------------------------------------------------------------------------
def im2col_3x3_s2_p1(x):
    """x: (B, C, H, W) -> patches (B, Ho*Wo, Kp), ordering (C, kh, kw)."""
    B, C, H, W = x.shape
    Ho, Wo = H // 2, W // 2
    xp = jnp.pad(x, ((0, 0), (0, 0), (1, 1), (1, 1)))
    cols = []
    for kh in range(3):
        for kw in range(3):
            cols.append(xp[:, :, kh:kh + 2 * Ho:2, kw:kw + 2 * Wo:2])  # (B,C,Ho,Wo)
    patches = jnp.stack(cols, axis=2)                     # (B, C, 9, Ho, Wo)
    patches = patches.transpose(0, 3, 4, 1, 2)            # (B, Ho, Wo, C, 9)
    patches = patches.reshape(B, Ho * Wo, C * 9)          # (B, HW, 27)
    K = C * 9
    Kp = _round_up(K, 8)                                  # 27 -> 32
    if Kp > K:
        patches = jnp.pad(patches, ((0, 0), (0, 0), (0, Kp - K)))
    return patches, Ho, Wo


def fold_bn(gamma, beta, mean, var, eps=1e-5):
    scale = gamma / jnp.sqrt(var + eps)
    bias = beta - mean * scale
    return scale[None, :], bias[None, :]


# ----------------------------------------------------------------------------
# Full forward
# ----------------------------------------------------------------------------
def efficientnet_with_se_forward(x, params, *, hw_tile=1024,
                                 compute_dtype=jnp.bfloat16):
    patches, Ho, Wo = im2col_3x3_s2_p1(x)                   # (B, HW, Kp)
    Kp = patches.shape[-1]
    stem_w2d = params["stem_w"].reshape(params["stem_w"].shape[0], -1)  # (32, 27)
    stem_wt = jnp.pad(stem_w2d.T, ((0, Kp - stem_w2d.shape[1]), (0, 0)))  # (Kp, 32)
    stem_scale, stem_bias = fold_bn(*params["stem_bn"])
    head_wt = params["head_w"].T                            # (32, 1280)
    head_scale, head_bias = fold_bn(*params["head_bn"])

    return stem_head_se_classifier(
        patches, stem_wt, stem_scale, stem_bias,
        head_wt, head_scale, head_bias,
        params["se_w1"].T,                    # (1280, 80)
        params["se_w2"].T,                    # (80, 1280)
        params["cls_w1"].T,                   # (1280, 512)
        params["cls_b1"][None, :],            # (1, 512)
        params["cls_w2"],                     # (1, 512)  (used as a VPU reduce row)
        params["cls_b2"][None, :],            # (1, 1)
        hw_tile=hw_tile, compute_dtype=compute_dtype)       # (B, 1)


# ----------------------------------------------------------------------------
# Pure-JAX reference (un-fused, un-collapsed math) for a sanity check
# ----------------------------------------------------------------------------
def reference_forward(x, params):
    patches, Ho, Wo = im2col_3x3_s2_p1(x)
    Kp = patches.shape[-1]
    sw2d = params["stem_w"].reshape(params["stem_w"].shape[0], -1)
    sw = jnp.pad(sw2d.T, ((0, Kp - sw2d.shape[1]), (0, 0)))
    ss, sb = fold_bn(*params["stem_bn"])
    y = patches @ sw * ss + sb
    y = y * jax.nn.sigmoid(y)
    hs, hb = fold_bn(*params["head_bn"])
    z = y @ params["head_w"].T * hs + hb
    z = z * jax.nn.sigmoid(z)                                # (B, HW, 1280)
    se_in = jnp.mean(z, axis=1)
    se = jax.nn.sigmoid(
        jnp.maximum(se_in @ params["se_w1"].T, 0.0) @ params["se_w2"].T)
    pooled = jnp.mean(z * se[:, None, :], axis=1)            # un-collapsed form
    c = jnp.maximum(pooled @ params["cls_w1"].T + params["cls_b1"], 0.0)
    return jax.nn.sigmoid(c @ params["cls_w2"].T + params["cls_b2"])


# ----------------------------------------------------------------------------
# Deterministic parameter construction (shapes from the module __init__)
# ----------------------------------------------------------------------------
def make_params(key):
    C_FEAT = 1280                      # efficientnet_b0 classifier[1].in_features
    C_RED = C_FEAT // 16               # SEBlock reduction=16 -> 80
    ks = jax.random.split(key, 16)
    p = {}
    p["stem_w"] = 0.1 * jax.random.normal(ks[0], (32, 3, 3, 3), jnp.float32)
    p["stem_bn"] = (1.0 + 0.05 * jax.random.normal(ks[1], (32,), jnp.float32),
                    0.05 * jax.random.normal(ks[2], (32,), jnp.float32),
                    0.05 * jax.random.normal(ks[3], (32,), jnp.float32),
                    0.5 + jax.random.uniform(ks[4], (32,), jnp.float32))
    p["head_w"] = 0.05 * jax.random.normal(ks[5], (C_FEAT, 32), jnp.float32)
    p["head_bn"] = (1.0 + 0.05 * jax.random.normal(ks[6], (C_FEAT,), jnp.float32),
                    0.05 * jax.random.normal(ks[7], (C_FEAT,), jnp.float32),
                    0.05 * jax.random.normal(ks[8], (C_FEAT,), jnp.float32),
                    0.5 + jax.random.uniform(ks[9], (C_FEAT,), jnp.float32))
    p["se_w1"] = 0.03 * jax.random.normal(ks[10], (C_RED, C_FEAT), jnp.float32)
    p["se_w2"] = 0.03 * jax.random.normal(ks[11], (C_FEAT, C_RED), jnp.float32)
    p["cls_w1"] = 0.03 * jax.random.normal(ks[12], (512, C_FEAT), jnp.float32)
    p["cls_b1"] = 0.01 * jax.random.normal(ks[13], (512,), jnp.float32)
    p["cls_w2"] = 0.03 * jax.random.normal(ks[14], (1, 512), jnp.float32)
    p["cls_b2"] = 0.01 * jax.random.normal(ks[15], (1,), jnp.float32)
    return p


if __name__ == "__main__":
    key = jax.random.PRNGKey(0)
    pkey, xkey = jax.random.split(key)
    params = make_params(pkey)
    # NCHW image input, small spatial size (module forward implies B,3,H,W)
    x = jax.random.normal(xkey, (2, 3, 16, 16), jnp.float32)

    # f32 path (exactness check against the un-fused reference)
    fwd_f32 = jax.jit(functools.partial(efficientnet_with_se_forward,
                                        compute_dtype=jnp.float32))
    out_f32 = jax.block_until_ready(fwd_f32(x, params))
    assert out_f32.shape == (2, 1), out_f32.shape

    ref = reference_forward(x, params)
    assert jnp.allclose(out_f32, ref, rtol=1e-4, atol=1e-4), (out_f32, ref)

    # bf16 MXU path (the default): same structure, looser tolerance.
    fwd_bf16 = jax.jit(functools.partial(efficientnet_with_se_forward,
                                         compute_dtype=jnp.bfloat16))
    out_bf16 = jax.block_until_ready(fwd_bf16(x, params))
    assert out_bf16.shape == (2, 1), out_bf16.shape
    assert jnp.allclose(out_bf16, ref, atol=2e-2), (out_bf16, ref)

    print("KERNEL_OK")
</pallas_src>

<mosaic_0001>
module attributes {stable_mosaic.version = 11 : i64} {
  func.func @fused_forward_kernel(%arg0: i32, %arg1: i32, %arg2: memref<1x64x32xf32, #tpu.memory_space<vmem>>, %arg3: memref<32x32xf32, #tpu.memory_space<vmem>>, %arg4: memref<1x32xf32, #tpu.memory_space<vmem>>, %arg5: memref<1x32xf32, #tpu.memory_space<vmem>>, %arg6: memref<32x1280xf32, #tpu.memory_space<vmem>>, %arg7: memref<1x1280xf32, #tpu.memory_space<vmem>>, %arg8: memref<1x1280xf32, #tpu.memory_space<vmem>>, %arg9: memref<1280x80xf32, #tpu.memory_space<vmem>>, %arg10: memref<80x1280xf32, #tpu.memory_space<vmem>>, %arg11: memref<1280x512xf32, #tpu.memory_space<vmem>>, %arg12: memref<1x512xf32, #tpu.memory_space<vmem>>, %arg13: memref<1x512xf32, #tpu.memory_space<vmem>>, %arg14: memref<1x1xf32, #tpu.memory_space<vmem>>, %arg15: memref<1x1x1xf32, #tpu.memory_space<vmem>>, %arg16: memref<1x1280xf32, #tpu.memory_space<vmem>>) attributes {dimension_semantics = [#tpu.dimension_semantics<parallel>, #tpu.dimension_semantics<arbitrary>], iteration_bounds = array<i64: 2, 1>, scalar_prefetch = 0 : i64, scratch_operands = 1 : i64, tpu.core_type = #tpu.core_type<tc>, window_params = [{transform_indices = @transform_0, window_bounds = array<i64: 1, 64, 32>}, {pipeline_mode = #tpu.pipeline_mode<synchronous>, transform_indices = @transform_1, window_bounds = array<i64: 32, 32>}, {pipeline_mode = #tpu.pipeline_mode<synchronous>, transform_indices = @transform_2, window_bounds = array<i64: 1, 32>}, {pipeline_mode = #tpu.pipeline_mode<synchronous>, transform_indices = @transform_3, window_bounds = array<i64: 1, 32>}, {pipeline_mode = #tpu.pipeline_mode<synchronous>, transform_indices = @transform_4, window_bounds = array<i64: 32, 1280>}, {pipeline_mode = #tpu.pipeline_mode<synchronous>, transform_indices = @transform_5, window_bounds = array<i64: 1, 1280>}, {pipeline_mode = #tpu.pipeline_mode<synchronous>, transform_indices = @transform_6, window_bounds = array<i64: 1, 1280>}, {pipeline_mode = #tpu.pipeline_mode<synchronous>, transform_indices = @transform_7, window_bounds = array<i64: 1280, 80>}, {pipeline_mode = #tpu.pipeline_mode<synchronous>, transform_indices = @transform_8, window_bounds = array<i64: 80, 1280>}, {pipeline_mode = #tpu.pipeline_mode<synchronous>, transform_indices = @transform_9, window_bounds = array<i64: 1280, 512>}, {pipeline_mode = #tpu.pipeline_mode<synchronous>, transform_indices = @transform_10, window_bounds = array<i64: 1, 512>}, {pipeline_mode = #tpu.pipeline_mode<synchronous>, transform_indices = @transform_11, window_bounds = array<i64: 1, 512>}, {pipeline_mode = #tpu.pipeline_mode<synchronous>, transform_indices = @transform_12, window_bounds = array<i64: 1, 1>}, {transform_indices = @transform_13, window_bounds = array<i64: 1, 1, 1>}]} {
    %c0_i32 = arith.constant 0 : i32
    %0 = arith.cmpi eq, %arg1, %c0_i32 : i32
    %1 = arith.extui %0 : i1 to i32
    %c0_i32_0 = arith.constant 0 : i32
    %2 = arith.cmpi ne, %1, %c0_i32_0 : i32
    scf.if %2 {
      %cst_25 = arith.constant 0.000000e+00 : f32
      %41 = vector.broadcast %cst_25 : f32 to vector<1x1280xf32>
      %c0_26 = arith.constant 0 : index
      %c0_27 = arith.constant 0 : index
      %42 = vector.load %arg16[%c0_26, %c0_27] : memref<1x1280xf32, #tpu.memory_space<vmem>>, vector<1x1280xf32>
      tpu.vector_store %arg16[%c0_26, %c0_27], %41 {strides = array<i32>} : memref<1x1280xf32, #tpu.memory_space<vmem>>, vector<1x1280xf32>,
    } else {
    }
    %c0 = arith.constant 0 : index
    %c0_1 = arith.constant 0 : index
    %c0_2 = arith.constant 0 : index
    %3 = vector.load %arg2[%c0, %c0_1, %c0_2] : memref<1x64x32xf32, #tpu.memory_space<vmem>>, vector<1x64x32xf32>
    %4 = vector.shape_cast %3 : vector<1x64x32xf32> to vector<64x32xf32>
    %c0_3 = arith.constant 0 : index
    %c0_4 = arith.constant 0 : index
    %5 = vector.load %arg3[%c0_3, %c0_4] : memref<32x32xf32, #tpu.memory_space<vmem>>, vector<32x32xf32>
    %cst = arith.constant dense<0.000000e+00> : vector<64x32xf32>
    %6 = tpu.matmul %4, %5, %cst {dimension_numbers = #tpu.dot_dimension_numbers<[1], [0], [0], [1], [0, 0, 1, 1], [], []>} : vector<64x32xf32>, vector<32x32xf32>, vector<64x32xf32> -> vector<64x32xf32>
    %c0_5 = arith.constant 0 : index
    %c0_6 = arith.constant 0 : index
    %7 = vector.load %arg4[%c0_5, %c0_6] : memref<1x32xf32, #tpu.memory_space<vmem>>, vector<1x32xf32>
    %8 = vector.broadcast %7 : vector<1x32xf32> to vector<64x32xf32>
    %9 = arith.mulf %6, %8 : vector<64x32xf32>
    %c0_7 = arith.constant 0 : index
    %c0_8 = arith.constant 0 : index
    %10 = vector.load %arg5[%c0_7, %c0_8] : memref<1x32xf32, #tpu.memory_space<vmem>>, vector<1x32xf32>
    %11 = vector.broadcast %10 : vector<1x32xf32> to vector<64x32xf32>
    %12 = arith.addf %9, %11 : vector<64x32xf32>
    %13 = arith.negf %12 : vector<64x32xf32>
    %14 = math.exp %13 : vector<64x32xf32>
    %cst_9 = arith.constant 1.000000e+00 : f32
    %15 = vector.broadcast %cst_9 : f32 to vector<64x32xf32>
    %16 = arith.addf %15, %14 : vector<64x32xf32>
    %17 = arith.divf %15, %16 : vector<64x32xf32>
    %18 = arith.mulf %12, %17 : vector<64x32xf32>
    %c0_10 = arith.constant 0 : index
    %c0_11 = arith.constant 0 : index
    %19 = vector.load %arg6[%c0_10, %c0_11] : memref<32x1280xf32, #tpu.memory_space<vmem>>, vector<32x1280xf32>
    %cst_12 = arith.constant dense<0.000000e+00> : vector<64x1280xf32>
    %20 = tpu.matmul %18, %19, %cst_12 {dimension_numbers = #tpu.dot_dimension_numbers<[1], [0], [0], [1], [0, 0, 1, 1], [], []>} : vector<64x32xf32>, vector<32x1280xf32>, vector<64x1280xf32> -> vector<64x1280xf32>
    %c0_13 = arith.constant 0 : index
    %c0_14 = arith.constant 0 : index
    %21 = vector.load %arg7[%c0_13, %c0_14] : memref<1x1280xf32, #tpu.memory_space<vmem>>, vector<1x1280xf32>
    %22 = vector.broadcast %21 : vector<1x1280xf32> to vector<64x1280xf32>
    %23 = arith.mulf %20, %22 : vector<64x1280xf32>
    %c0_15 = arith.constant 0 : index
    %c0_16 = arith.constant 0 : index
    %24 = vector.load %arg8[%c0_15, %c0_16] : memref<1x1280xf32, #tpu.memory_space<vmem>>, vector<1x1280xf32>
    %25 = vector.broadcast %24 : vector<1x1280xf32> to vector<64x1280xf32>
    %26 = arith.addf %23, %25 : vector<64x1280xf32>
    %27 = arith.negf %26 : vector<64x1280xf32>
    %28 = math.exp %27 : vector<64x1280xf32>
    %cst_17 = arith.constant 1.000000e+00 : f32
    %29 = vector.broadcast %cst_17 : f32 to vector<64x1280xf32>
    %30 = arith.addf %29, %28 : vector<64x1280xf32>
    %31 = arith.divf %29, %30 : vector<64x1280xf32>
    %32 = arith.mulf %26, %31 : vector<64x1280xf32>
    %c0_18 = arith.constant 0 : index
    %c0_19 = arith.constant 0 : index
    %33 = vector.load %arg16[%c0_18, %c0_19] : memref<1x1280xf32, #tpu.memory_space<vmem>>, vector<1x1280xf32>
    %cst_20 = arith.constant dense<0.000000e+00> : vector<1280xf32>
    %34 = vector.multi_reduction <add>, %32, %cst_20 [0] : vector<64x1280xf32> to vector<1280xf32>
    %35 = vector.shape_cast %34 : vector<1280xf32> to vector<1x1280xf32>
    %36 = arith.addf %33, %35 : vector<1x1280xf32>
    %c0_21 = arith.constant 0 : index
    %c0_22 = arith.constant 0 : index
    %37 = vector.load %arg16[%c0_21, %c0_22] : memref<1x1280xf32, #tpu.memory_space<vmem>>, vector<1x1280xf32>
    tpu.vector_store %arg16[%c0_21, %c0_22], %36 {strides = array<i32>} : memref<1x1280xf32, #tpu.memory_space<vmem>>, vector<1x1280xf32>,
    %c0_i32_23 = arith.constant 0 : i32
    %38 = arith.cmpi eq, %arg1, %c0_i32_23 : i32
    %39 = arith.extui %38 : i1 to i32
    %c0_i32_24 = arith.constant 0 : i32
    %40 = arith.cmpi ne, %39, %c0_i32_24 : i32
    scf.if %40 {
      %c0_25 = arith.constant 0 : index
      %c0_26 = arith.constant 0 : index
      %41 = vector.load %arg16[%c0_25, %c0_26] : memref<1x1280xf32, #tpu.memory_space<vmem>>, vector<1x1280xf32>
      %cst_27 = arith.constant 1.562500e-02 : f32
      %42 = vector.broadcast %cst_27 : f32 to vector<1x1280xf32>
      %43 = arith.mulf %41, %42 : vector<1x1280xf32>
      %c0_28 = arith.constant 0 : index
      %c0_29 = arith.constant 0 : index
      %44 = vector.load %arg9[%c0_28, %c0_29] : memref<1280x80xf32, #tpu.memory_space<vmem>>, vector<1280x80xf32>
      %cst_30 = arith.constant dense<0.000000e+00> : vector<1x80xf32>
      %45 = tpu.matmul %43, %44, %cst_30 {dimension_numbers = #tpu.dot_dimension_numbers<[1], [0], [0], [1], [0, 0, 1, 1], [], []>} : vector<1x1280xf32>, vector<1280x80xf32>, vector<1x80xf32> -> vector<1x80xf32>
      %cst_31 = arith.constant 0.000000e+00 : f32
      %46 = vector.broadcast %cst_31 : f32 to vector<1x80xf32>
      %47 = arith.maximumf %45, %46 : vector<1x80xf32>
      %c0_32 = arith.constant 0 : index
      %c0_33 = arith.constant 0 : index
      %48 = vector.load %arg10[%c0_32, %c0_33] : memref<80x1280xf32, #tpu.memory_space<vmem>>, vector<80x1280xf32>
      %cst_34 = arith.constant dense<0.000000e+00> : vector<1x1280xf32>
      %49 = tpu.matmul %47, %48, %cst_34 {dimension_numbers = #tpu.dot_dimension_numbers<[1], [0], [0], [1], [0, 0, 1, 1], [], []>} : vector<1x80xf32>, vector<80x1280xf32>, vector<1x1280xf32> -> vector<1x1280xf32>
      %50 = arith.negf %49 : vector<1x1280xf32>
      %51 = math.exp %50 : vector<1x1280xf32>
      %cst_35 = arith.constant 1.000000e+00 : f32
      %52 = vector.broadcast %cst_35 : f32 to vector<1x1280xf32>
      %53 = arith.addf %52, %51 : vector<1x1280xf32>
      %54 = arith.divf %52, %53 : vector<1x1280xf32>
      %55 = arith.mulf %43, %54 : vector<1x1280xf32>
      %c0_36 = arith.constant 0 : index
      %c0_37 = arith.constant 0 : index
      %56 = vector.load %arg11[%c0_36, %c0_37] : memref<1280x512xf32, #tpu.memory_space<vmem>>, vector<1280x512xf32>
      %cst_38 = arith.constant dense<0.000000e+00> : vector<1x512xf32>
      %57 = tpu.matmul %55, %56, %cst_38 {dimension_numbers = #tpu.dot_dimension_numbers<[1], [0], [0], [1], [0, 0, 1, 1], [], []>} : vector<1x1280xf32>, vector<1280x512xf32>, vector<1x512xf32> -> vector<1x512xf32>
      %c0_39 = arith.constant 0 : index
      %c0_40 = arith.constant 0 : index
      %58 = vector.load %arg12[%c0_39, %c0_40] : memref<1x512xf32, #tpu.memory_space<vmem>>, vector<1x512xf32>
      %59 = arith.addf %57, %58 : vector<1x512xf32>
      %cst_41 = arith.constant 0.000000e+00 : f32
      %60 = vector.broadcast %cst_41 : f32 to vector<1x512xf32>
      %61 = arith.maximumf %59, %60 : vector<1x512xf32>
      %c0_42 = arith.constant 0 : index
      %c0_43 = arith.constant 0 : index
      %62 = vector.load %arg13[%c0_42, %c0_43] : memref<1x512xf32, #tpu.memory_space<vmem>>, vector<1x512xf32>
      %63 = arith.mulf %61, %62 : vector<1x512xf32>
      %cst_44 = arith.constant dense<0.000000e+00> : vector<1xf32>
      %64 = vector.multi_reduction <add>, %63, %cst_44 [1] : vector<1x512xf32> to vector<1xf32>
      %65 = vector.shape_cast %64 : vector<1xf32> to vector<1x1xf32>
      %c0_45 = arith.constant 0 : index
      %c0_46 = arith.constant 0 : index
      %66 = vector.load %arg14[%c0_45, %c0_46] : memref<1x1xf32, #tpu.memory_space<vmem>>, vector<1x1xf32>
      %67 = arith.addf %65, %66 : vector<1x1xf32>
      %68 = arith.negf %67 : vector<1x1xf32>
      %69 = math.exp %68 : vector<1x1xf32>
      %cst_47 = arith.constant 1.000000e+00 : f32
      %70 = vector.broadcast %cst_47 : f32 to vector<1x1xf32>
      %71 = arith.addf %70, %69 : vector<1x1xf32>
      %72 = arith.divf %70, %71 : vector<1x1xf32>
      %73 = vector.shape_cast %72 : vector<1x1xf32> to vector<1x1x1xf32>
      %c0_48 = arith.constant 0 : index
      %c0_49 = arith.constant 0 : index
      %c0_50 = arith.constant 0 : index
      %74 = vector.load %arg15[%c0_48, %c0_49, %c0_50] : memref<1x1x1xf32, #tpu.memory_space<vmem>>, vector<1x1x1xf32>
      tpu.vector_store %arg15[%c0_48, %c0_49, %c0_50], %73 {strides = array<i32>} : memref<1x1x1xf32, #tpu.memory_space<vmem>>, vector<1x1x1xf32>,
    } else {
    }
    return
  }
  func.func @transform_0(%arg0: i32, %arg1: i32) -> (i32, i32, i32) {
    %c0_i32 = arith.constant 0 : i32
    %c0_i32_0 = arith.constant 0 : i32
    return %arg0, %arg1, %c0_i32 : i32, i32, i32
  }
  func.func @transform_1(%arg0: i32, %arg1: i32) -> (i32, i32) {
    %c0_i32 = arith.constant 0 : i32
    %c0_i32_0 = arith.constant 0 : i32
    %c0_i32_1 = arith.constant 0 : i32
    return %c0_i32, %c0_i32_0 : i32, i32
  }
  func.func @transform_2(%arg0: i32, %arg1: i32) -> (i32, i32) {
    %c0_i32 = arith.constant 0 : i32
    %c0_i32_0 = arith.constant 0 : i32
    %c0_i32_1 = arith.constant 0 : i32
    return %c0_i32, %c0_i32_0 : i32, i32
  }
  func.func @transform_3(%arg0: i32, %arg1: i32) -> (i32, i32) {
    %c0_i32 = arith.constant 0 : i32
    %c0_i32_0 = arith.constant 0 : i32
    %c0_i32_1 = arith.constant 0 : i32
    return %c0_i32, %c0_i32_0 : i32, i32
  }
  func.func @transform_4(%arg0: i32, %arg1: i32) -> (i32, i32) {
    %c0_i32 = arith.constant 0 : i32
    %c0_i32_0 = arith.constant 0 : i32
    %c0_i32_1 = arith.constant 0 : i32
    return %c0_i32, %c0_i32_0 : i32, i32
  }
  func.func @transform_5(%arg0: i32, %arg1: i32) -> (i32, i32) {
    %c0_i32 = arith.constant 0 : i32
    %c0_i32_0 = arith.constant 0 : i32
    %c0_i32_1 = arith.constant 0 : i32
    return %c0_i32, %c0_i32_0 : i32, i32
  }
  func.func @transform_6(%arg0: i32, %arg1: i32) -> (i32, i32) {
    %c0_i32 = arith.constant 0 : i32
    %c0_i32_0 = arith.constant 0 : i32
    %c0_i32_1 = arith.constant 0 : i32
    return %c0_i32, %c0_i32_0 : i32, i32
  }
  func.func @transform_7(%arg0: i32, %arg1: i32) -> (i32, i32) {
    %c0_i32 = arith.constant 0 : i32
    %c0_i32_0 = arith.constant 0 : i32
    %c0_i32_1 = arith.constant 0 : i32
    return %c0_i32, %c0_i32_0 : i32, i32
  }
  func.func @transform_8(%arg0: i32, %arg1: i32) -> (i32, i32) {
    %c0_i32 = arith.constant 0 : i32
    %c0_i32_0 = arith.constant 0 : i32
    %c0_i32_1 = arith.constant 0 : i32
    return %c0_i32, %c0_i32_0 : i32, i32
  }
  func.func @transform_9(%arg0: i32, %arg1: i32) -> (i32, i32) {
    %c0_i32 = arith.constant 0 : i32
    %c0_i32_0 = arith.constant 0 : i32
    %c0_i32_1 = arith.constant 0 : i32
    return %c0_i32, %c0_i32_0 : i32, i32
  }
  func.func @transform_10(%arg0: i32, %arg1: i32) -> (i32, i32) {
    %c0_i32 = arith.constant 0 : i32
    %c0_i32_0 = arith.constant 0 : i32
    %c0_i32_1 = arith.constant 0 : i32
    return %c0_i32, %c0_i32_0 : i32, i32
  }
  func.func @transform_11(%arg0: i32, %arg1: i32) -> (i32, i32) {
    %c0_i32 = arith.constant 0 : i32
    %c0_i32_0 = arith.constant 0 : i32
    %c0_i32_1 = arith.constant 0 : i32
    return %c0_i32, %c0_i32_0 : i32, i32
  }
  func.func @transform_12(%arg0: i32, %arg1: i32) -> (i32, i32) {
    %c0_i32 = arith.constant 0 : i32
    %c0_i32_0 = arith.constant 0 : i32
    %c0_i32_1 = arith.constant 0 : i32
    return %c0_i32, %c0_i32_0 : i32, i32
  }
  func.func @transform_13(%arg0: i32, %arg1: i32) -> (i32, i32, i32) {
    %c0_i32 = arith.constant 0 : i32
    %c0_i32_0 = arith.constant 0 : i32
    %c0_i32_1 = arith.constant 0 : i32
    return %arg0, %c0_i32, %c0_i32_0 : i32, i32, i32
  }
}

</mosaic_0001>

<llo_original>
// kernel: efficientnet_with_se_forward.1
$region0: #{efficientnet_with_se_forward.1}
  #allocation0 [shape = 'u32[]', space=smem, size = 0x4, offset = 0x4, fixed_abs, tag = 'smem constant byte address 0x4 - core index']
  #allocation1 [shape = 'u32[144,128]{1,0:T(1,128)}', space=vmem, size = 0x12000, scoped, tag = 'internal scratch']
  #allocation2 [shape = 'f32[1,1280]{1,0:T(1,128)}', space=vmem, size = 0x1400, scoped, tag = 'scratch operand']
  #allocation3 [shape = 'f32[1,1]{1,0:T(1,128)S(1)}', space=vmem, size = 0x200, scoped, tag = 'scoped memory for efficientnet_with_se_forward.1']
  %s0 = inlined_call_operand.vmem [shape: f32[2,64,32], index: 0, kind: input, shape index: {}]
  %s1 = inlined_call_operand.vmem [shape: f32[32,32], index: 1, kind: input, shape index: {}]
  %s2 = inlined_call_operand.vmem [shape: f32[1,32], index: 2, kind: input, shape index: {}]
  %s3 = inlined_call_operand.vmem [shape: f32[1,32], index: 3, kind: input, shape index: {}]
  %s4 = inlined_call_operand.vmem [shape: f32[32,1280], index: 4, kind: input, shape index: {}]
  %s5 = inlined_call_operand.vmem [shape: f32[1,1280], index: 5, kind: input, shape index: {}]
  %s6 = inlined_call_operand.vmem [shape: f32[1,1280], index: 6, kind: input, shape index: {}]
  %s7 = inlined_call_operand.vmem [shape: f32[1280,80], index: 7, kind: input, shape index: {}]
  %s8 = inlined_call_operand.vmem [shape: f32[80,1280], index: 8, kind: input, shape index: {}]
  %s9 = inlined_call_operand.vmem [shape: f32[1280,512], index: 9, kind: input, shape index: {}]
  %s10 = inlined_call_operand.vmem [shape: f32[1,512], index: 10, kind: input, shape index: {}]
  %s11 = inlined_call_operand.vmem [shape: f32[1,512], index: 11, kind: input, shape index: {}]
  %s12 = inlined_call_operand.<no memory space> [shape: f32[1,1], index: 12, kind: input, shape index: {}]
  %s13 = inlined_call_operand.vmem [shape: f32[2,1,1], index: 13, kind: output, shape index: {}]
  %s14 = sld [smem:[#allocation0]]
  $region93: #{efficientnet_with_se_forward.1} parent=0
    _
  %s16 = ssub.s32 1, %s14
  %s17 = scalar_select 0, %s16, %s14
  %v18 = vstv %s12
  %19 = vst [vmem:[#allocation3] sm:$0x1] %v18
  loop: start=0, step=1, limit=4
  $region2: #{efficientnet_with_se_forward.1} parent=0 // loop_pre_header
    _
  $region3: #{efficientnet_with_se_forward.1} parent=0 // loop_header
    %s21 = sphi 0, %s25
    %p22 = scmp.ge.s32.totalorder %s21, 4
    %s28 = sphi 0, %s40
    %s29 = sphi 0, %s36
    %s30 = sphi 0, %s28
    %s31 = sphi 0, %s29
    %s32 = sphi 0, %s30
    %s33 = sphi 0, %s31
    %s45 = sphi 0, %s47
    %s48 = sphi 0, %s45
    %s49 = sphi 0, %s48
    %s65 = sphi 0, %s49
    %s69 = sphi 0, %s69
    %s71 = sphi 0, %s69
    %s72 = sphi 0, %s71
    %s86 = sphi 0, %s72
    %s90 = sphi 0, %s90
    %s92 = sphi 0, %s90
    %s93 = sphi 0, %s92
    %s107 = sphi 0, %s93
    %s111 = sphi 0, %s111
    %s113 = sphi 0, %s111
    %s114 = sphi 0, %s113
    %s128 = sphi 0, %s114
    %s132 = sphi 0, %s132
    %s134 = sphi 0, %s132
    %s135 = sphi 0, %s134
    %s149 = sphi 0, %s135
    %s153 = sphi 0, %s153
    %s155 = sphi 0, %s153
    %s156 = sphi 0, %s155
    %s170 = sphi 0, %s156
    %s174 = sphi 0, %s174
    %s176 = sphi 0, %s174
    %s177 = sphi 0, %s176
    %s191 = sphi 0, %s177
    %s195 = sphi 0, %s195
    %s197 = sphi 0, %s195
    %s198 = sphi 0, %s197
    %s212 = sphi 0, %s198
    %s216 = sphi 0, %s216
    %s218 = sphi 0, %s216
    %s219 = sphi 0, %s218
    %s233 = sphi 0, %s219
    %s237 = sphi 0, %s237
    %s239 = sphi 0, %s237
    %s240 = sphi 0, %s239
    %s254 = sphi 0, %s240
    %s258 = sphi 0, %s258
    %s260 = sphi 0, %s258
    %s261 = sphi 0, %s260
    %s275 = sphi 0, %s261
    %s279 = sphi 0, %s279
    %s281 = sphi 0, %s279
    %s282 = sphi 0, %s281
    %s296 = sphi 0, %s282
    %s300 = sphi 0, %s300
    %s302 = sphi 0, %s300
    %s303 = sphi 0, %s302
    %s317 = sphi 0, %s303
    %s323 = sphi 0, %s325
    %s326 = sphi 0, %s323
    %s327 = sphi 0, %s326
    %s343 = sphi 0, %s327
  $region4: #{efficientnet_with_se_forward.1} parent=0 // loop_header_branch
    %24 = sbr.rel (%p22) target = $region8
  $region5: #{efficientnet_with_se_forward.1} parent=0 // loop_body
    %s26 = ssub.s32 %s21, 1
    %s27 = ssub.s32 %s21, 2
    %s34 = sadd.s32 1, %s29
    %p35 = scmp.ge.s32.totalorder %s34, 1
    %s36 = scalar_select %p35, 0, %s34
    %s37 = sadd.s32 1, %s28
    %s38 = scalar_select %p35, %s37, %s28
    %p39 = scmp.ge.s32.totalorder %s38, 2
    %s40 = scalar_select %p39, 0, %s38
    %s41 = ssub.s32 %s28, %s40
    %s42 = ssub.s32 %s29, %s36
    %s43 = sor.u32 %s41, %s42
    %p44 = scmp.eq.s32.totalorder %s43, 0
    %s46 = sadd.s32 %s45, 1
    %s47 = scalar_select %p44, %s45, %s46
    %p50 = pneg %p44
    %p51 = scmp.eq.s32.totalorder %s21, 1
    %p52 = por %p50, %p51
    %p53 = scmp.ne.s32.totalorder %s45, %s48
    %p54 = scmp.eq.s32.totalorder %s21, 0
    %p55 = por %p53, %p54
    %p56 = scmp.ne.s32.totalorder %s45, %s48
    %p57 = scmp.eq.s32.totalorder %s26, 1
    %p58 = por %p56, %p57
    %p59 = scmp.ne.s32.totalorder %s48, %s49
    %p60 = scmp.eq.s32.totalorder %s26, 0
    %p61 = por %p59, %p60
    %p62 = scmp.ne.s32.totalorder %s48, %s49
    %p63 = scmp.eq.s32.totalorder %s27, 1
    %p64 = por %p62, %p63
    %p66 = scmp.ne.s32.totalorder %s49, %s65
    %p67 = scmp.eq.s32.totalorder %s27, 0
    %p68 = por %p66, %p67
    %s70 = sadd.s32 %s69, 1
    %p73 = scmp.eq.s32.totalorder %s21, 1
    %p74 = scmp.ne.s32.totalorder %s69, %s71
    %p75 = scmp.eq.s32.totalorder %s21, 0
    %p76 = por %p74, %p75
    %p77 = scmp.ne.s32.totalorder %s69, %s71
    %p78 = scmp.eq.s32.totalorder %s26, 1
    %p79 = por %p77, %p78
    %p80 = scmp.ne.s32.totalorder %s71, %s72
    %p81 = scmp.eq.s32.totalorder %s26, 0
    %p82 = por %p80, %p81
    %p83 = scmp.ne.s32.totalorder %s71, %s72
    %p84 = scmp.eq.s32.totalorder %s27, 1
    %p85 = por %p83, %p84
    %p87 = scmp.ne.s32.totalorder %s72, %s86
    %p88 = scmp.eq.s32.totalorder %s27, 0
    %p89 = por %p87, %p88
    %s91 = sadd.s32 %s90, 1
    %p94 = scmp.eq.s32.totalorder %s21, 1
    %p95 = scmp.ne.s32.totalorder %s90, %s92
    %p96 = scmp.eq.s32.totalorder %s21, 0
    %p97 = por %p95, %p96
    %p98 = scmp.ne.s32.totalorder %s90, %s92
    %p99 = scmp.eq.s32.totalorder %s26, 1
    %p100 = por %p98, %p99
    %p101 = scmp.ne.s32.totalorder %s92, %s93
    %p102 = scmp.eq.s32.totalorder %s26, 0
    %p103 = por %p101, %p102
    %p104 = scmp.ne.s32.totalorder %s92, %s93
    %p105 = scmp.eq.s32.totalorder %s27, 1
    %p106 = por %p104, %p105
    %p108 = scmp.ne.s32.totalorder %s93, %s107
    %p109 = scmp.eq.s32.totalorder %s27, 0
    %p110 = por %p108, %p109
    %s112 = sadd.s32 %s111, 1
    %p115 = scmp.eq.s32.totalorder %s21, 1
    %p116 = scmp.ne.s32.totalorder %s111, %s113
    %p117 = scmp.eq.s32.totalorder %s21, 0
    %p118 = por %p116, %p117
    %p119 = scmp.ne.s32.totalorder %s111, %s113
    %p120 = scmp.eq.s32.totalorder %s26, 1
    %p121 = por %p119, %p120
    %p122 = scmp.ne.s32.totalorder %s113, %s114
    %p123 = scmp.eq.s32.totalorder %s26, 0
    %p124 = por %p122, %p123
    %p125 = scmp.ne.s32.totalorder %s113, %s114
    %p126 = scmp.eq.s32.totalorder %s27, 1
    %p127 = por %p125, %p126
    %p129 = scmp.ne.s32.totalorder %s114, %s128
    %p130 = scmp.eq.s32.totalorder %s27, 0
    %p131 = por %p129, %p130
    %s133 = sadd.s32 %s132, 1
    %p136 = scmp.eq.s32.totalorder %s21, 1
    %p137 = scmp.ne.s32.totalorder %s132, %s134
    %p138 = scmp.eq.s32.totalorder %s21, 0
    %p139 = por %p137, %p138
    %p140 = scmp.ne.s32.totalorder %s132, %s134
    %p141 = scmp.eq.s32.totalorder %s26, 1
    %p142 = por %p140, %p141
    %p143 = scmp.ne.s32.totalorder %s134, %s135
    %p144 = scmp.eq.s32.totalorder %s26, 0
    %p145 = por %p143, %p144
    %p146 = scmp.ne.s32.totalorder %s134, %s135
    %p147 = scmp.eq.s32.totalorder %s27, 1
    %p148 = por %p146, %p147
    %p150 = scmp.ne.s32.totalorder %s135, %s149
    %p151 = scmp.eq.s32.totalorder %s27, 0
    %p152 = por %p150, %p151
    %s154 = sadd.s32 %s153, 1
    %p157 = scmp.eq.s32.totalorder %s21, 1
    %p158 = scmp.ne.s32.totalorder %s153, %s155
    %p159 = scmp.eq.s32.totalorder %s21, 0
    %p160 = por %p158, %p159
    %p161 = scmp.ne.s32.totalorder %s153, %s155
    %p162 = scmp.eq.s32.totalorder %s26, 1
    %p163 = por %p161, %p162
    %p164 = scmp.ne.s32.totalorder %s155, %s156
    %p165 = scmp.eq.s32.totalorder %s26, 0
    %p166 = por %p164, %p165
    %p167 = scmp.ne.s32.totalorder %s155, %s156
    %p168 = scmp.eq.s32.totalorder %s27, 1
    %p169 = por %p167, %p168
    %p171 = scmp.ne.s32.totalorder %s156, %s170
    %p172 = scmp.eq.s32.totalorder %s27, 0
    %p173 = por %p171, %p172
    %s175 = sadd.s32 %s174, 1
    %p178 = scmp.eq.s32.totalorder %s21, 1
    %p179 = scmp.ne.s32.totalorder %s174, %s176
    %p180 = scmp.eq.s32.totalorder %s21, 0
    %p181 = por %p179, %p180
    %p182 = scmp.ne.s32.totalorder %s174, %s176
    %p183 = scmp.eq.s32.totalorder %s26, 1
    %p184 = por %p182, %p183
    %p185 = scmp.ne.s32.totalorder %s176, %s177
    %p186 = scmp.eq.s32.totalorder %s26, 0
    %p187 = por %p185, %p186
    %p188 = scmp.ne.s32.totalorder %s176, %s177
    %p189 = scmp.eq.s32.totalorder %s27, 1
    %p190 = por %p188, %p189
    %p192 = scmp.ne.s32.totalorder %s177, %s191
    %p193 = scmp.eq.s32.totalorder %s27, 0
    %p194 = por %p192, %p193
    %s196 = sadd.s32 %s195, 1
    %p199 = scmp.eq.s32.totalorder %s21, 1
    %p200 = scmp.ne.s32.totalorder %s195, %s197
    %p201 = scmp.eq.s32.totalorder %s21, 0
    %p202 = por %p200, %p201
    %p203 = scmp.ne.s32.totalorder %s195, %s197
    %p204 = scmp.eq.s32.totalorder %s26, 1
    %p205 = por %p203, %p204
    %p206 = scmp.ne.s32.totalorder %s197, %s198
    %p207 = scmp.eq.s32.totalorder %s26, 0
    %p208 = por %p206, %p207
    %p209 = scmp.ne.s32.totalorder %s197, %s198
    %p210 = scmp.eq.s32.totalorder %s27, 1
    %p211 = por %p209, %p210
    %p213 = scmp.ne.s32.totalorder %s198, %s212
    %p214 = scmp.eq.s32.totalorder %s27, 0
    %p215 = por %p213, %p214
    %s217 = sadd.s32 %s216, 1
    %p220 = scmp.eq.s32.totalorder %s21, 1
    %p221 = scmp.ne.s32.totalorder %s216, %s218
    %p222 = scmp.eq.s32.totalorder %s21, 0
    %p223 = por %p221, %p222
    %p224 = scmp.ne.s32.totalorder %s216, %s218
    %p225 = scmp.eq.s32.totalorder %s26, 1
    %p226 = por %p224, %p225
    %p227 = scmp.ne.s32.totalorder %s218, %s219
    %p228 = scmp.eq.s32.totalorder %s26, 0
    %p229 = por %p227, %p228
    %p230 = scmp.ne.s32.totalorder %s218, %s219
    %p231 = scmp.eq.s32.totalorder %s27, 1
    %p232 = por %p230, %p231
    %p234 = scmp.ne.s32.totalorder %s219, %s233
    %p235 = scmp.eq.s32.totalorder %s27, 0
    %p236 = por %p234, %p235
    %s238 = sadd.s32 %s237, 1
    %p241 = scmp.eq.s32.totalorder %s21, 1
    %p242 = scmp.ne.s32.totalorder %s237, %s239
    %p243 = scmp.eq.s32.totalorder %s21, 0
    %p244 = por %p242, %p243
    %p245 = scmp.ne.s32.totalorder %s237, %s239
    %p246 = scmp.eq.s32.totalorder %s26, 1
    %p247 = por %p245, %p246
    %p248 = scmp.ne.s32.totalorder %s239, %s240
    %p249 = scmp.eq.s32.totalorder %s26, 0
    %p250 = por %p248, %p249
    %p251 = scmp.ne.s32.totalorder %s239, %s240
    %p252 = scmp.eq.s32.totalorder %s27, 1
    %p253 = por %p251, %p252
    %p255 = scmp.ne.s32.totalorder %s240, %s254
    %p256 = scmp.eq.s32.totalorder %s27, 0
    %p257 = por %p255, %p256
    %s259 = sadd.s32 %s258, 1
    %p262 = scmp.eq.s32.totalorder %s21, 1
    %p263 = scmp.ne.s32.totalorder %s258, %s260
    %p264 = scmp.eq.s32.totalorder %s21, 0
    %p265 = por %p263, %p264
    %p266 = scmp.ne.s32.totalorder %s258, %s260
    %p267 = scmp.eq.s32.totalorder %s26, 1
    %p268 = por %p266, %p267
    %p269 = scmp.ne.s32.totalorder %s260, %s261
    %p270 = scmp.eq.s32.totalorder %s26, 0
    %p271 = por %p269, %p270
    %p272 = scmp.ne.s32.totalorder %s260, %s261
    %p273 = scmp.eq.s32.totalorder %s27, 1
    %p274 = por %p272, %p273
    %p276 = scmp.ne.s32.totalorder %s261, %s275
    %p277 = scmp.eq.s32.totalorder %s27, 0
    %p278 = por %p276, %p277
    %s280 = sadd.s32 %s279, 1
    %p283 = scmp.eq.s32.totalorder %s21, 1
    %p284 = scmp.ne.s32.totalorder %s279, %s281
    %p285 = scmp.eq.s32.totalorder %s21, 0
    %p286 = por %p284, %p285
    %p287 = scmp.ne.s32.totalorder %s279, %s281
    %p288 = scmp.eq.s32.totalorder %s26, 1
    %p289 = por %p287, %p288
    %p290 = scmp.ne.s32.totalorder %s281, %s282
    %p291 = scmp.eq.s32.totalorder %s26, 0
    %p292 = por %p290, %p291
    %p293 = scmp.ne.s32.totalorder %s281, %s282
    %p294 = scmp.eq.s32.totalorder %s27, 1
    %p295 = por %p293, %p294
    %p297 = scmp.ne.s32.totalorder %s282, %s296
    %p298 = scmp.eq.s32.totalorder %s27, 0
    %p299 = por %p297, %p298
    %s301 = sadd.s32 %s300, 1
    %p304 = scmp.eq.s32.totalorder %s21, 1
    %p305 = scmp.ne.s32.totalorder %s300, %s302
    %p306 = scmp.eq.s32.totalorder %s21, 0
    %p307 = por %p305, %p306
    %p308 = scmp.ne.s32.totalorder %s300, %s302
    %p309 = scmp.eq.s32.totalorder %s26, 1
    %p310 = por %p308, %p309
    %p311 = scmp.ne.s32.totalorder %s302, %s303
    %p312 = scmp.eq.s32.totalorder %s26, 0
    %p313 = por %p311, %p312
    %p314 = scmp.ne.s32.totalorder %s302, %s303
    %p315 = scmp.eq.s32.totalorder %s27, 1
    %p316 = por %p314, %p315
    %p318 = scmp.ne.s32.totalorder %s303, %s317
    %p319 = scmp.eq.s32.totalorder %s27, 0
    %p320 = por %p318, %p319
    %s321 = ssub.s32 %s28, %s40
    %p322 = scmp.eq.s32.totalorder %s321, 0
    %s324 = sadd.s32 %s323, 1
    %s325 = scalar_select %p322, %s323, %s324
    %p328 = pneg %p322
    %p329 = scmp.eq.s32.totalorder %s21, 1
    %p330 = por %p328, %p329
    %p331 = scmp.ne.s32.totalorder %s323, %s326
    %p332 = scmp.eq.s32.totalorder %s21, 0
    %p333 = por %p331, %p332
    %p334 = scmp.ne.s32.totalorder %s323, %s326
    %p335 = scmp.eq.s32.totalorder %s26, 1
    %p336 = por %p334, %p335
    %p337 = scmp.ne.s32.totalorder %s326, %s327
    %p338 = scmp.eq.s32.totalorder %s26, 0
    %p339 = por %p337, %p338
    %p340 = scmp.ne.s32.totalorder %s326, %s327
    %p341 = scmp.eq.s32.totalorder %s27, 1
    %p342 = por %p340, %p341
    %p344 = scmp.ne.s32.totalorder %s327, %s343
    %p345 = scmp.eq.s32.totalorder %s27, 0
    %p346 = por %p344, %p345
    %p347 = scmp.le.s32.totalorder 1, %s21
    %p348 = scmp.lt.s32.totalorder %s21, 3
    %p349 = pnand %p347, %p348
    %p350 = pneg %p349
    // Predicated region
    $region9: #{efficientnet_with_se_forward.1} parent=5 // pred_check
      _
    $region10: #{efficientnet_with_se_forward.1} parent=5 // pred_check_branch
      %352 = sbr.rel (%p349) target = $region12
    $region11: #{efficientnet_with_se_forward.1} parent=5 // pred_region
      %s353 = ssub.s32 %s21, 1
      // Predicated region
      $region13: #{efficientnet_with_se_forward.1} parent=11 // pred_check
        %p354 = pneg %p82
      $region14: #{efficientnet_with_se_forward.1} parent=11 // pred_check_branch
        %356 = sbr.rel (%p354) target = $region16
      $region15: #{efficientnet_with_se_forward.1} parent=11 // pred_region
        _
      $region16: #{efficientnet_with_se_forward.1} parent=11 // pred_fallthru
        _
      // Predicated region
      $region17: #{efficientnet_with_se_forward.1} parent=11 // pred_check
        %p357 = pneg %p103
      $region18: #{efficientnet_with_se_forward.1} parent=11 // pred_check_branch
        %359 = sbr.rel (%p357) target = $region20
      $region19: #{efficientnet_with_se_forward.1} parent=11 // pred_region
        _
      $region20: #{efficientnet_with_se_forward.1} parent=11 // pred_fallthru
        _
      // Predicated region
      $region21: #{efficientnet_with_se_forward.1} parent=11 // pred_check
        %p360 = pneg %p124
      $region22: #{efficientnet_with_se_forward.1} parent=11 // pred_check_branch
        %362 = sbr.rel (%p360) target = $region24
      $region23: #{efficientnet_with_se_forward.1} parent=11 // pred_region
        _
      $region24: #{efficientnet_with_se_forward.1} parent=11 // pred_fallthru
        _
      // Predicated region
      $region25: #{efficientnet_with_se_forward.1} parent=11 // pred_check
        %p363 = pneg %p145
      $region26: #{efficientnet_with_se_forward.1} parent=11 // pred_check_branch
        %365 = sbr.rel (%p363) target = $region28
      $region27: #{efficientnet_with_se_forward.1} parent=11 // pred_region
        _
      $region28: #{efficientnet_with_se_forward.1} parent=11 // pred_fallthru
        _
      // Predicated region
      $region29: #{efficientnet_with_se_forward.1} parent=11 // pred_check
        %p366 = pneg %p166
      $region30: #{efficientnet_with_se_forward.1} parent=11 // pred_check_branch
        %368 = sbr.rel (%p366) target = $region32
      $region31: #{efficientnet_with_se_forward.1} parent=11 // pred_region
        _
      $region32: #{efficientnet_with_se_forward.1} parent=11 // pred_fallthru
        _
      // Predicated region
      $region33: #{efficientnet_with_se_forward.1} parent=11 // pred_check
        %p369 = pneg %p187
      $region34: #{efficientnet_with_se_forward.1} parent=11 // pred_check_branch
        %371 = sbr.rel (%p369) target = $region36
      $region35: #{efficientnet_with_se_forward.1} parent=11 // pred_region
        _
      $region36: #{efficientnet_with_se_forward.1} parent=11 // pred_fallthru
        _
      // Predicated region
      $region37: #{efficientnet_with_se_forward.1} parent=11 // pred_check
        %p372 = pneg %p208
      $region38: #{efficientnet_with_se_forward.1} parent=11 // pred_check_branch
        %374 = sbr.rel (%p372) target = $region40
      $region39: #{efficientnet_with_se_forward.1} parent=11 // pred_region
        _
      $region40: #{efficientnet_with_se_forward.1} parent=11 // pred_fallthru
        _
      // Predicated region
      $region41: #{efficientnet_with_se_forward.1} parent=11 // pred_check
        %p375 = pneg %p229
      $region42: #{efficientnet_with_se_forward.1} parent=11 // pred_check_branch
        %377 = sbr.rel (%p375) target = $region44
      $region43: #{efficientnet_with_se_forward.1} parent=11 // pred_region
        _
      $region44: #{efficientnet_with_se_forward.1} parent=11 // pred_fallthru
        _
      // Predicated region
      $region45: #{efficientnet_with_se_forward.1} parent=11 // pred_check
        %p378 = pneg %p250
      $region46: #{efficientnet_with_se_forward.1} parent=11 // pred_check_branch
        %380 = sbr.rel (%p378) target = $region48
      $region47: #{efficientnet_with_se_forward.1} parent=11 // pred_region
        _
      $region48: #{efficientnet_with_se_forward.1} parent=11 // pred_fallthru
        _
      // Predicated region
      $region49: #{efficientnet_with_se_forward.1} parent=11 // pred_check
        %p381 = pneg %p271
      $region50: #{efficientnet_with_se_forward.1} parent=11 // pred_check_branch
        %383 = sbr.rel (%p381) target = $region52
      $region51: #{efficientnet_with_se_forward.1} parent=11 // pred_region
        _
      $region52: #{efficientnet_with_se_forward.1} parent=11 // pred_fallthru
        _
      // Predicated region
      $region53: #{efficientnet_with_se_forward.1} parent=11 // pred_check
        %p384 = pneg %p292
      $region54: #{efficientnet_with_se_forward.1} parent=11 // pred_check_branch
        %386 = sbr.rel (%p384) target = $region56
      $region55: #{efficientnet_with_se_forward.1} parent=11 // pred_region
        _
      $region56: #{efficientnet_with_se_forward.1} parent=11 // pred_fallthru
        _
      // Predicated region
      $region57: #{efficientnet_with_se_forward.1} parent=11 // pred_check
        %p387 = pneg %p313
      $region58: #{efficientnet_with_se_forward.1} parent=11 // pred_check_branch
        %389 = sbr.rel (%p387) target = $region60
      $region59: #{efficientnet_with_se_forward.1} parent=11 // pred_region
        _
      $region60: #{efficientnet_with_se_forward.1} parent=11 // pred_fallthru
        _
    $region12: #{efficientnet_with_se_forward.1} parent=5 // pred_fallthru
      _
    %p390 = scmp.lt.s32.totalorder %s21, 2
    // Predicated region
    $region61: #{efficientnet_with_se_forward.1} parent=5 // pred_check
      %p391 = pneg %p390
    $region62: #{efficientnet_with_se_forward.1} parent=5 // pred_check_branch
      %393 = sbr.rel (%p391) target = $region64
    $region63: #{efficientnet_with_se_forward.1} parent=5 // pred_region
      // Predicated region
      $region65: #{efficientnet_with_se_forward.1} parent=63 // pred_check
        %p394 = pneg %p55
      $region66: #{efficientnet_with_se_forward.1} parent=63 // pred_check_branch
        %396 = sbr.rel (%p394) target = $region68
      $region67: #{efficientnet_with_se_forward.1} parent=63 // pred_region
        %s397 = smul.u32 8, %s29
        %p398 = scmp.lt.s32.totalorder %s28, 1
        %s399 = scalar_select %p398, %s28, 1
        %p400 = scmp.lt.s32.totalorder %s397, 7
        %s401 = scalar_select %p400, %s397, 7
        %s402 = smul.addr %s399, 8
        %s403 = sadd.s32 %s401, %s402
        %s404 = smul.addr %s403, 8
        %s405 = scalar_lea.vmem %s0, %s404
        %s406 = smul.u32 8, %s29
      $region68: #{efficientnet_with_se_forward.1} parent=63 // pred_fallthru
        _
    $region64: #{efficientnet_with_se_forward.1} parent=5 // pred_fallthru
      _
    %p407 = scmp.le.s32.totalorder 1, %s21
    %p408 = scmp.lt.s32.totalorder %s21, 3
    %p409 = pnand %p407, %p408
    %p410 = pneg %p409
    // Predicated region
    $region69: #{efficientnet_with_se_forward.1} parent=5 // pred_check
      _
    $region70: #{efficientnet_with_se_forward.1} parent=5 // pred_check_branch
      %412 = sbr.rel (%p409) target = $region72
    $region71: #{efficientnet_with_se_forward.1} parent=5 // pred_region
      %s413 = ssub.s32 %s21, 1
      %s414 = smul.u32 8, %s31
      %p415 = scmp.lt.s32.totalorder %s30, 1
      %s416 = scalar_select %p415, %s30, 1
      %p417 = scmp.lt.s32.totalorder %s414, 7
      %s418 = scalar_select %p417, %s414, 7
      %s419 = smul.addr %s416, 8
      %s420 = sadd.s32 %s418, %s419
      %s421 = smul.addr %s420, 8
      %s422 = scalar_lea.vmem %s0, %s421
      %p423 = pneg %p61
      %p424 = pneg %p58
      %p425 = pneg %p82
      %p426 = pneg %p79
      %p427 = pneg %p103
      %p428 = pneg %p100
      %p429 = pneg %p124
      %p430 = pneg %p121
      %p431 = pneg %p145
      %p432 = pneg %p142
      %p433 = pneg %p166
      %p434 = pneg %p163
      %p435 = pneg %p187
      %p436 = pneg %p184
      %p437 = pneg %p208
      %p438 = pneg %p205
      %p439 = pneg %p229
      %p440 = pneg %p226
      %p441 = pneg %p250
      %p442 = pneg %p247
      %p443 = pneg %p271
      %p444 = pneg %p268
      %p445 = pneg %p292
      %p446 = pneg %p289
      %p447 = pneg %p313
      %p448 = pneg %p310
      %p449 = pneg %p339
      %p450 = pneg %p336
      %p451 = scmp.lt.s32.totalorder %s30, 1
      %s452 = scalar_select %p451, %s30, 1
      %s453 = scalar_lea.vmem %s13, %s452
      %s454 = smul.u32 8, %s31
      %p455 = scmp.lt.s32.totalorder %s30, 1
      %s456 = scalar_select %p455, %s30, 1
      %p457 = scmp.lt.s32.totalorder %s454, 7
      %s458 = scalar_select %p457, %s454, 7
      %s459 = smul.addr %s456, 8
      %s460 = sadd.s32 %s458, %s459
      %s461 = smul.addr %s460, 8
      %s462 = scalar_lea.vmem %s0, %s461
      %s463 = smul.u32 8, %s31
      %p464 = scmp.lt.s32.totalorder %s30, 1
      %s465 = scalar_select %p464, %s30, 1
      %s466 = scalar_lea.vmem %s13, %s465
      %p467 = scmp.eq.s32.totalorder %s31, 0
      // Predicated region
      $region73: #{efficientnet_with_se_forward.1} parent=71 // pred_check
        %p468 = pneg %p467
      $region74: #{efficientnet_with_se_forward.1} parent=71 // pred_check_branch
        %470 = sbr.rel (%p468) target = $region76
      $region75: #{efficientnet_with_se_forward.1} parent=71 // pred_region
        %471 = vst [vmem:[#allocation2] sm:$0xff] 0.0
        %v472 = vlaneseq
        %vm473 = vcmp.ge.s32.totalorder %v472, 0
        %vm474 = vcmp.lt.s32.totalorder %v472, 256
        %vm475 = vmand %vm473, %vm474
        %476 = vst.msk [vmem:[#allocation2 + $0x8] sm:$0x3] %vm475, 0.0
      $region76: #{efficientnet_with_se_forward.1} parent=71 // pred_fallthru
        _
      %v477 = vld [vmem:[%s462] sm:$0xff]
      %v478 = vld [vmem:[%s462 + $0x8] sm:$0xff]
      %v479 = vld [vmem:[%s462 + $0x10] sm:$0xff]
      %v480 = vld [vmem:[%s462 + $0x18] sm:$0xff]
      %v481 = vld [vmem:[%s462 + $0x20] sm:$0xff]
      %v482 = vld [vmem:[%s462 + $0x28] sm:$0xff]
      %v483 = vld [vmem:[%s462 + $0x30] sm:$0xff]
      %v484 = vld [vmem:[%s462 + $0x38] sm:$0xff]
      %v485 = vld [vmem:[%s1] sm:$0xff]
      %v486 = vld [vmem:[%s1 + $0x8] sm:$0xff]
      %v487 = vld [vmem:[%s1 + $0x10] sm:$0xff]
      %v488 = vld [vmem:[%s1 + $0x18] sm:$0xff]
      %vm489 = vcmask 261120
      %v491 = vsel %vm489, %v477, 0
      %v494 = vsel %vm489, %v478, 0
      %v497 = vsel %vm489, %v479, 0
      %v500 = vsel %vm489, %v480, 0
      %v503 = vsel %vm489, %v481, 0
      %v506 = vsel %vm489, %v482, 0
      %v509 = vsel %vm489, %v483, 0
      %v512 = vsel %vm489, %v484, 0
      %514 = vmatprep.subr.mxu0 0.0
      %515 = vmatpush1.msra.mxu0 %v485
      %516 = vmatprep.subr.mxu0 0.0
      %517 = vmatpush1.msra.mxu0 %v486
      %518 = vmatprep.subr.mxu0 0.0
      %519 = vmatpush1.msra.mxu0 %v487
      %520 = vmatprep.subr.mxu0 0.0
      %521 = vmatpush1.msra.mxu0 %v488
      %522 = vmatprep.subr.mxu0 0.0
      %523 = vmatpush1.msra.mxu0 0.0
      %524 = vmatprep.subr.mxu0 0.0
      %525 = vmatpush1.msra.mxu0 0.0
      %526 = vmatprep.subr.mxu0 0.0
      %527 = vmatpush1.msra.mxu0 0.0
      %528 = vmatprep.subr.mxu0 0.0
      %529 = vmatpush1.msra.mxu0 0.0
      %530 = vmatprep.subr.mxu0 0.0
      %531 = vmatpush1.msra.mxu0 0.0
      %532 = vmatprep.subr.mxu0 0.0
      %533 = vmatpush1.msra.mxu0 0.0
      %534 = vmatprep.subr.mxu0 0.0
      %535 = vmatpush1.msra.mxu0 0.0
      %536 = vmatprep.subr.mxu0 0.0
      %537 = vmatpush1.msra.mxu0 0.0
      %538 = vmatprep.subr.mxu0 0.0
      %539 = vmatpush1.msra.mxu0 0.0
      %540 = vmatprep.subr.mxu0 0.0
      %541 = vmatpush1.msra.mxu0 0.0
      %542 = vmatprep.subr.mxu0 0.0
      %543 = vmatpush1.msra.mxu0 0.0
      %544 = vmatprep.subr.mxu0 0.0
      %545 = vmatpush1.msra.mxu0 0.0
      %546 = vmatprep.subr.mxu0 0.0
      %547 = vmatpush1.msra.mxu0 0.0
      %548 = vmatprep.subr.mxu0 0.0
      %549 = vmatpush1.msra.mxu0 0.0
      %550 = vmatprep.subr.mxu0 0.0
      %551 = vmatpush1.msra.mxu0 0.0
      %552 = vmatprep.subr.mxu0 0.0
      %553 = vmatpush1.msra.mxu0 0.0
      %554 = vmatprep.subr.mxu0 0.0
      %555 = vmatpush1.msra.mxu0 0.0
      %556 = vmatprep.subr.mxu0 0.0
      %557 = vmatpush1.msra.mxu0 0.0
      %558 = vmatprep.subr.mxu0 0.0
      %559 = vmatpush1.msra.mxu0 0.0
      %560 = vmatprep.subr.mxu0 0.0
      %561 = vmatpush1.msra.mxu0 0.0
      %562 = vmatprep.subr.mxu0 0.0
      %563 = vmatpush1.msra.mxu0 0.0
      %564 = vmatprep.subr.mxu0 0.0
      %565 = vmatpush1.msra.mxu0 0.0
      %566 = vmatprep.subr.mxu0 0.0
      %567 = vmatpush1.msra.mxu0 0.0
      %568 = vmatprep.subr.mxu0 0.0
      %569 = vmatpush1.msra.mxu0 0.0
      %570 = vmatprep.subr.mxu0 0.0
      %571 = vmatpush1.msra.mxu0 0.0
      %572 = vmatprep.subr.mxu0 0.0
      %573 = vmatpush1.msra.mxu0 0.0
      %574 = vmatprep.subr.mxu0 0.0
      %575 = vmatpush1.msra.mxu0 0.0
      %576 = vmatprep.subr.mxu0 0.0
      %577 = vmatpush1.msra.mxu0 0.0
      %578 = vmatprep.mubr.f32.mxu0 0.0
      %579 = vmatmul.mubr.f32.gmra.mrb[0].mxu0 %v491
      %v580 = vpop.f32.mrb[0].mxu0
      %v581 = vadd.f32 0.0, %v580
      %v582 = vpop.f32.mrb[0].mxu0
      %583 = vmatprep.mubr.f32.mxu0 0.0
      %584 = vmatmul.mubr.f32.gmra.mrb[0].mxu0 %v494
      %v585 = vpop.f32.mrb[0].mxu0
      %v586 = vadd.f32 0.0, %v585
      %v587 = vpop.f32.mrb[0].mxu0
      %588 = vmatprep.mubr.f32.mxu0 0.0
      %589 = vmatmul.mubr.f32.gmra.mrb[0].mxu0 %v497
      %v590 = vpop.f32.mrb[0].mxu0
      %v591 = vadd.f32 0.0, %v590
      %v592 = vpop.f32.mrb[0].mxu0
      %593 = vmatprep.mubr.f32.mxu0 0.0
      %594 = vmatmul.mubr.f32.gmra.mrb[0].mxu0 %v500
      %v595 = vpop.f32.mrb[0].mxu0
      %v596 = vadd.f32 0.0, %v595
      %v597 = vpop.f32.mrb[0].mxu0
      %598 = vmatprep.mubr.f32.mxu0 0.0
      %599 = vmatmul.mubr.f32.gmra.mrb[0].mxu0 %v503
      %v600 = vpop.f32.mrb[0].mxu0
      %v601 = vadd.f32 0.0, %v600
      %v602 = vpop.f32.mrb[0].mxu0
      %603 = vmatprep.mubr.f32.mxu0 0.0
      %604 = vmatmul.mubr.f32.gmra.mrb[0].mxu0 %v506
      %v605 = vpop.f32.mrb[0].mxu0
      %v606 = vadd.f32 0.0, %v605
      %v607 = vpop.f32.mrb[0].mxu0
      %608 = vmatprep.mubr.f32.mxu0 0.0
      %609 = vmatmul.mubr.f32.gmra.mrb[0].mxu0 %v509
      %v610 = vpop.f32.mrb[0].mxu0
      %v611 = vadd.f32 0.0, %v610
      %v612 = vpop.f32.mrb[0].mxu0
      %613 = vmatprep.mubr.f32.mxu0 0.0
      %614 = vmatmul.mubr.f32.gmra.mrb[0].mxu0 %v512
      %v615 = vpop.f32.mrb[0].mxu0
      %v616 = vadd.f32 0.0, %v615
      %v617 = vpop.f32.mrb[0].mxu0
      %618 = vdwg.mxu0
      %v619 = vld [vmem:[%s2] sm:$0x1]
      %v621 = vlaneseq
      %v622 = vshrl.u32 %v621, 7
      %v623 = vsub.s32 0, %v622
      %v624 = vrot.slane %v619, %v623
      %v626 = vmul.f32 %v581, %v624
      %v627 = vmul.f32 %v586, %v624
      %v628 = vmul.f32 %v591, %v624
      %v629 = vmul.f32 %v596, %v624
      %v630 = vmul.f32 %v601, %v624
      %v631 = vmul.f32 %v606, %v624
      %v632 = vmul.f32 %v611, %v624
      %v633 = vmul.f32 %v616, %v624
      %v634 = vld [vmem:[%s3] sm:$0x1]
      %v636 = vlaneseq
      %v637 = vshrl.u32 %v636, 7
      %v638 = vsub.s32 0, %v637
      %v639 = vrot.slane %v634, %v638
      %v641 = vadd.f32 %v626, %v639
      %v642 = vadd.f32 %v627, %v639
      %v643 = vadd.f32 %v628, %v639
      %v644 = vadd.f32 %v629, %v639
      %v645 = vadd.f32 %v630, %v639
      %v646 = vadd.f32 %v631, %v639
      %v647 = vadd.f32 %v632, %v639
      %v648 = vadd.f32 %v633, %v639
      %v649 = vxor.u32 %v641, 2147483648
      %v650 = vxor.u32 %v642, 2147483648
      %v651 = vxor.u32 %v643, 2147483648
      %v652 = vxor.u32 %v644, 2147483648
      %v653 = vxor.u32 %v645, 2147483648
      %v654 = vxor.u32 %v646, 2147483648
      %v655 = vxor.u32 %v647, 2147483648
      %v656 = vxor.u32 %v648, 2147483648
      %v657 = vmul.f32 %v649, 1.442695
      %v658 = vpow.pop %v657
      %v659 = vmul.f32 %v650, 1.442695
      %v660 = vpow.pop %v659
      %v661 = vmul.f32 %v651, 1.442695
      %v662 = vpow.pop %v661
      %v663 = vmul.f32 %v652, 1.442695
      %v664 = vpow.pop %v663
      %v665 = vmul.f32 %v653, 1.442695
      %v666 = vpow.pop %v665
      %v667 = vmul.f32 %v654, 1.442695
      %v668 = vpow.pop %v667
      %v669 = vmul.f32 %v655, 1.442695
      %v670 = vpow.pop %v669
      %v671 = vmul.f32 %v656, 1.442695
      %v672 = vpow.pop %v671
      %v673 = vadd.f32 %v658, 1.0
      %v674 = vadd.f32 %v660, 1.0
      %v675 = vadd.f32 %v662, 1.0
      %v676 = vadd.f32 %v664, 1.0
      %v677 = vadd.f32 %v666, 1.0
      %v678 = vadd.f32 %v668, 1.0
      %v679 = vadd.f32 %v670, 1.0
      %v680 = vadd.f32 %v672, 1.0
      %v681 = vrcp.pop %v673
      %v682 = vmul.f32 1.0, %v681
      %v683 = vrcp.pop %v674
      %v684 = vmul.f32 1.0, %v683
      %v685 = vrcp.pop %v675
      %v686 = vmul.f32 1.0, %v685
      %v687 = vrcp.pop %v676
      %v688 = vmul.f32 1.0, %v687
      %v689 = vrcp.pop %v677
      %v690 = vmul.f32 1.0, %v689
      %v691 = vrcp.pop %v678
      %v692 = vmul.f32 1.0, %v691
      %v693 = vrcp.pop %v679
      %v694 = vmul.f32 1.0, %v693
      %v695 = vrcp.pop %v680
      %v696 = vmul.f32 1.0, %v695
      %v697 = vmul.f32 %v641, %v682
      %v698 = vmul.f32 %v642, %v684
      %v699 = vmul.f32 %v643, %v686
      %v700 = vmul.f32 %v644, %v688
      %v701 = vmul.f32 %v645, %v690
      %v702 = vmul.f32 %v646, %v692
      %v703 = vmul.f32 %v647, %v694
      %v704 = vmul.f32 %v648, %v696
      %v705 = vld [vmem:[%s4] sm:$0xff]
      %v706 = vld [vmem:[%s4 + $0x8] sm:$0xff]
      %v707 = vld [vmem:[%s4 + $0x10] sm:$0xff]
      %v708 = vld [vmem:[%s4 + $0x18] sm:$0xff]
      %v709 = vld [vmem:[%s4 + $0x20] sm:$0xff]
      %v710 = vld [vmem:[%s4 + $0x28] sm:$0xff]
      %v711 = vld [vmem:[%s4 + $0x30] sm:$0xff]
      %v712 = vld [vmem:[%s4 + $0x38] sm:$0xff]
      %v713 = vld [vmem:[%s4 + $0x40] sm:$0xff]
      %v714 = vld [vmem:[%s4 + $0x48] sm:$0xff]
      %v715 = vld [vmem:[%s4 + $0x50] sm:$0xff]
      %v716 = vld [vmem:[%s4 + $0x58] sm:$0xff]
      %v717 = vld [vmem:[%s4 + $0x60] sm:$0xff]
      %v718 = vld [vmem:[%s4 + $0x68] sm:$0xff]
      %v719 = vld [vmem:[%s4 + $0x70] sm:$0xff]
      %v720 = vld [vmem:[%s4 + $0x78] sm:$0xff]
      %v721 = vld [vmem:[%s4 + $0x80] sm:$0xff]
      %v722 = vld [vmem:[%s4 + $0x88] sm:$0xff]
      %v723 = vld [vmem:[%s4 + $0x90] sm:$0xff]
      %v724 = vld [vmem:[%s4 + $0x98] sm:$0xff]
      %v725 = vld [vmem:[%s4 + $0xa0] sm:$0xff]
      %v726 = vld [vmem:[%s4 + $0xa8] sm:$0xff]
      %v727 = vld [vmem:[%s4 + $0xb0] sm:$0xff]
      %v728 = vld [vmem:[%s4 + $0xb8] sm:$0xff]
      %v729 = vld [vmem:[%s4 + $0xc0] sm:$0xff]
      %v730 = vld [vmem:[%s4 + $0xc8] sm:$0xff]
      %v731 = vld [vmem:[%s4 + $0xd0] sm:$0xff]
      %v732 = vld [vmem:[%s4 + $0xd8] sm:$0xff]
      %v733 = vld [vmem:[%s4 + $0xe0] sm:$0xff]
      %v734 = vld [vmem:[%s4 + $0xe8] sm:$0xff]
      %v735 = vld [vmem:[%s4 + $0xf0] sm:$0xff]
      %v736 = vld [vmem:[%s4 + $0xf8] sm:$0xff]
      %v737 = vld [vmem:[%s4 + $0x100] sm:$0xff]
      %v738 = vld [vmem:[%s4 + $0x108] sm:$0xff]
      %v739 = vld [vmem:[%s4 + $0x110] sm:$0xff]
      %v740 = vld [vmem:[%s4 + $0x118] sm:$0xff]
      %v741 = vld [vmem:[%s4 + $0x120] sm:$0xff]
      %v742 = vld [vmem:[%s4 + $0x128] sm:$0xff]
      %v743 = vld [vmem:[%s4 + $0x130] sm:$0xff]
      %v744 = vld [vmem:[%s4 + $0x138] sm:$0xff]
      %v746 = vsel %vm489, %v697, 0
      %v749 = vsel %vm489, %v698, 0
      %v752 = vsel %vm489, %v699, 0
      %v755 = vsel %vm489, %v700, 0
      %v758 = vsel %vm489, %v701, 0
      %v761 = vsel %vm489, %v702, 0
      %v764 = vsel %vm489, %v703, 0
      %v767 = vsel %vm489, %v704, 0
      %769 = vmatprep.subr.mxu0 %v706
      %770 = vmatpush1.msra.mxu0 %v705
      %771 = vmatprep.subr.mxu0 %v716
      %772 = vmatpush1.msra.mxu0 %v715
      %773 = vmatprep.subr.mxu0 %v726
      %774 = vmatpush1.msra.mxu0 %v725
      %775 = vmatprep.subr.mxu0 %v736
      %776 = vmatpush1.msra.mxu0 %v735
      %777 = vmatprep.subr.mxu0 0.0
      %778 = vmatpush1.msra.mxu0 0.0
      %779 = vmatprep.subr.mxu0 0.0
      %780 = vmatpush1.msra.mxu0 0.0
      %781 = vmatprep.subr.mxu0 0.0
      %782 = vmatpush1.msra.mxu0 0.0
      %783 = vmatprep.subr.mxu0 0.0
      %784 = vmatpush1.msra.mxu0 0.0
      %785 = vmatprep.subr.mxu0 0.0
      %786 = vmatpush1.msra.mxu0 0.0
      %787 = vmatprep.subr.mxu0 0.0
      %788 = vmatpush1.msra.mxu0 0.0
      %789 = vmatprep.subr.mxu0 0.0
      %790 = vmatpush1.msra.mxu0 0.0
      %791 = vmatprep.subr.mxu0 0.0
      %792 = vmatpush1.msra.mxu0 0.0
      %793 = vmatprep.subr.mxu0 0.0
      %794 = vmatpush1.msra.mxu0 0.0
      %795 = vmatprep.subr.mxu0 0.0
      %796 = vmatpush1.msra.mxu0 0.0
      %797 = vmatprep.subr.mxu0 0.0
      %798 = vmatpush1.msra.mxu0 0.0
      %799 = vmatprep.subr.mxu0 0.0
      %800 = vmatpush1.msra.mxu0 0.0
      %801 = vmatprep.subr.mxu0 0.0
      %802 = vmatpush1.msra.mxu0 0.0
      %803 = vmatprep.subr.mxu0 0.0
      %804 = vmatpush1.msra.mxu0 0.0
      %805 = vmatprep.subr.mxu0 0.0
      %806 = vmatpush1.msra.mxu0 0.0
      %807 = vmatprep.subr.mxu0 0.0
      %808 = vmatpush1.msra.mxu0 0.0
      %809 = vmatprep.subr.mxu0 0.0
      %810 = vmatpush1.msra.mxu0 0.0
      %811 = vmatprep.subr.mxu0 0.0
      %812 = vmatpush1.msra.mxu0 0.0
      %813 = vmatprep.subr.mxu0 0.0
      %814 = vmatpush1.msra.mxu0 0.0
      %815 = vmatprep.subr.mxu0 0.0
      %816 = vmatpush1.msra.mxu0 0.0
      %817 = vmatprep.subr.mxu0 0.0
      %818 = vmatpush1.msra.mxu0 0.0
      %819 = vmatprep.subr.mxu0 0.0
      %820 = vmatpush1.msra.mxu0 0.0
      %821 = vmatprep.subr.mxu0 0.0
      %822 = vmatpush1.msra.mxu0 0.0
      %823 = vmatprep.subr.mxu0 0.0
      %824 = vmatpush1.msra.mxu0 0.0
      %825 = vmatprep.subr.mxu0 0.0
      %826 = vmatpush1.msra.mxu0 0.0
      %827 = vmatprep.subr.mxu0 0.0
      %828 = vmatpush1.msra.mxu0 0.0
      %829 = vmatprep.subr.mxu0 0.0
      %830 = vmatpush1.msra.mxu0 0.0
      %831 = vmatprep.subr.mxu0 0.0
      %832 = vmatpush1.msra.mxu0 0.0
      %833 = vmatprep.mubr.f32.mxu0 0.0
      %834 = vmatmul.mubr.f32.gmra.mrb[0].mxu0 %v746
      %v835 = vpop.f32.mrb[0].mxu0
      %v836 = vadd.f32 0.0, %v835
      %v837 = vpop.f32.mrb[0].mxu0
      %v838 = vadd.f32 0.0, %v837
      %839 = vmatprep.mubr.f32.mxu0 0.0
      %840 = vmatmul.mubr.f32.gmra.mrb[0].mxu0 %v749
      %v841 = vpop.f32.mrb[0].mxu0
      %v842 = vadd.f32 0.0, %v841
      %v843 = vpop.f32.mrb[0].mxu0
      %v844 = vadd.f32 0.0, %v843
      %845 = vmatprep.mubr.f32.mxu0 0.0
      %846 = vmatmul.mubr.f32.gmra.mrb[0].mxu0 %v752
      %v847 = vpop.f32.mrb[0].mxu0
      %v848 = vadd.f32 0.0, %v847
      %v849 = vpop.f32.mrb[0].mxu0
      %v850 = vadd.f32 0.0, %v849
      %851 = vmatprep.mubr.f32.mxu0 0.0
      %852 = vmatmul.mubr.f32.gmra.mrb[0].mxu0 %v755
      %v853 = vpop.f32.mrb[0].mxu0
      %v854 = vadd.f32 0.0, %v853
      %v855 = vpop.f32.mrb[0].mxu0
      %v856 = vadd.f32 0.0, %v855
      %857 = vmatprep.mubr.f32.mxu0 0.0
      %858 = vmatmul.mubr.f32.gmra.mrb[0].mxu0 %v758
      %v859 = vpop.f32.mrb[0].mxu0
      %v860 = vadd.f32 0.0, %v859
      %v861 = vpop.f32.mrb[0].mxu0
      %v862 = vadd.f32 0.0, %v861
      %863 = vmatprep.mubr.f32.mxu0 0.0
      %864 = vmatmul.mubr.f32.gmra.mrb[0].mxu0 %v761
      %v865 = vpop.f32.mrb[0].mxu0
      %v866 = vadd.f32 0.0, %v865
      %v867 = vpop.f32.mrb[0].mxu0
      %v868 = vadd.f32 0.0, %v867
      %869 = vmatprep.mubr.f32.mxu0 0.0
      %870 = vmatmul.mubr.f32.gmra.mrb[0].mxu0 %v764
      %v871 = vpop.f32.mrb[0].mxu0
      %v872 = vadd.f32 0.0, %v871
      %v873 = vpop.f32.mrb[0].mxu0
      %v874 = vadd.f32 0.0, %v873
      %875 = vmatprep.mubr.f32.mxu0 0.0
      %876 = vmatmul.mubr.f32.gmra.mrb[0].mxu0 %v767
      %v877 = vpop.f32.mrb[0].mxu0
      %v878 = vadd.f32 0.0, %v877
      %v879 = vpop.f32.mrb[0].mxu0
      %v880 = vadd.f32 0.0, %v879
      %881 = vdwg.mxu0
      %882 = vmatprep.subr.mxu0 %v708
      %883 = vmatpush1.msra.mxu0 %v707
      %884 = vmatprep.subr.mxu0 %v718
      %885 = vmatpush1.msra.mxu0 %v717
      %886 = vmatprep.subr.mxu0 %v728
      %887 = vmatpush1.msra.mxu0 %v727
      %888 = vmatprep.subr.mxu0 %v738
      %889 = vmatpush1.msra.mxu0 %v737
      %890 = vmatprep.subr.mxu0 0.0
      %891 = vmatpush1.msra.mxu0 0.0
      %892 = vmatprep.subr.mxu0 0.0
      %893 = vmatpush1.msra.mxu0 0.0
      %894 = vmatprep.subr.mxu0 0.0
      %895 = vmatpush1.msra.mxu0 0.0
      %896 = vmatprep.subr.mxu0 0.0
      %897 = vmatpush1.msra.mxu0 0.0
      %898 = vmatprep.subr.mxu0 0.0
      %899 = vmatpush1.msra.mxu0 0.0
      %900 = vmatprep.subr.mxu0 0.0
      %901 = vmatpush1.msra.mxu0 0.0
      %902 = vmatprep.subr.mxu0 0.0
      %903 = vmatpush1.msra.mxu0 0.0
      %904 = vmatprep.subr.mxu0 0.0
      %905 = vmatpush1.msra.mxu0 0.0
      %906 = vmatprep.subr.mxu0 0.0
      %907 = vmatpush1.msra.mxu0 0.0
      %908 = vmatprep.subr.mxu0 0.0
      %909 = vmatpush1.msra.mxu0 0.0
      %910 = vmatprep.subr.mxu0 0.0
      %911 = vmatpush1.msra.mxu0 0.0
      %912 = vmatprep.subr.mxu0 0.0
      %913 = vmatpush1.msra.mxu0 0.0
      %914 = vmatprep.subr.mxu0 0.0
      %915 = vmatpush1.msra.mxu0 0.0
      %916 = vmatprep.subr.mxu0 0.0
      %917 = vmatpush1.msra.mxu0 0.0
      %918 = vmatprep.subr.mxu0 0.0
      %919 = vmatpush1.msra.mxu0 0.0
      %920 = vmatprep.subr.mxu0 0.0
      %921 = vmatpush1.msra.mxu0 0.0
      %922 = vmatprep.subr.mxu0 0.0
      %923 = vmatpush1.msra.mxu0 0.0
      %924 = vmatprep.subr.mxu0 0.0
      %925 = vmatpush1.msra.mxu0 0.0
      %926 = vmatprep.subr.mxu0 0.0
      %927 = vmatpush1.msra.mxu0 0.0
      %928 = vmatprep.subr.mxu0 0.0
      %929 = vmatpush1.msra.mxu0 0.0
      %930 = vmatprep.subr.mxu0 0.0
      %931 = vmatpush1.msra.mxu0 0.0
      %932 = vmatprep.subr.mxu0 0.0
      %933 = vmatpush1.msra.mxu0 0.0
      %934 = vmatprep.subr.mxu0 0.0
      %935 = vmatpush1.msra.mxu0 0.0
      %936 = vmatprep.subr.mxu0 0.0
      %937 = vmatpush1.msra.mxu0 0.0
      %938 = vmatprep.subr.mxu0 0.0
      %939 = vmatpush1.msra.mxu0 0.0
      %940 = vmatprep.subr.mxu0 0.0
      %941 = vmatpush1.msra.mxu0 0.0
      %942 = vmatprep.subr.mxu0 0.0
      %943 = vmatpush1.msra.mxu0 0.0
      %944 = vmatprep.subr.mxu0 0.0
      %945 = vmatpush1.msra.mxu0 0.0
      %946 = vmatprep.mubr.f32.mxu0 0.0
      %947 = vmatmul.mubr.f32.gmra.mrb[0].mxu0 %v746
      %v948 = vpop.f32.mrb[0].mxu0
      %v949 = vadd.f32 0.0, %v948
      %v950 = vpop.f32.mrb[0].mxu0
      %v951 = vadd.f32 0.0, %v950
      %952 = vmatprep.mubr.f32.mxu0 0.0
      %953 = vmatmul.mubr.f32.gmra.mrb[0].mxu0 %v749
      %v954 = vpop.f32.mrb[0].mxu0
      %v955 = vadd.f32 0.0, %v954
      %v956 = vpop.f32.mrb[0].mxu0
      %v957 = vadd.f32 0.0, %v956
      %958 = vmatprep.mubr.f32.mxu0 0.0
      %959 = vmatmul.mubr.f32.gmra.mrb[0].mxu0 %v752
      %v960 = vpop.f32.mrb[0].mxu0
      %v961 = vadd.f32 0.0, %v960
      %v962 = vpop.f32.mrb[0].mxu0
      %v963 = vadd.f32 0.0, %v962
      %964 = vmatprep.mubr.f32.mxu0 0.0
      %965 = vmatmul.mubr.f32.gmra.mrb[0].mxu0 %v755
      %v966 = vpop.f32.mrb[0].mxu0
      %v967 = vadd.f32 0.0, %v966
      %v968 = vpop.f32.mrb[0].mxu0
      %v969 = vadd.f32 0.0, %v968
      %970 = vmatprep.mubr.f32.mxu0 0.0
      %971 = vmatmul.mubr.f32.gmra.mrb[0].mxu0 %v758
      %v972 = vpop.f32.mrb[0].mxu0
      %v973 = vadd.f32 0.0, %v972
      %v974 = vpop.f32.mrb[0].mxu0
      %v975 = vadd.f32 0.0, %v974
      %976 = vmatprep.mubr.f32.mxu0 0.0
      %977 = vmatmul.mubr.f32.gmra.mrb[0].mxu0 %v761
      %v978 = vpop.f32.mrb[0].mxu0
      %v979 = vadd.f32 0.0, %v978
      %v980 = vpop.f32.mrb[0].mxu0
      %v981 = vadd.f32 0.0, %v980
      %982 = vmatprep.mubr.f32.mxu0 0.0
      %983 = vmatmul.mubr.f32.gmra.mrb[0].mxu0 %v764
      %v984 = vpop.f32.mrb[0].mxu0
      %v985 = vadd.f32 0.0, %v984
      %v986 = vpop.f32.mrb[0].mxu0
      %v987 = vadd.f32 0.0, %v986
      %988 = vmatprep.mubr.f32.mxu0 0.0
      %989 = vmatmul.mubr.f32.gmra.mrb[0].mxu0 %v767
      %v990 = vpop.f32.mrb[0].mxu0
      %v991 = vadd.f32 0.0, %v990
      %v992 = vpop.f32.mrb[0].mxu0
      %v993 = vadd.f32 0.0, %v992
      %994 = vdwg.mxu0
      %995 = vmatprep.subr.mxu0 %v710
      %996 = vmatpush1.msra.mxu0 %v709
      %997 = vmatprep.subr.mxu0 %v720
      %998 = vmatpush1.msra.mxu0 %v719
      %999 = vmatprep.subr.mxu0 %v730
      %1000 = vmatpush1.msra.mxu0 %v729
      %1001 = vmatprep.subr.mxu0 %v740
      %1002 = vmatpush1.msra.mxu0 %v739
      %1003 = vmatprep.subr.mxu0 0.0
      %1004 = vmatpush1.msra.mxu0 0.0
      %1005 = vmatprep.subr.mxu0 0.0
      %1006 = vmatpush1.msra.mxu0 0.0
      %1007 = vmatprep.subr.mxu0 0.0
      %1008 = vmatpush1.msra.mxu0 0.0
      %1009 = vmatprep.subr.mxu0 0.0
      %1010 = vmatpush1.msra.mxu0 0.0
      %1011 = vmatprep.subr.mxu0 0.0
      %1012 = vmatpush1.msra.mxu0 0.0
      %1013 = vmatprep.subr.mxu0 0.0
      %1014 = vmatpush1.msra.mxu0 0.0
      %1015 = vmatprep.subr.mxu0 0.0
      %1016 = vmatpush1.msra.mxu0 0.0
      %1017 = vmatprep.subr.mxu0 0.0
      %1018 = vmatpush1.msra.mxu0 0.0
      %1019 = vmatprep.subr.mxu0 0.0
      %1020 = vmatpush1.msra.mxu0 0.0
      %1021 = vmatprep.subr.mxu0 0.0
      %1022 = vmatpush1.msra.mxu0 0.0
      %1023 = vmatprep.subr.mxu0 0.0
      %1024 = vmatpush1.msra.mxu0 0.0
      %1025 = vmatprep.subr.mxu0 0.0
      %1026 = vmatpush1.msra.mxu0 0.0
      %1027 = vmatprep.subr.mxu0 0.0
      %1028 = vmatpush1.msra.mxu0 0.0
      %1029 = vmatprep.subr.mxu0 0.0
      %1030 = vmatpush1.msra.mxu0 0.0
      %1031 = vmatprep.subr.mxu0 0.0
      %1032 = vmatpush1.msra.mxu0 0.0
      %1033 = vmatprep.subr.mxu0 0.0
      %1034 = vmatpush1.msra.mxu0 0.0
      %1035 = vmatprep.subr.mxu0 0.0
      %1036 = vmatpush1.msra.mxu0 0.0
      %1037 = vmatprep.subr.mxu0 0.0
      %1038 = vmatpush1.msra.mxu0 0.0
      %1039 = vmatprep.subr.mxu0 0.0
      %1040 = vmatpush1.msra.mxu0 0.0
      %1041 = vmatprep.subr.mxu0 0.0
      %1042 = vmatpush1.msra.mxu0 0.0
      %1043 = vmatprep.subr.mxu0 0.0
      %1044 = vmatpush1.msra.mxu0 0.0
      %1045 = vmatprep.subr.mxu0 0.0
      %1046 = vmatpush1.msra.mxu0 0.0
      %1047 = vmatprep.subr.mxu0 0.0
      %1048 = vmatpush1.msra.mxu0 0.0
      %1049 = vmatprep.subr.mxu0 0.0
      %1050 = vmatpush1.msra.mxu0 0.0
      %1051 = vmatprep.subr.mxu0 0.0
      %1052 = vmatpush1.msra.mxu0 0.0
      %1053 = vmatprep.subr.mxu0 0.0
      %1054 = vmatpush1.msra.mxu0 0.0
      %1055 = vmatprep.subr.mxu0 0.0
      %1056 = vmatpush1.msra.mxu0 0.0
      %1057 = vmatprep.subr.mxu0 0.0
      %1058 = vmatpush1.msra.mxu0 0.0
      %1059 = vmatprep.mubr.f32.mxu0 0.0
      %1060 = vmatmul.mubr.f32.gmra.mrb[0].mxu0 %v746
      %v1061 = vpop.f32.mrb[0].mxu0
      %v1062 = vadd.f32 0.0, %v1061
      %v1063 = vpop.f32.mrb[0].mxu0
      %v1064 = vadd.f32 0.0, %v1063
      %1065 = vmatprep.mubr.f32.mxu0 0.0
      %1066 = vmatmul.mubr.f32.gmra.mrb[0].mxu0 %v749
      %v1067 = vpop.f32.mrb[0].mxu0
      %v1068 = vadd.f32 0.0, %v1067
      %v1069 = vpop.f32.mrb[0].mxu0
      %v1070 = vadd.f32 0.0, %v1069
      %1071 = vmatprep.mubr.f32.mxu0 0.0
      %1072 = vmatmul.mubr.f32.gmra.mrb[0].mxu0 %v752
      %v1073 = vpop.f32.mrb[0].mxu0
      %v1074 = vadd.f32 0.0, %v1073
      %v1075 = vpop.f32.mrb[0].mxu0
      %v1076 = vadd.f32 0.0, %v1075
      %1077 = vmatprep.mubr.f32.mxu0 0.0
      %1078 = vmatmul.mubr.f32.gmra.mrb[0].mxu0 %v755
      %v1079 = vpop.f32.mrb[0].mxu0
      %v1080 = vadd.f32 0.0, %v1079
      %v1081 = vpop.f32.mrb[0].mxu0
      %v1082 = vadd.f32 0.0, %v1081
      %1083 = vmatprep.mubr.f32.mxu0 0.0
      %1084 = vmatmul.mubr.f32.gmra.mrb[0].mxu0 %v758
      %v1085 = vpop.f32.mrb[0].mxu0
      %v1086 = vadd.f32 0.0, %v1085
      %v1087 = vpop.f32.mrb[0].mxu0
      %v1088 = vadd.f32 0.0, %v1087
      %1089 = vmatprep.mubr.f32.mxu0 0.0
      %1090 = vmatmul.mubr.f32.gmra.mrb[0].mxu0 %v761
      %v1091 = vpop.f32.mrb[0].mxu0
      %v1092 = vadd.f32 0.0, %v1091
      %v1093 = vpop.f32.mrb[0].mxu0
      %v1094 = vadd.f32 0.0, %v1093
      %1095 = vmatprep.mubr.f32.mxu0 0.0
      %1096 = vmatmul.mubr.f32.gmra.mrb[0].mxu0 %v764
      %v1097 = vpop.f32.mrb[0].mxu0
      %v1098 = vadd.f32 0.0, %v1097
      %v1099 = vpop.f32.mrb[0].mxu0
      %v1100 = vadd.f32 0.0, %v1099
      %1101 = vmatprep.mubr.f32.mxu0 0.0
      %1102 = vmatmul.mubr.f32.gmra.mrb[0].mxu0 %v767
      %v1103 = vpop.f32.mrb[0].mxu0
      %v1104 = vadd.f32 0.0, %v1103
      %v1105 = vpop.f32.mrb[0].mxu0
      %v1106 = vadd.f32 0.0, %v1105
      %1107 = vdwg.mxu0
      %1108 = vmatprep.subr.mxu0 %v712
      %1109 = vmatpush1.msra.mxu0 %v711
      %1110 = vmatprep.subr.mxu0 %v722
      %1111 = vmatpush1.msra.mxu0 %v721
      %1112 = vmatprep.subr.mxu0 %v732
      %1113 = vmatpush1.msra.mxu0 %v731
      %1114 = vmatprep.subr.mxu0 %v742
      %1115 = vmatpush1.msra.mxu0 %v741
      %1116 = vmatprep.subr.mxu0 0.0
      %1117 = vmatpush1.msra.mxu0 0.0
      %1118 = vmatprep.subr.mxu0 0.0
      %1119 = vmatpush1.msra.mxu0 0.0
      %1120 = vmatprep.subr.mxu0 0.0
      %1121 = vmatpush1.msra.mxu0 0.0
      %1122 = vmatprep.subr.mxu0 0.0
      %1123 = vmatpush1.msra.mxu0 0.0
      %1124 = vmatprep.subr.mxu0 0.0
      %1125 = vmatpush1.msra.mxu0 0.0
      %1126 = vmatprep.subr.mxu0 0.0
      %1127 = vmatpush1.msra.mxu0 0.0
      %1128 = vmatprep.subr.mxu0 0.0
      %1129 = vmatpush1.msra.mxu0 0.0
      %1130 = vmatprep.subr.mxu0 0.0
      %1131 = vmatpush1.msra.mxu0 0.0
      %1132 = vmatprep.subr.mxu0 0.0
      %1133 = vmatpush1.msra.mxu0 0.0
      %1134 = vmatprep.subr.mxu0 0.0
      %1135 = vmatpush1.msra.mxu0 0.0
      %1136 = vmatprep.subr.mxu0 0.0
      %1137 = vmatpush1.msra.mxu0 0.0
      %1138 = vmatprep.subr.mxu0 0.0
      %1139 = vmatpush1.msra.mxu0 0.0
      %1140 = vmatprep.subr.mxu0 0.0
      %1141 = vmatpush1.msra.mxu0 0.0
      %1142 = vmatprep.subr.mxu0 0.0
      %1143 = vmatpush1.msra.mxu0 0.0
      %1144 = vmatprep.subr.mxu0 0.0
      %1145 = vmatpush1.msra.mxu0 0.0
      %1146 = vmatprep.subr.mxu0 0.0
      %1147 = vmatpush1.msra.mxu0 0.0
      %1148 = vmatprep.subr.mxu0 0.0
      %1149 = vmatpush1.msra.mxu0 0.0
      %1150 = vmatprep.subr.mxu0 0.0
      %1151 = vmatpush1.msra.mxu0 0.0
      %1152 = vmatprep.subr.mxu0 0.0
      %1153 = vmatpush1.msra.mxu0 0.0
      %1154 = vmatprep.subr.mxu0 0.0
      %1155 = vmatpush1.msra.mxu0 0.0
      %1156 = vmatprep.subr.mxu0 0.0
      %1157 = vmatpush1.msra.mxu0 0.0
      %1158 = vmatprep.subr.mxu0 0.0
      %1159 = vmatpush1.msra.mxu0 0.0
      %1160 = vmatprep.subr.mxu0 0.0
      %1161 = vmatpush1.msra.mxu0 0.0
      %1162 = vmatprep.subr.mxu0 0.0
      %1163 = vmatpush1.msra.mxu0 0.0
      %1164 = vmatprep.subr.mxu0 0.0
      %1165 = vmatpush1.msra.mxu0 0.0
      %1166 = vmatprep.subr.mxu0 0.0
      %1167 = vmatpush1.msra.mxu0 0.0
      %1168 = vmatprep.subr.mxu0 0.0
      %1169 = vmatpush1.msra.mxu0 0.0
      %1170 = vmatprep.subr.mxu0 0.0
      %1171 = vmatpush1.msra.mxu0 0.0
      %1172 = vmatprep.mubr.f32.mxu0 0.0
      %1173 = vmatmul.mubr.f32.gmra.mrb[0].mxu0 %v746
      %v1174 = vpop.f32.mrb[0].mxu0
      %v1175 = vadd.f32 0.0, %v1174
      %v1176 = vpop.f32.mrb[0].mxu0
      %v1177 = vadd.f32 0.0, %v1176
      %1178 = vmatprep.mubr.f32.mxu0 0.0
      %1179 = vmatmul.mubr.f32.gmra.mrb[0].mxu0 %v749
      %v1180 = vpop.f32.mrb[0].mxu0
      %v1181 = vadd.f32 0.0, %v1180
      %v1182 = vpop.f32.mrb[0].mxu0
      %v1183 = vadd.f32 0.0, %v1182
      %1184 = vmatprep.mubr.f32.mxu0 0.0
      %1185 = vmatmul.mubr.f32.gmra.mrb[0].mxu0 %v752
      %v1186 = vpop.f32.mrb[0].mxu0
      %v1187 = vadd.f32 0.0, %v1186
      %v1188 = vpop.f32.mrb[0].mxu0
      %v1189 = vadd.f32 0.0, %v1188
      %1190 = vmatprep.mubr.f32.mxu0 0.0
      %1191 = vmatmul.mubr.f32.gmra.mrb[0].mxu0 %v755
      %v1192 = vpop.f32.mrb[0].mxu0
      %v1193 = vadd.f32 0.0, %v1192
      %v1194 = vpop.f32.mrb[0].mxu0
      %v1195 = vadd.f32 0.0, %v1194
      %1196 = vmatprep.mubr.f32.mxu0 0.0
      %1197 = vmatmul.mubr.f32.gmra.mrb[0].mxu0 %v758
      %v1198 = vpop.f32.mrb[0].mxu0
      %v1199 = vadd.f32 0.0, %v1198
      %v1200 = vpop.f32.mrb[0].mxu0
      %v1201 = vadd.f32 0.0, %v1200
      %1202 = vmatprep.mubr.f32.mxu0 0.0
      %1203 = vmatmul.mubr.f32.gmra.mrb[0].mxu0 %v761
      %v1204 = vpop.f32.mrb[0].mxu0
      %v1205 = vadd.f32 0.0, %v1204
      %v1206 = vpop.f32.mrb[0].mxu0
      %v1207 = vadd.f32 0.0, %v1206
      %1208 = vmatprep.mubr.f32.mxu0 0.0
      %1209 = vmatmul.mubr.f32.gmra.mrb[0].mxu0 %v764
      %v1210 = vpop.f32.mrb[0].mxu0
      %v1211 = vadd.f32 0.0, %v1210
      %v1212 = vpop.f32.mrb[0].mxu0
      %v1213 = vadd.f32 0.0, %v1212
      %1214 = vmatprep.mubr.f32.mxu0 0.0
      %1215 = vmatmul.mubr.f32.gmra.mrb[0].mxu0 %v767
      %v1216 = vpop.f32.mrb[0].mxu0
      %v1217 = vadd.f32 0.0, %v1216
      %v1218 = vpop.f32.mrb[0].mxu0
      %v1219 = vadd.f32 0.0, %v1218
      %1220 = vdwg.mxu0
      %1221 = vmatprep.subr.mxu0 %v714
      %1222 = vmatpush1.msra.mxu0 %v713
      %1223 = vmatprep.subr.mxu0 %v724
      %1224 = vmatpush1.msra.mxu0 %v723
      %1225 = vmatprep.subr.mxu0 %v734
      %1226 = vmatpush1.msra.mxu0 %v733
      %1227 = vmatprep.subr.mxu0 %v744
      %1228 = vmatpush1.msra.mxu0 %v743
      %1229 = vmatprep.subr.mxu0 0.0
      %1230 = vmatpush1.msra.mxu0 0.0
      %1231 = vmatprep.subr.mxu0 0.0
      %1232 = vmatpush1.msra.mxu0 0.0
      %1233 = vmatprep.subr.mxu0 0.0
      %1234 = vmatpush1.msra.mxu0 0.0
      %1235 = vmatprep.subr.mxu0 0.0
      %1236 = vmatpush1.msra.mxu0 0.0
      %1237 = vmatprep.subr.mxu0 0.0
      %1238 = vmatpush1.msra.mxu0 0.0
      %1239 = vmatprep.subr.mxu0 0.0
      %1240 = vmatpush1.msra.mxu0 0.0
      %1241 = vmatprep.subr.mxu0 0.0
      %1242 = vmatpush1.msra.mxu0 0.0
      %1243 = vmatprep.subr.mxu0 0.0
      %1244 = vmatpush1.msra.mxu0 0.0
      %1245 = vmatprep.subr.mxu0 0.0
      %1246 = vmatpush1.msra.mxu0 0.0
      %1247 = vmatprep.subr.mxu0 0.0
      %1248 = vmatpush1.msra.mxu0 0.0
      %1249 = vmatprep.subr.mxu0 0.0
      %1250 = vmatpush1.msra.mxu0 0.0
      %1251 = vmatprep.subr.mxu0 0.0
      %1252 = vmatpush1.msra.mxu0 0.0
      %1253 = vmatprep.subr.mxu0 0.0
      %1254 = vmatpush1.msra.mxu0 0.0
      %1255 = vmatprep.subr.mxu0 0.0
      %1256 = vmatpush1.msra.mxu0 0.0
      %1257 = vmatprep.subr.mxu0 0.0
      %1258 = vmatpush1.msra.mxu0 0.0
      %1259 = vmatprep.subr.mxu0 0.0
      %1260 = vmatpush1.msra.mxu0 0.0
      %1261 = vmatprep.subr.mxu0 0.0
      %1262 = vmatpush1.msra.mxu0 0.0
      %1263 = vmatprep.subr.mxu0 0.0
      %1264 = vmatpush1.msra.mxu0 0.0
      %1265 = vmatprep.subr.mxu0 0.0
      %1266 = vmatpush1.msra.mxu0 0.0
      %1267 = vmatprep.subr.mxu0 0.0
      %1268 = vmatpush1.msra.mxu0 0.0
      %1269 = vmatprep.subr.mxu0 0.0
      %1270 = vmatpush1.msra.mxu0 0.0
      %1271 = vmatprep.subr.mxu0 0.0
      %1272 = vmatpush1.msra.mxu0 0.0
      %1273 = vmatprep.subr.mxu0 0.0
      %1274 = vmatpush1.msra.mxu0 0.0
      %1275 = vmatprep.subr.mxu0 0.0
      %1276 = vmatpush1.msra.mxu0 0.0
      %1277 = vmatprep.subr.mxu0 0.0
      %1278 = vmatpush1.msra.mxu0 0.0
      %1279 = vmatprep.subr.mxu0 0.0
      %1280 = vmatpush1.msra.mxu0 0.0
      %1281 = vmatprep.subr.mxu0 0.0
      %1282 = vmatpush1.msra.mxu0 0.0
      %1283 = vmatprep.subr.mxu0 0.0
      %1284 = vmatpush1.msra.mxu0 0.0
      %1285 = vmatprep.mubr.f32.mxu0 0.0
      %1286 = vmatmul.mubr.f32.gmra.mrb[0].mxu0 %v746
      %v1287 = vpop.f32.mrb[0].mxu0
      %v1288 = vadd.f32 0.0, %v1287
      %v1289 = vpop.f32.mrb[0].mxu0
      %v1290 = vadd.f32 0.0, %v1289
      %1291 = vmatprep.mubr.f32.mxu0 0.0
      %1292 = vmatmul.mubr.f32.gmra.mrb[0].mxu0 %v749
      %v1293 = vpop.f32.mrb[0].mxu0
      %v1294 = vadd.f32 0.0, %v1293
      %v1295 = vpop.f32.mrb[0].mxu0
      %v1296 = vadd.f32 0.0, %v1295
      %1297 = vmatprep.mubr.f32.mxu0 0.0
      %1298 = vmatmul.mubr.f32.gmra.mrb[0].mxu0 %v752
      %v1299 = vpop.f32.mrb[0].mxu0
      %v1300 = vadd.f32 0.0, %v1299
      %v1301 = vpop.f32.mrb[0].mxu0
      %v1302 = vadd.f32 0.0, %v1301
      %1303 = vmatprep.mubr.f32.mxu0 0.0
      %1304 = vmatmul.mubr.f32.gmra.mrb[0].mxu0 %v755
      %v1305 = vpop.f32.mrb[0].mxu0
      %v1306 = vadd.f32 0.0, %v1305
      %v1307 = vpop.f32.mrb[0].mxu0
      %v1308 = vadd.f32 0.0, %v1307
      %1309 = vmatprep.mubr.f32.mxu0 0.0
      %1310 = vmatmul.mubr.f32.gmra.mrb[0].mxu0 %v758
      %v1311 = vpop.f32.mrb[0].mxu0
      %v1312 = vadd.f32 0.0, %v1311
      %v1313 = vpop.f32.mrb[0].mxu0
      %v1314 = vadd.f32 0.0, %v1313
      %1315 = vmatprep.mubr.f32.mxu0 0.0
      %1316 = vmatmul.mubr.f32.gmra.mrb[0].mxu0 %v761
      %v1317 = vpop.f32.mrb[0].mxu0
      %v1318 = vadd.f32 0.0, %v1317
      %v1319 = vpop.f32.mrb[0].mxu0
      %v1320 = vadd.f32 0.0, %v1319
      %1321 = vmatprep.mubr.f32.mxu0 0.0
      %1322 = vmatmul.mubr.f32.gmra.mrb[0].mxu0 %v764
      %v1323 = vpop.f32.mrb[0].mxu0
      %v1324 = vadd.f32 0.0, %v1323
      %v1325 = vpop.f32.mrb[0].mxu0
      %v1326 = vadd.f32 0.0, %v1325
      %1327 = vmatprep.mubr.f32.mxu0 0.0
      %1328 = vmatmul.mubr.f32.gmra.mrb[0].mxu0 %v767
      %v1329 = vpop.f32.mrb[0].mxu0
      %v1330 = vadd.f32 0.0, %v1329
      %v1331 = vpop.f32.mrb[0].mxu0
      %v1332 = vadd.f32 0.0, %v1331
      %1333 = vdwg.mxu0
      %v1334 = vld [vmem:[%s5] sm:$0xff]
      %v1335 = vld [vmem:[%s5 + $0x8] sm:$0x3]
      %v1338 = vlaneseq
      %v1339 = vshrl.u32 %v1338, 7
      %v1340 = vsub.s32 0, %v1339
      %v1341 = vrot.slane %v1334, %v1340
      %v1342 = vlaneseq
      %v1343 = vshrl.u32 %v1342, 7
      %v1344 = vsub.s32 1, %v1343
      %v1345 = vrot.slane %v1334, %v1344
      %v1346 = vlaneseq
      %v1347 = vshrl.u32 %v1346, 7
      %v1348 = vsub.s32 2, %v1347
      %v1349 = vrot.slane %v1334, %v1348
      %v1350 = vlaneseq
      %v1351 = vshrl.u32 %v1350, 7
      %v1352 = vsub.s32 3, %v1351
      %v1353 = vrot.slane %v1334, %v1352
      %v1354 = vlaneseq
      %v1355 = vshrl.u32 %v1354, 7
      %v1356 = vsub.s32 4, %v1355
      %v1357 = vrot.slane %v1334, %v1356
      %v1358 = vlaneseq
      %v1359 = vshrl.u32 %v1358, 7
      %v1360 = vsub.s32 5, %v1359
      %v1361 = vrot.slane %v1334, %v1360
      %v1362 = vlaneseq
      %v1363 = vshrl.u32 %v1362, 7
      %v1364 = vsub.s32 6, %v1363
      %v1365 = vrot.slane %v1334, %v1364
      %v1366 = vlaneseq
      %v1367 = vshrl.u32 %v1366, 7
      %v1368 = vsub.s32 7, %v1367
      %v1369 = vrot.slane %v1334, %v1368
      %v1370 = vlaneseq
      %v1371 = vshrl.u32 %v1370, 7
      %v1372 = vsub.s32 0, %v1371
      %v1373 = vrot.slane %v1335, %v1372
      %v1374 = vlaneseq
      %v1375 = vshrl.u32 %v1374, 7
      %v1376 = vsub.s32 1, %v1375
      %v1377 = vrot.slane %v1335, %v1376
      %v1388 = vmul.f32 %v836, %v1341
      %v1389 = vmul.f32 %v838, %v1345
      %v1390 = vmul.f32 %v949, %v1349
      %v1391 = vmul.f32 %v951, %v1353
      %v1392 = vmul.f32 %v1062, %v1357
      %v1393 = vmul.f32 %v1064, %v1361
      %v1394 = vmul.f32 %v1175, %v1365
      %v1395 = vmul.f32 %v1177, %v1369
      %v1396 = vmul.f32 %v1288, %v1373
      %v1397 = vmul.f32 %v1290, %v1377
      %v1398 = vmul.f32 %v842, %v1341
      %v1399 = vmul.f32 %v844, %v1345
      %v1400 = vmul.f32 %v955, %v1349
      %v1401 = vmul.f32 %v957, %v1353
      %v1402 = vmul.f32 %v1068, %v1357
      %v1403 = vmul.f32 %v1070, %v1361
      %v1404 = vmul.f32 %v1181, %v1365
      %v1405 = vmul.f32 %v1183, %v1369
      %v1406 = vmul.f32 %v1294, %v1373
      %v1407 = vmul.f32 %v1296, %v1377
      %v1408 = vmul.f32 %v848, %v1341
      %v1409 = vmul.f32 %v850, %v1345
      %v1410 = vmul.f32 %v961, %v1349
      %v1411 = vmul.f32 %v963, %v1353
      %v1412 = vmul.f32 %v1074, %v1357
      %v1413 = vmul.f32 %v1076, %v1361
      %v1414 = vmul.f32 %v1187, %v1365
      %v1415 = vmul.f32 %v1189, %v1369
      %v1416 = vmul.f32 %v1300, %v1373
      %v1417 = vmul.f32 %v1302, %v1377
      %v1418 = vmul.f32 %v854, %v1341
      %v1419 = vmul.f32 %v856, %v1345
      %v1420 = vmul.f32 %v967, %v1349
      %v1421 = vmul.f32 %v969, %v1353
      %v1422 = vmul.f32 %v1080, %v1357
      %v1423 = vmul.f32 %v1082, %v1361
      %v1424 = vmul.f32 %v1193, %v1365
      %v1425 = vmul.f32 %v1195, %v1369
      %v1426 = vmul.f32 %v1306, %v1373
      %v1427 = vmul.f32 %v1308, %v1377
      %v1428 = vmul.f32 %v860, %v1341
      %v1429 = vmul.f32 %v862, %v1345
      %v1430 = vmul.f32 %v973, %v1349
      %v1431 = vmul.f32 %v975, %v1353
      %v1432 = vmul.f32 %v1086, %v1357
      %v1433 = vmul.f32 %v1088, %v1361
      %v1434 = vmul.f32 %v1199, %v1365
      %v1435 = vmul.f32 %v1201, %v1369
      %v1436 = vmul.f32 %v1312, %v1373
      %v1437 = vmul.f32 %v1314, %v1377
      %v1438 = vmul.f32 %v866, %v1341
      %v1439 = vmul.f32 %v868, %v1345
      %v1440 = vmul.f32 %v979, %v1349
      %v1441 = vmul.f32 %v981, %v1353
      %v1442 = vmul.f32 %v1092, %v1357
      %v1443 = vmul.f32 %v1094, %v1361
      %v1444 = vmul.f32 %v1205, %v1365
      %v1445 = vmul.f32 %v1207, %v1369
      %v1446 = vmul.f32 %v1318, %v1373
      %v1447 = vmul.f32 %v1320, %v1377
      %v1448 = vmul.f32 %v872, %v1341
      %v1449 = vmul.f32 %v874, %v1345
      %v1450 = vmul.f32 %v985, %v1349
      %v1451 = vmul.f32 %v987, %v1353
      %v1452 = vmul.f32 %v1098, %v1357
      %v1453 = vmul.f32 %v1100, %v1361
      %v1454 = vmul.f32 %v1211, %v1365
      %v1455 = vmul.f32 %v1213, %v1369
      %v1456 = vmul.f32 %v1324, %v1373
      %v1457 = vmul.f32 %v1326, %v1377
      %v1458 = vmul.f32 %v878, %v1341
      %v1459 = vmul.f32 %v880, %v1345
      %v1460 = vmul.f32 %v991, %v1349
      %v1461 = vmul.f32 %v993, %v1353
      %v1462 = vmul.f32 %v1104, %v1357
      %v1463 = vmul.f32 %v1106, %v1361
      %v1464 = vmul.f32 %v1217, %v1365
      %v1465 = vmul.f32 %v1219, %v1369
      %v1466 = vmul.f32 %v1330, %v1373
      %v1467 = vmul.f32 %v1332, %v1377
      %v1468 = vld [vmem:[%s6] sm:$0xff]
      %v1469 = vld [vmem:[%s6 + $0x8] sm:$0x3]
      %v1472 = vlaneseq
      %v1473 = vshrl.u32 %v1472, 7
      %v1474 = vsub.s32 0, %v1473
      %v1475 = vrot.slane %v1468, %v1474
      %v1476 = vlaneseq
      %v1477 = vshrl.u32 %v1476, 7
      %v1478 = vsub.s32 1, %v1477
      %v1479 = vrot.slane %v1468, %v1478
      %v1480 = vlaneseq
      %v1481 = vshrl.u32 %v1480, 7
      %v1482 = vsub.s32 2, %v1481
      %v1483 = vrot.slane %v1468, %v1482
      %v1484 = vlaneseq
      %v1485 = vshrl.u32 %v1484, 7
      %v1486 = vsub.s32 3, %v1485
      %v1487 = vrot.slane %v1468, %v1486
      %v1488 = vlaneseq
      %v1489 = vshrl.u32 %v1488, 7
      %v1490 = vsub.s32 4, %v1489
      %v1491 = vrot.slane %v1468, %v1490
      %v1492 = vlaneseq
      %v1493 = vshrl.u32 %v1492, 7
      %v1494 = vsub.s32 5, %v1493
      %v1495 = vrot.slane %v1468, %v1494
      %v1496 = vlaneseq
      %v1497 = vshrl.u32 %v1496, 7
      %v1498 = vsub.s32 6, %v1497
      %v1499 = vrot.slane %v1468, %v1498
      %v1500 = vlaneseq
      %v1501 = vshrl.u32 %v1500, 7
      %v1502 = vsub.s32 7, %v1501
      %v1503 = vrot.slane %v1468, %v1502
      %v1504 = vlaneseq
      %v1505 = vshrl.u32 %v1504, 7
      %v1506 = vsub.s32 0, %v1505
      %v1507 = vrot.slane %v1469, %v1506
      %v1508 = vlaneseq
      %v1509 = vshrl.u32 %v1508, 7
      %v1510 = vsub.s32 1, %v1509
      %v1511 = vrot.slane %v1469, %v1510
      %v1522 = vadd.f32 %v1388, %v1475
      %v1523 = vadd.f32 %v1389, %v1479
      %v1524 = vadd.f32 %v1390, %v1483
      %v1525 = vadd.f32 %v1391, %v1487
      %v1526 = vadd.f32 %v1392, %v1491
      %v1527 = vadd.f32 %v1393, %v1495
      %v1528 = vadd.f32 %v1394, %v1499
      %v1529 = vadd.f32 %v1395, %v1503
      %v1530 = vadd.f32 %v1396, %v1507
      %v1531 = vadd.f32 %v1397, %v1511
      %v1532 = vadd.f32 %v1398, %v1475
      %v1533 = vadd.f32 %v1399, %v1479
      %v1534 = vadd.f32 %v1400, %v1483
      %v1535 = vadd.f32 %v1401, %v1487
      %v1536 = vadd.f32 %v1402, %v1491
      %v1537 = vadd.f32 %v1403, %v1495
      %v1538 = vadd.f32 %v1404, %v1499
      %v1539 = vadd.f32 %v1405, %v1503
      %v1540 = vadd.f32 %v1406, %v1507
      %v1541 = vadd.f32 %v1407, %v1511
      %v1542 = vadd.f32 %v1408, %v1475
      %v1543 = vadd.f32 %v1409, %v1479
      %v1544 = vadd.f32 %v1410, %v1483
      %v1545 = vadd.f32 %v1411, %v1487
      %v1546 = vadd.f32 %v1412, %v1491
      %v1547 = vadd.f32 %v1413, %v1495
      %v1548 = vadd.f32 %v1414, %v1499
      %v1549 = vadd.f32 %v1415, %v1503
      %v1550 = vadd.f32 %v1416, %v1507
      %v1551 = vadd.f32 %v1417, %v1511
      %v1552 = vadd.f32 %v1418, %v1475
      %v1553 = vadd.f32 %v1419, %v1479
      %v1554 = vadd.f32 %v1420, %v1483
      %v1555 = vadd.f32 %v1421, %v1487
      %v1556 = vadd.f32 %v1422, %v1491
      %v1557 = vadd.f32 %v1423, %v1495
      %v1558 = vadd.f32 %v1424, %v1499
      %v1559 = vadd.f32 %v1425, %v1503
      %v1560 = vadd.f32 %v1426, %v1507
      %v1561 = vadd.f32 %v1427, %v1511
      %v1562 = vadd.f32 %v1428, %v1475
      %v1563 = vadd.f32 %v1429, %v1479
      %v1564 = vadd.f32 %v1430, %v1483
      %v1565 = vadd.f32 %v1431, %v1487
      %v1566 = vadd.f32 %v1432, %v1491
      %v1567 = vadd.f32 %v1433, %v1495
      %v1568 = vadd.f32 %v1434, %v1499
      %v1569 = vadd.f32 %v1435, %v1503
      %v1570 = vadd.f32 %v1436, %v1507
      %v1571 = vadd.f32 %v1437, %v1511
      %v1572 = vadd.f32 %v1438, %v1475
      %v1573 = vadd.f32 %v1439, %v1479
      %v1574 = vadd.f32 %v1440, %v1483
      %v1575 = vadd.f32 %v1441, %v1487
      %v1576 = vadd.f32 %v1442, %v1491
      %v1577 = vadd.f32 %v1443, %v1495
      %v1578 = vadd.f32 %v1444, %v1499
      %v1579 = vadd.f32 %v1445, %v1503
      %v1580 = vadd.f32 %v1446, %v1507
      %v1581 = vadd.f32 %v1447, %v1511
      %v1582 = vadd.f32 %v1448, %v1475
      %v1583 = vadd.f32 %v1449, %v1479
      %v1584 = vadd.f32 %v1450, %v1483
      %v1585 = vadd.f32 %v1451, %v1487
      %v1586 = vadd.f32 %v1452, %v1491
      %v1587 = vadd.f32 %v1453, %v1495
      %v1588 = vadd.f32 %v1454, %v1499
      %v1589 = vadd.f32 %v1455, %v1503
      %v1590 = vadd.f32 %v1456, %v1507
      %v1591 = vadd.f32 %v1457, %v1511
      %v1592 = vadd.f32 %v1458, %v1475
      %v1593 = vadd.f32 %v1459, %v1479
      %v1594 = vadd.f32 %v1460, %v1483
      %v1595 = vadd.f32 %v1461, %v1487
      %v1596 = vadd.f32 %v1462, %v1491
      %v1597 = vadd.f32 %v1463, %v1495
      %v1598 = vadd.f32 %v1464, %v1499
      %v1599 = vadd.f32 %v1465, %v1503
      %v1600 = vadd.f32 %v1466, %v1507
      %v1601 = vadd.f32 %v1467, %v1511
      %v1602 = vxor.u32 %v1522, 2147483648
      %v1603 = vxor.u32 %v1523, 2147483648
      %v1604 = vxor.u32 %v1524, 2147483648
      %v1605 = vxor.u32 %v1525, 2147483648
      %v1606 = vxor.u32 %v1526, 2147483648
      %v1607 = vxor.u32 %v1527, 2147483648
      %v1608 = vxor.u32 %v1528, 2147483648
      %v1609 = vxor.u32 %v1529, 2147483648
      %v1610 = vxor.u32 %v1530, 2147483648
      %v1611 = vxor.u32 %v1531, 2147483648
      %v1612 = vxor.u32 %v1532, 2147483648
      %v1613 = vxor.u32 %v1533, 2147483648
      %v1614 = vxor.u32 %v1534, 2147483648
      %v1615 = vxor.u32 %v1535, 2147483648
      %v1616 = vxor.u32 %v1536, 2147483648
      %v1617 = vxor.u32 %v1537, 2147483648
      %v1618 = vxor.u32 %v1538, 2147483648
      %v1619 = vxor.u32 %v1539, 2147483648
      %v1620 = vxor.u32 %v1540, 2147483648
      %v1621 = vxor.u32 %v1541, 2147483648
      %v1622 = vxor.u32 %v1542, 2147483648
      %v1623 = vxor.u32 %v1543, 2147483648
      %v1624 = vxor.u32 %v1544, 2147483648
      %v1625 = vxor.u32 %v1545, 2147483648
      %v1626 = vxor.u32 %v1546, 2147483648
      %v1627 = vxor.u32 %v1547, 2147483648
      %v1628 = vxor.u32 %v1548, 2147483648
      %v1629 = vxor.u32 %v1549, 2147483648
      %v1630 = vxor.u32 %v1550, 2147483648
      %v1631 = vxor.u32 %v1551, 2147483648
      %v1632 = vxor.u32 %v1552, 2147483648
      %v1633 = vxor.u32 %v1553, 2147483648
      %v1634 = vxor.u32 %v1554, 2147483648
      %v1635 = vxor.u32 %v1555, 2147483648
      %v1636 = vxor.u32 %v1556, 2147483648
      %v1637 = vxor.u32 %v1557, 2147483648
      %v1638 = vxor.u32 %v1558, 2147483648
      %v1639 = vxor.u32 %v1559, 2147483648
      %v1640 = vxor.u32 %v1560, 2147483648
      %v1641 = vxor.u32 %v1561, 2147483648
      %v1642 = vxor.u32 %v1562, 2147483648
      %v1643 = vxor.u32 %v1563, 2147483648
      %v1644 = vxor.u32 %v1564, 2147483648
      %v1645 = vxor.u32 %v1565, 2147483648
      %v1646 = vxor.u32 %v1566, 2147483648
      %v1647 = vxor.u32 %v1567, 2147483648
      %v1648 = vxor.u32 %v1568, 2147483648
      %v1649 = vxor.u32 %v1569, 2147483648
      %v1650 = vxor.u32 %v1570, 2147483648
      %v1651 = vxor.u32 %v1571, 2147483648
      %v1652 = vxor.u32 %v1572, 2147483648
      %v1653 = vxor.u32 %v1573, 2147483648
      %v1654 = vxor.u32 %v1574, 2147483648
      %v1655 = vxor.u32 %v1575, 2147483648
      %v1656 = vxor.u32 %v1576, 2147483648
      %v1657 = vxor.u32 %v1577, 2147483648
      %v1658 = vxor.u32 %v1578, 2147483648
      %v1659 = vxor.u32 %v1579, 2147483648
      %v1660 = vxor.u32 %v1580, 2147483648
      %v1661 = vxor.u32 %v1581, 2147483648
      %v1662 = vxor.u32 %v1582, 2147483648
      %v1663 = vxor.u32 %v1583, 2147483648
      %v1664 = vxor.u32 %v1584, 2147483648
      %v1665 = vxor.u32 %v1585, 2147483648
      %v1666 = vxor.u32 %v1586, 2147483648
      %v1667 = vxor.u32 %v1587, 2147483648
      %v1668 = vxor.u32 %v1588, 2147483648
      %v1669 = vxor.u32 %v1589, 2147483648
      %v1670 = vxor.u32 %v1590, 2147483648
      %v1671 = vxor.u32 %v1591, 2147483648
      %v1672 = vxor.u32 %v1592, 2147483648
      %v1673 = vxor.u32 %v1593, 2147483648
      %v1674 = vxor.u32 %v1594, 2147483648
      %v1675 = vxor.u32 %v1595, 2147483648
      %v1676 = vxor.u32 %v1596, 2147483648
      %v1677 = vxor.u32 %v1597, 2147483648
      %v1678 = vxor.u32 %v1598, 2147483648
      %v1679 = vxor.u32 %v1599, 2147483648
      %v1680 = vxor.u32 %v1600, 2147483648
      %v1681 = vxor.u32 %v1601, 2147483648
      %v1682 = vmul.f32 %v1602, 1.442695
      %v1683 = vpow.pop %v1682
      %v1684 = vmul.f32 %v1603, 1.442695
      %v1685 = vpow.pop %v1684
      %v1686 = vmul.f32 %v1604, 1.442695
      %v1687 = vpow.pop %v1686
      %v1688 = vmul.f32 %v1605, 1.442695
      %v1689 = vpow.pop %v1688
      %v1690 = vmul.f32 %v1606, 1.442695
      %v1691 = vpow.pop %v1690
      %v1692 = vmul.f32 %v1607, 1.442695
      %v1693 = vpow.pop %v1692
      %v1694 = vmul.f32 %v1608, 1.442695
      %v1695 = vpow.pop %v1694
      %v1696 = vmul.f32 %v1609, 1.442695
      %v1697 = vpow.pop %v1696
      %v1698 = vmul.f32 %v1610, 1.442695
      %v1699 = vpow.pop %v1698
      %v1700 = vmul.f32 %v1611, 1.442695
      %v1701 = vpow.pop %v1700
      %v1702 = vmul.f32 %v1612, 1.442695
      %v1703 = vpow.pop %v1702
      %v1704 = vmul.f32 %v1613, 1.442695
      %v1705 = vpow.pop %v1704
      %v1706 = vmul.f32 %v1614, 1.442695
      %v1707 = vpow.pop %v1706
      %v1708 = vmul.f32 %v1615, 1.442695
      %v1709 = vpow.pop %v1708
      %v1710 = vmul.f32 %v1616, 1.442695
      %v1711 = vpow.pop %v1710
      %v1712 = vmul.f32 %v1617, 1.442695
      %v1713 = vpow.pop %v1712
      %v1714 = vmul.f32 %v1618, 1.442695
      %v1715 = vpow.pop %v1714
      %v1716 = vmul.f32 %v1619, 1.442695
      %v1717 = vpow.pop %v1716
      %v1718 = vmul.f32 %v1620, 1.442695
      %v1719 = vpow.pop %v1718
      %v1720 = vmul.f32 %v1621, 1.442695
      %v1721 = vpow.pop %v1720
      %v1722 = vmul.f32 %v1622, 1.442695
      %v1723 = vpow.pop %v1722
      %v1724 = vmul.f32 %v1623, 1.442695
      %v1725 = vpow.pop %v1724
      %v1726 = vmul.f32 %v1624, 1.442695
      %v1727 = vpow.pop %v1726
      %v1728 = vmul.f32 %v1625, 1.442695
      %v1729 = vpow.pop %v1728
      %v1730 = vmul.f32 %v1626, 1.442695
      %v1731 = vpow.pop %v1730
      %v1732 = vmul.f32 %v1627, 1.442695
      %v1733 = vpow.pop %v1732
      %v1734 = vmul.f32 %v1628, 1.442695
      %v1735 = vpow.pop %v1734
      %v1736 = vmul.f32 %v1629, 1.442695
      %v1737 = vpow.pop %v1736
      %v1738 = vmul.f32 %v1630, 1.442695
      %v1739 = vpow.pop %v1738
      %v1740 = vmul.f32 %v1631, 1.442695
      %v1741 = vpow.pop %v1740
      %v1742 = vmul.f32 %v1632, 1.442695
      %v1743 = vpow.pop %v1742
      %v1744 = vmul.f32 %v1633, 1.442695
      %v1745 = vpow.pop %v1744
      %v1746 = vmul.f32 %v1634, 1.442695
      %v1747 = vpow.pop %v1746
      %v1748 = vmul.f32 %v1635, 1.442695
      %v1749 = vpow.pop %v1748
      %v1750 = vmul.f32 %v1636, 1.442695
      %v1751 = vpow.pop %v1750
      %v1752 = vmul.f32 %v1637, 1.442695
      %v1753 = vpow.pop %v1752
      %v1754 = vmul.f32 %v1638, 1.442695
      %v1755 = vpow.pop %v1754
      %v1756 = vmul.f32 %v1639, 1.442695
      %v1757 = vpow.pop %v1756
      %v1758 = vmul.f32 %v1640, 1.442695
      %v1759 = vpow.pop %v1758
      %v1760 = vmul.f32 %v1641, 1.442695
      %v1761 = vpow.pop %v1760
      %v1762 = vmul.f32 %v1642, 1.442695
      %v1763 = vpow.pop %v1762
      %v1764 = vmul.f32 %v1643, 1.442695
      %v1765 = vpow.pop %v1764
      %v1766 = vmul.f32 %v1644, 1.442695
      %v1767 = vpow.pop %v1766
      %v1768 = vmul.f32 %v1645, 1.442695
      %v1769 = vpow.pop %v1768
      %v1770 = vmul.f32 %v1646, 1.442695
      %v1771 = vpow.pop %v1770
      %v1772 = vmul.f32 %v1647, 1.442695
      %v1773 = vpow.pop %v1772
      %v1774 = vmul.f32 %v1648, 1.442695
      %v1775 = vpow.pop %v1774
      %v1776 = vmul.f32 %v1649, 1.442695
      %v1777 = vpow.pop %v1776
      %v1778 = vmul.f32 %v1650, 1.442695
      %v1779 = vpow.pop %v1778
      %v1780 = vmul.f32 %v1651, 1.442695
      %v1781 = vpow.pop %v1780
      %v1782 = vmul.f32 %v1652, 1.442695
      %v1783 = vpow.pop %v1782
      %v1784 = vmul.f32 %v1653, 1.442695
      %v1785 = vpow.pop %v1784
      %v1786 = vmul.f32 %v1654, 1.442695
      %v1787 = vpow.pop %v1786
      %v1788 = vmul.f32 %v1655, 1.442695
      %v1789 = vpow.pop %v1788
      %v1790 = vmul.f32 %v1656, 1.442695
      %v1791 = vpow.pop %v1790
      %v1792 = vmul.f32 %v1657, 1.442695
      %v1793 = vpow.pop %v1792
      %v1794 = vmul.f32 %v1658, 1.442695
      %v1795 = vpow.pop %v1794
      %v1796 = vmul.f32 %v1659, 1.442695
      %v1797 = vpow.pop %v1796
      %v1798 = vmul.f32 %v1660, 1.442695
      %v1799 = vpow.pop %v1798
      %v1800 = vmul.f32 %v1661, 1.442695
      %v1801 = vpow.pop %v1800
      %v1802 = vmul.f32 %v1662, 1.442695
      %v1803 = vpow.pop %v1802
      %v1804 = vmul.f32 %v1663, 1.442695
      %v1805 = vpow.pop %v1804
      %v1806 = vmul.f32 %v1664, 1.442695
      %v1807 = vpow.pop %v1806
      %v1808 = vmul.f32 %v1665, 1.442695
      %v1809 = vpow.pop %v1808
      %v1810 = vmul.f32 %v1666, 1.442695
      %v1811 = vpow.pop %v1810
      %v1812 = vmul.f32 %v1667, 1.442695
      %v1813 = vpow.pop %v1812
      %v1814 = vmul.f32 %v1668, 1.442695
      %v1815 = vpow.pop %v1814
      %v1816 = vmul.f32 %v1669, 1.442695
      %v1817 = vpow.pop %v1816
      %v1818 = vmul.f32 %v1670, 1.442695
      %v1819 = vpow.pop %v1818
      %v1820 = vmul.f32 %v1671, 1.442695
      %v1821 = vpow.pop %v1820
      %v1822 = vmul.f32 %v1672, 1.442695
      %v1823 = vpow.pop %v1822
      %v1824 = vmul.f32 %v1673, 1.442695
      %v1825 = vpow.pop %v1824
      %v1826 = vmul.f32 %v1674, 1.442695
      %v1827 = vpow.pop %v1826
      %v1828 = vmul.f32 %v1675, 1.442695
      %v1829 = vpow.pop %v1828
      %v1830 = vmul.f32 %v1676, 1.442695
      %v1831 = vpow.pop %v1830
      %v1832 = vmul.f32 %v1677, 1.442695
      %v1833 = vpow.pop %v1832
      %v1834 = vmul.f32 %v1678, 1.442695
      %v1835 = vpow.pop %v1834
      %v1836 = vmul.f32 %v1679, 1.442695
      %v1837 = vpow.pop %v1836
      %v1838 = vmul.f32 %v1680, 1.442695
      %v1839 = vpow.pop %v1838
      %v1840 = vmul.f32 %v1681, 1.442695
      %v1841 = vpow.pop %v1840
      %v1842 = vadd.f32 %v1683, 1.0
      %v1843 = vadd.f32 %v1685, 1.0
      %v1844 = vadd.f32 %v1687, 1.0
      %v1845 = vadd.f32 %v1689, 1.0
      %v1846 = vadd.f32 %v1691, 1.0
      %v1847 = vadd.f32 %v1693, 1.0
      %v1848 = vadd.f32 %v1695, 1.0
      %v1849 = vadd.f32 %v1697, 1.0
      %v1850 = vadd.f32 %v1699, 1.0
      %v1851 = vadd.f32 %v1701, 1.0
      %v1852 = vadd.f32 %v1703, 1.0
      %v1853 = vadd.f32 %v1705, 1.0
      %v1854 = vadd.f32 %v1707, 1.0
      %v1855 = vadd.f32 %v1709, 1.0
      %v1856 = vadd.f32 %v1711, 1.0
      %v1857 = vadd.f32 %v1713, 1.0
      %v1858 = vadd.f32 %v1715, 1.0
      %v1859 = vadd.f32 %v1717, 1.0
      %v1860 = vadd.f32 %v1719, 1.0
      %v1861 = vadd.f32 %v1721, 1.0
      %v1862 = vadd.f32 %v1723, 1.0
      %v1863 = vadd.f32 %v1725, 1.0
      %v1864 = vadd.f32 %v1727, 1.0
      %v1865 = vadd.f32 %v1729, 1.0
      %v1866 = vadd.f32 %v1731, 1.0
      %v1867 = vadd.f32 %v1733, 1.0
      %v1868 = vadd.f32 %v1735, 1.0
      %v1869 = vadd.f32 %v1737, 1.0
      %v1870 = vadd.f32 %v1739, 1.0
      %v1871 = vadd.f32 %v1741, 1.0
      %v1872 = vadd.f32 %v1743, 1.0
      %v1873 = vadd.f32 %v1745, 1.0
      %v1874 = vadd.f32 %v1747, 1.0
      %v1875 = vadd.f32 %v1749, 1.0
      %v1876 = vadd.f32 %v1751, 1.0
      %v1877 = vadd.f32 %v1753, 1.0
      %v1878 = vadd.f32 %v1755, 1.0
      %v1879 = vadd.f32 %v1757, 1.0
      %v1880 = vadd.f32 %v1759, 1.0
      %v1881 = vadd.f32 %v1761, 1.0
      %v1882 = vadd.f32 %v1763, 1.0
      %v1883 = vadd.f32 %v1765, 1.0
      %v1884 = vadd.f32 %v1767, 1.0
      %v1885 = vadd.f32 %v1769, 1.0
      %v1886 = vadd.f32 %v1771, 1.0
      %v1887 = vadd.f32 %v1773, 1.0
      %v1888 = vadd.f32 %v1775, 1.0
      %v1889 = vadd.f32 %v1777, 1.0
      %v1890 = vadd.f32 %v1779, 1.0
      %v1891 = vadd.f32 %v1781, 1.0
      %v1892 = vadd.f32 %v1783, 1.0
      %v1893 = vadd.f32 %v1785, 1.0
      %v1894 = vadd.f32 %v1787, 1.0
      %v1895 = vadd.f32 %v1789, 1.0
      %v1896 = vadd.f32 %v1791, 1.0
      %v1897 = vadd.f32 %v1793, 1.0
      %v1898 = vadd.f32 %v1795, 1.0
      %v1899 = vadd.f32 %v1797, 1.0
      %v1900 = vadd.f32 %v1799, 1.0
      %v1901 = vadd.f32 %v1801, 1.0
      %v1902 = vadd.f32 %v1803, 1.0
      %v1903 = vadd.f32 %v1805, 1.0
      %v1904 = vadd.f32 %v1807, 1.0
      %v1905 = vadd.f32 %v1809, 1.0
      %v1906 = vadd.f32 %v1811, 1.0
      %v1907 = vadd.f32 %v1813, 1.0
      %v1908 = vadd.f32 %v1815, 1.0
      %v1909 = vadd.f32 %v1817, 1.0
      %v1910 = vadd.f32 %v1819, 1.0
      %v1911 = vadd.f32 %v1821, 1.0
      %v1912 = vadd.f32 %v1823, 1.0
      %v1913 = vadd.f32 %v1825, 1.0
      %v1914 = vadd.f32 %v1827, 1.0
      %v1915 = vadd.f32 %v1829, 1.0
      %v1916 = vadd.f32 %v1831, 1.0
      %v1917 = vadd.f32 %v1833, 1.0
      %v1918 = vadd.f32 %v1835, 1.0
      %v1919 = vadd.f32 %v1837, 1.0
      %v1920 = vadd.f32 %v1839, 1.0
      %v1921 = vadd.f32 %v1841, 1.0
      %v1922 = vrcp.pop %v1842
      %v1923 = vmul.f32 1.0, %v1922
      %v1924 = vrcp.pop %v1843
      %v1925 = vmul.f32 1.0, %v1924
      %v1926 = vrcp.pop %v1844
      %v1927 = vmul.f32 1.0, %v1926
      %v1928 = vrcp.pop %v1845
      %v1929 = vmul.f32 1.0, %v1928
      %v1930 = vrcp.pop %v1846
      %v1931 = vmul.f32 1.0, %v1930
      %v1932 = vrcp.pop %v1847
      %v1933 = vmul.f32 1.0, %v1932
      %v1934 = vrcp.pop %v1848
      %v1935 = vmul.f32 1.0, %v1934
      %v1936 = vrcp.pop %v1849
      %v1937 = vmul.f32 1.0, %v1936
      %v1938 = vrcp.pop %v1850
      %v1939 = vmul.f32 1.0, %v1938
      %v1940 = vrcp.pop %v1851
      %v1941 = vmul.f32 1.0, %v1940
      %v1942 = vrcp.pop %v1852
      %v1943 = vmul.f32 1.0, %v1942
      %v1944 = vrcp.pop %v1853
      %v1945 = vmul.f32 1.0, %v1944
      %v1946 = vrcp.pop %v1854
      %v1947 = vmul.f32 1.0, %v1946
      %v1948 = vrcp.pop %v1855
      %v1949 = vmul.f32 1.0, %v1948
      %v1950 = vrcp.pop %v1856
      %v1951 = vmul.f32 1.0, %v1950
      %v1952 = vrcp.pop %v1857
      %v1953 = vmul.f32 1.0, %v1952
      %v1954 = vrcp.pop %v1858
      %v1955 = vmul.f32 1.0, %v1954
      %v1956 = vrcp.pop %v1859
      %v1957 = vmul.f32 1.0, %v1956
      %v1958 = vrcp.pop %v1860
      %v1959 = vmul.f32 1.0, %v1958
      %v1960 = vrcp.pop %v1861
      %v1961 = vmul.f32 1.0, %v1960
      %v1962 = vrcp.pop %v1862
      %v1963 = vmul.f32 1.0, %v1962
      %v1964 = vrcp.pop %v1863
      %v1965 = vmul.f32 1.0, %v1964
      %v1966 = vrcp.pop %v1864
      %v1967 = vmul.f32 1.0, %v1966
      %v1968 = vrcp.pop %v1865
      %v1969 = vmul.f32 1.0, %v1968
      %v1970 = vrcp.pop %v1866
      %v1971 = vmul.f32 1.0, %v1970
      %v1972 = vrcp.pop %v1867
      %v1973 = vmul.f32 1.0, %v1972
      %v1974 = vrcp.pop %v1868
      %v1975 = vmul.f32 1.0, %v1974
      %v1976 = vrcp.pop %v1869
      %v1977 = vmul.f32 1.0, %v1976
      %v1978 = vrcp.pop %v1870
      %v1979 = vmul.f32 1.0, %v1978
      %v1980 = vrcp.pop %v1871
      %v1981 = vmul.f32 1.0, %v1980
      %v1982 = vrcp.pop %v1872
      %v1983 = vmul.f32 1.0, %v1982
      %v1984 = vrcp.pop %v1873
      %v1985 = vmul.f32 1.0, %v1984
      %v1986 = vrcp.pop %v1874
      %v1987 = vmul.f32 1.0, %v1986
      %v1988 = vrcp.pop %v1875
      %v1989 = vmul.f32 1.0, %v1988
      %v1990 = vrcp.pop %v1876
      %v1991 = vmul.f32 1.0, %v1990
      %v1992 = vrcp.pop %v1877
      %v1993 = vmul.f32 1.0, %v1992
      %v1994 = vrcp.pop %v1878
      %v1995 = vmul.f32 1.0, %v1994
      %v1996 = vrcp.pop %v1879
      %v1997 = vmul.f32 1.0, %v1996
      %v1998 = vrcp.pop %v1880
      %v1999 = vmul.f32 1.0, %v1998
      %v2000 = vrcp.pop %v1881
      %v2001 = vmul.f32 1.0, %v2000
      %v2002 = vrcp.pop %v1882
      %v2003 = vmul.f32 1.0, %v2002
      %v2004 = vrcp.pop %v1883
      %v2005 = vmul.f32 1.0, %v2004
      %v2006 = vrcp.pop %v1884
      %v2007 = vmul.f32 1.0, %v2006
      %v2008 = vrcp.pop %v1885
      %v2009 = vmul.f32 1.0, %v2008
      %v2010 = vrcp.pop %v1886
      %v2011 = vmul.f32 1.0, %v2010
      %v2012 = vrcp.pop %v1887
      %v2013 = vmul.f32 1.0, %v2012
      %v2014 = vrcp.pop %v1888
      %v2015 = vmul.f32 1.0, %v2014
      %v2016 = vrcp.pop %v1889
      %v2017 = vmul.f32 1.0, %v2016
      %v2018 = vrcp.pop %v1890
      %v2019 = vmul.f32 1.0, %v2018
      %v2020 = vrcp.pop %v1891
      %v2021 = vmul.f32 1.0, %v2020
      %v2022 = vrcp.pop %v1892
      %v2023 = vmul.f32 1.0, %v2022
      %v2024 = vrcp.pop %v1893
      %v2025 = vmul.f32 1.0, %v2024
      %v2026 = vrcp.pop %v1894
      %v2027 = vmul.f32 1.0, %v2026
      %v2028 = vrcp.pop %v1895
      %v2029 = vmul.f32 1.0, %v2028
      %v2030 = vrcp.pop %v1896
      %v2031 = vmul.f32 1.0, %v2030
      %v2032 = vrcp.pop %v1897
      %v2033 = vmul.f32 1.0, %v2032
      %v2034 = vrcp.pop %v1898
      %v2035 = vmul.f32 1.0, %v2034
      %v2036 = vrcp.pop %v1899
      %v2037 = vmul.f32 1.0, %v2036
      %v2038 = vrcp.pop %v1900
      %v2039 = vmul.f32 1.0, %v2038
      %v2040 = vrcp.pop %v1901
      %v2041 = vmul.f32 1.0, %v2040
      %v2042 = vrcp.pop %v1902
      %v2043 = vmul.f32 1.0, %v2042
      %v2044 = vrcp.pop %v1903
      %v2045 = vmul.f32 1.0, %v2044
      %v2046 = vrcp.pop %v1904
      %v2047 = vmul.f32 1.0, %v2046
      %v2048 = vrcp.pop %v1905
      %v2049 = vmul.f32 1.0, %v2048
      %v2050 = vrcp.pop %v1906
      %v2051 = vmul.f32 1.0, %v2050
      %v2052 = vrcp.pop %v1907
      %v2053 = vmul.f32 1.0, %v2052
      %v2054 = vrcp.pop %v1908
      %v2055 = vmul.f32 1.0, %v2054
      %v2056 = vrcp.pop %v1909
      %v2057 = vmul.f32 1.0, %v2056
      %v2058 = vrcp.pop %v1910
      %v2059 = vmul.f32 1.0, %v2058
      %v2060 = vrcp.pop %v1911
      %v2061 = vmul.f32 1.0, %v2060
      %v2062 = vrcp.pop %v1912
      %v2063 = vmul.f32 1.0, %v2062
      %v2064 = vrcp.pop %v1913
      %v2065 = vmul.f32 1.0, %v2064
      %v2066 = vrcp.pop %v1914
      %v2067 = vmul.f32 1.0, %v2066
      %v2068 = vrcp.pop %v1915
      %v2069 = vmul.f32 1.0, %v2068
      %v2070 = vrcp.pop %v1916
      %v2071 = vmul.f32 1.0, %v2070
      %v2072 = vrcp.pop %v1917
      %v2073 = vmul.f32 1.0, %v2072
      %v2074 = vrcp.pop %v1918
      %v2075 = vmul.f32 1.0, %v2074
      %v2076 = vrcp.pop %v1919
      %v2077 = vmul.f32 1.0, %v2076
      %v2078 = vrcp.pop %v1920
      %v2079 = vmul.f32 1.0, %v2078
      %v2080 = vrcp.pop %v1921
      %v2081 = vmul.f32 1.0, %v2080
      %v2082 = vmul.f32 %v1522, %v1923
      %v2083 = vmul.f32 %v1523, %v1925
      %v2084 = vmul.f32 %v1524, %v1927
      %v2085 = vmul.f32 %v1525, %v1929
      %v2086 = vmul.f32 %v1526, %v1931
      %v2087 = vmul.f32 %v1527, %v1933
      %v2088 = vmul.f32 %v1528, %v1935
      %v2089 = vmul.f32 %v1529, %v1937
      %v2090 = vmul.f32 %v1530, %v1939
      %v2091 = vmul.f32 %v1531, %v1941
      %v2092 = vmul.f32 %v1532, %v1943
      %v2093 = vmul.f32 %v1533, %v1945
      %v2094 = vmul.f32 %v1534, %v1947
      %v2095 = vmul.f32 %v1535, %v1949
      %v2096 = vmul.f32 %v1536, %v1951
      %v2097 = vmul.f32 %v1537, %v1953
      %v2098 = vmul.f32 %v1538, %v1955
      %v2099 = vmul.f32 %v1539, %v1957
      %v2100 = vmul.f32 %v1540, %v1959
      %v2101 = vmul.f32 %v1541, %v1961
      %v2102 = vmul.f32 %v1542, %v1963
      %v2103 = vmul.f32 %v1543, %v1965
      %v2104 = vmul.f32 %v1544, %v1967
      %v2105 = vmul.f32 %v1545, %v1969
      %v2106 = vmul.f32 %v1546, %v1971
      %v2107 = vmul.f32 %v1547, %v1973
      %v2108 = vmul.f32 %v1548, %v1975
      %v2109 = vmul.f32 %v1549, %v1977
      %v2110 = vmul.f32 %v1550, %v1979
      %v2111 = vmul.f32 %v1551, %v1981
      %v2112 = vmul.f32 %v1552, %v1983
      %v2113 = vmul.f32 %v1553, %v1985
      %v2114 = vmul.f32 %v1554, %v1987
      %v2115 = vmul.f32 %v1555, %v1989
      %v2116 = vmul.f32 %v1556, %v1991
      %v2117 = vmul.f32 %v1557, %v1993
      %v2118 = vmul.f32 %v1558, %v1995
      %v2119 = vmul.f32 %v1559, %v1997
      %v2120 = vmul.f32 %v1560, %v1999
      %v2121 = vmul.f32 %v1561, %v2001
      %v2122 = vmul.f32 %v1562, %v2003
      %v2123 = vmul.f32 %v1563, %v2005
      %v2124 = vmul.f32 %v1564, %v2007
      %v2125 = vmul.f32 %v1565, %v2009
      %v2126 = vmul.f32 %v1566, %v2011
      %v2127 = vmul.f32 %v1567, %v2013
      %v2128 = vmul.f32 %v1568, %v2015
      %v2129 = vmul.f32 %v1569, %v2017
      %v2130 = vmul.f32 %v1570, %v2019
      %v2131 = vmul.f32 %v1571, %v2021
      %v2132 = vmul.f32 %v1572, %v2023
      %v2133 = vmul.f32 %v1573, %v2025
      %v2134 = vmul.f32 %v1574, %v2027
      %v2135 = vmul.f32 %v1575, %v2029
      %v2136 = vmul.f32 %v1576, %v2031
      %v2137 = vmul.f32 %v1577, %v2033
      %v2138 = vmul.f32 %v1578, %v2035
      %v2139 = vmul.f32 %v1579, %v2037
      %v2140 = vmul.f32 %v1580, %v2039
      %v2141 = vmul.f32 %v1581, %v2041
      %v2142 = vmul.f32 %v1582, %v2043
      %v2143 = vmul.f32 %v1583, %v2045
      %v2144 = vmul.f32 %v1584, %v2047
      %v2145 = vmul.f32 %v1585, %v2049
      %v2146 = vmul.f32 %v1586, %v2051
      %v2147 = vmul.f32 %v1587, %v2053
      %v2148 = vmul.f32 %v1588, %v2055
      %v2149 = vmul.f32 %v1589, %v2057
      %v2150 = vmul.f32 %v1590, %v2059
      %v2151 = vmul.f32 %v1591, %v2061
      %v2152 = vmul.f32 %v1592, %v2063
      %v2153 = vmul.f32 %v1593, %v2065
      %v2154 = vmul.f32 %v1594, %v2067
      %v2155 = vmul.f32 %v1595, %v2069
      %v2156 = vmul.f32 %v1596, %v2071
      %v2157 = vmul.f32 %v1597, %v2073
      %v2158 = vmul.f32 %v1598, %v2075
      %v2159 = vmul.f32 %v1599, %v2077
      %v2160 = vmul.f32 %v1600, %v2079
      %v2161 = vmul.f32 %v1601, %v2081
      %v2162 = vld [vmem:[#allocation2] sm:$0xff]
      %v2163 = vld [vmem:[#allocation2 + $0x8] sm:$0x3]
      %v2164 = vadd.f32 %v2082, %v2092
      %v2165 = vadd.f32 %v2164, %v2102
      %v2166 = vadd.f32 %v2165, %v2112
      %v2167 = vadd.f32 %v2166, %v2122
      %v2168 = vadd.f32 %v2167, %v2132
      %v2169 = vadd.f32 %v2168, %v2142
      %v2170 = vadd.f32 %v2169, %v2152
      %v2171 = vrot.slane %v2170, 4
      %v2172 = vadd.f32 %v2170, %v2171
      %v2173 = vrot.slane %v2172, 2
      %v2174 = vadd.f32 %v2172, %v2173
      %v2175 = vrot.slane %v2174, 1
      %v2176 = vadd.f32 %v2174, %v2175
      %v2177 = vadd.f32 %v2083, %v2093
      %v2178 = vadd.f32 %v2177, %v2103
      %v2179 = vadd.f32 %v2178, %v2113
      %v2180 = vadd.f32 %v2179, %v2123
      %v2181 = vadd.f32 %v2180, %v2133
      %v2182 = vadd.f32 %v2181, %v2143
      %v2183 = vadd.f32 %v2182, %v2153
      %v2184 = vrot.slane %v2183, 4
      %v2185 = vadd.f32 %v2183, %v2184
      %v2186 = vrot.slane %v2185, 2
      %v2187 = vadd.f32 %v2185, %v2186
      %v2188 = vrot.slane %v2187, 1
      %v2189 = vadd.f32 %v2187, %v2188
      %v2190 = vadd.f32 %v2084, %v2094
      %v2191 = vadd.f32 %v2190, %v2104
      %v2192 = vadd.f32 %v2191, %v2114
      %v2193 = vadd.f32 %v2192, %v2124
      %v2194 = vadd.f32 %v2193, %v2134
      %v2195 = vadd.f32 %v2194, %v2144
      %v2196 = vadd.f32 %v2195, %v2154
      %v2197 = vrot.slane %v2196, 4
      %v2198 = vadd.f32 %v2196, %v2197
      %v2199 = vrot.slane %v2198, 2
      %v2200 = vadd.f32 %v2198, %v2199
      %v2201 = vrot.slane %v2200, 1
      %v2202 = vadd.f32 %v2200, %v2201
      %v2203 = vadd.f32 %v2085, %v2095
      %v2204 = vadd.f32 %v2203, %v2105
      %v2205 = vadd.f32 %v2204, %v2115
      %v2206 = vadd.f32 %v2205, %v2125
      %v2207 = vadd.f32 %v2206, %v2135
      %v2208 = vadd.f32 %v2207, %v2145
      %v2209 = vadd.f32 %v2208, %v2155
      %v2210 = vrot.slane %v2209, 4
      %v2211 = vadd.f32 %v2209, %v2210
      %v2212 = vrot.slane %v2211, 2
      %v2213 = vadd.f32 %v2211, %v2212
      %v2214 = vrot.slane %v2213, 1
      %v2215 = vadd.f32 %v2213, %v2214
      %v2216 = vadd.f32 %v2086, %v2096
      %v2217 = vadd.f32 %v2216, %v2106
      %v2218 = vadd.f32 %v2217, %v2116
      %v2219 = vadd.f32 %v2218, %v2126
      %v2220 = vadd.f32 %v2219, %v2136
      %v2221 = vadd.f32 %v2220, %v2146
      %v2222 = vadd.f32 %v2221, %v2156
      %v2223 = vrot.slane %v2222, 4
      %v2224 = vadd.f32 %v2222, %v2223
      %v2225 = vrot.slane %v2224, 2
      %v2226 = vadd.f32 %v2224, %v2225
      %v2227 = vrot.slane %v2226, 1
      %v2228 = vadd.f32 %v2226, %v2227
      %v2229 = vadd.f32 %v2087, %v2097
      %v2230 = vadd.f32 %v2229, %v2107
      %v2231 = vadd.f32 %v2230, %v2117
      %v2232 = vadd.f32 %v2231, %v2127
      %v2233 = vadd.f32 %v2232, %v2137
      %v2234 = vadd.f32 %v2233, %v2147
      %v2235 = vadd.f32 %v2234, %v2157
      %v2236 = vrot.slane %v2235, 4
      %v2237 = vadd.f32 %v2235, %v2236
      %v2238 = vrot.slane %v2237, 2
      %v2239 = vadd.f32 %v2237, %v2238
      %v2240 = vrot.slane %v2239, 1
      %v2241 = vadd.f32 %v2239, %v2240
      %v2242 = vadd.f32 %v2088, %v2098
      %v2243 = vadd.f32 %v2242, %v2108
      %v2244 = vadd.f32 %v2243, %v2118
      %v2245 = vadd.f32 %v2244, %v2128
      %v2246 = vadd.f32 %v2245, %v2138
      %v2247 = vadd.f32 %v2246, %v2148
      %v2248 = vadd.f32 %v2247, %v2158
      %v2249 = vrot.slane %v2248, 4
      %v2250 = vadd.f32 %v2248, %v2249
      %v2251 = vrot.slane %v2250, 2
      %v2252 = vadd.f32 %v2250, %v2251
      %v2253 = vrot.slane %v2252, 1
      %v2254 = vadd.f32 %v2252, %v2253
      %v2255 = vadd.f32 %v2089, %v2099
      %v2256 = vadd.f32 %v2255, %v2109
      %v2257 = vadd.f32 %v2256, %v2119
      %v2258 = vadd.f32 %v2257, %v2129
      %v2259 = vadd.f32 %v2258, %v2139
      %v2260 = vadd.f32 %v2259, %v2149
      %v2261 = vadd.f32 %v2260, %v2159
      %v2262 = vrot.slane %v2261, 4
      %v2263 = vadd.f32 %v2261, %v2262
      %v2264 = vrot.slane %v2263, 2
      %v2265 = vadd.f32 %v2263, %v2264
      %v2266 = vrot.slane %v2265, 1
      %v2267 = vadd.f32 %v2265, %v2266
      %v2268 = vadd.f32 %v2090, %v2100
      %v2269 = vadd.f32 %v2268, %v2110
      %v2270 = vadd.f32 %v2269, %v2120
      %v2271 = vadd.f32 %v2270, %v2130
      %v2272 = vadd.f32 %v2271, %v2140
      %v2273 = vadd.f32 %v2272, %v2150
      %v2274 = vadd.f32 %v2273, %v2160
      %v2275 = vrot.slane %v2274, 4
      %v2276 = vadd.f32 %v2274, %v2275
      %v2277 = vrot.slane %v2276, 2
      %v2278 = vadd.f32 %v2276, %v2277
      %v2279 = vrot.slane %v2278, 1
      %v2280 = vadd.f32 %v2278, %v2279
      %v2281 = vadd.f32 %v2091, %v2101
      %v2282 = vadd.f32 %v2281, %v2111
      %v2283 = vadd.f32 %v2282, %v2121
      %v2284 = vadd.f32 %v2283, %v2131
      %v2285 = vadd.f32 %v2284, %v2141
      %v2286 = vadd.f32 %v2285, %v2151
      %v2287 = vadd.f32 %v2286, %v2161
      %v2288 = vrot.slane %v2287, 4
      %v2289 = vadd.f32 %v2287, %v2288
      %v2290 = vrot.slane %v2289, 2
      %v2291 = vadd.f32 %v2289, %v2290
      %v2292 = vrot.slane %v2291, 1
      %v2293 = vadd.f32 %v2291, %v2292
      %v2304 = vcombine.low %v2176, %v2189
      %v2305 = vcombine.low %v2202, %v2215
      %v2306 = vcombine.low %v2228, %v2241
      %v2307 = vcombine.low %v2254, %v2267
      %v2309 = vunpack.c.l.s4 1966171168
      %v2310 = vunpack.c.0.s8 %v2309
      %v2311 = vlaneseq
      %v2312 = vshrl.u32 %v2311, 7
      %v2313 = vsub.s32 %v2310, %v2312
      %v2314 = vrot.slane %v2304, %v2313
      %v2316 = vunpack.c.l.s4 1966171168
      %v2317 = vunpack.c.0.s8 %v2316
      %v2318 = vlaneseq
      %v2319 = vshrl.u32 %v2318, 7
      %v2320 = vsub.s32 %v2317, %v2319
      %v2321 = vrot.slane %v2305, %v2320
      %v2323 = vunpack.c.l.s4 1966171168
      %v2324 = vunpack.c.0.s8 %v2323
      %v2325 = vlaneseq
      %v2326 = vshrl.u32 %v2325, 7
      %v2327 = vsub.s32 %v2324, %v2326
      %v2328 = vrot.slane %v2306, %v2327
      %v2330 = vunpack.c.l.s4 1966171168
      %v2331 = vunpack.c.0.s8 %v2330
      %v2332 = vlaneseq
      %v2333 = vshrl.u32 %v2332, 7
      %v2334 = vsub.s32 %v2331, %v2333
      %v2335 = vrot.slane %v2307, %v2334
      %v2336 = vcombine.low %v2314, %v2321
      %v2337 = vcombine.low %v2328, %v2335
      %v2339 = vunpack.c.l.s4 1966171168
      %v2340 = vunpack.c.0.s8 %v2339
      %v2341 = vlaneseq
      %v2342 = vshrl.u32 %v2341, 7
      %v2343 = vsub.s32 %v2340, %v2342
      %v2344 = vrot.slane %v2336, %v2343
      %v2346 = vunpack.c.l.s4 1966171168
      %v2347 = vunpack.c.0.s8 %v2346
      %v2348 = vlaneseq
      %v2349 = vshrl.u32 %v2348, 7
      %v2350 = vsub.s32 %v2347, %v2349
      %v2351 = vrot.slane %v2337, %v2350
      %v2352 = vcombine.low %v2344, %v2351
      %v2353 = vcombine.low %v2280, %v2293
      %v2355 = vunpack.c.l.s4 1966171168
      %v2356 = vunpack.c.0.s8 %v2355
      %v2357 = vlaneseq
      %v2358 = vshrl.u32 %v2357, 7
      %v2359 = vsub.s32 %v2356, %v2358
      %v2360 = vrot.slane %v2353, %v2359
      %v2362 = vunpack.c.l.s4 1966171168
      %v2363 = vunpack.c.0.s8 %v2362
      %v2364 = vlaneseq
      %v2365 = vshrl.u32 %v2364, 7
      %v2366 = vsub.s32 %v2363, %v2365
      %v2367 = vrot.slane %v2360, %v2366
      %v2370 = vadd.f32 %v2162, %v2352
      %v2371 = vadd.f32 %v2163, %v2367
      %2372 = vst [vmem:[#allocation2] sm:$0xff] %v2370
      %v2373 = vlaneseq
      %vm2374 = vcmp.ge.s32.totalorder %v2373, 0
      %vm2375 = vcmp.lt.s32.totalorder %v2373, 256
      %vm2376 = vmand %vm2374, %vm2375
      %2377 = vst.msk [vmem:[#allocation2 + $0x8] sm:$0x3] %vm2376, %v2371
      // Predicated region
      $region77: #{efficientnet_with_se_forward.1} parent=71 // pred_check
        %p2378 = pneg %p467
      $region78: #{efficientnet_with_se_forward.1} parent=71 // pred_check_branch
        %2380 = sbr.rel (%p2378) target = $region80
      $region79: #{efficientnet_with_se_forward.1} parent=71 // pred_region
        %v2381 = vld [vmem:[#allocation2] sm:$0xff]
        %v2382 = vld [vmem:[#allocation2 + $0x8] sm:$0x3]
        %v2383 = vmul.f32 %v2381, 0.015625
        %v2384 = vmul.f32 %v2382, 0.015625
        %v2385 = vld [vmem:[%s7] sm:$0xff]
        %v2386 = vld [vmem:[%s7 + $0x8] sm:$0xff]
        %v2387 = vld [vmem:[%s7 + $0x10] sm:$0xff]
        %v2388 = vld [vmem:[%s7 + $0x18] sm:$0xff]
        %v2389 = vld [vmem:[%s7 + $0x20] sm:$0xff]
        %v2390 = vld [vmem:[%s7 + $0x28] sm:$0xff]
        %v2391 = vld [vmem:[%s7 + $0x30] sm:$0xff]
        %v2392 = vld [vmem:[%s7 + $0x38] sm:$0xff]
        %v2393 = vld [vmem:[%s7 + $0x40] sm:$0xff]
        %v2394 = vld [vmem:[%s7 + $0x48] sm:$0xff]
        %v2395 = vld [vmem:[%s7 + $0x50] sm:$0xff]
        %v2396 = vld [vmem:[%s7 + $0x58] sm:$0xff]
        %v2397 = vld [vmem:[%s7 + $0x60] sm:$0xff]
        %v2398 = vld [vmem:[%s7 + $0x68] sm:$0xff]
        %v2399 = vld [vmem:[%s7 + $0x70] sm:$0xff]
        %v2400 = vld [vmem:[%s7 + $0x78] sm:$0xff]
        %v2401 = vld [vmem:[%s7 + $0x80] sm:$0xff]
        %v2402 = vld [vmem:[%s7 + $0x88] sm:$0xff]
        %v2403 = vld [vmem:[%s7 + $0x90] sm:$0xff]
        %v2404 = vld [vmem:[%s7 + $0x98] sm:$0xff]
        %v2405 = vld [vmem:[%s7 + $0xa0] sm:$0xff]
        %v2406 = vld [vmem:[%s7 + $0xa8] sm:$0xff]
        %v2407 = vld [vmem:[%s7 + $0xb0] sm:$0xff]
        %v2408 = vld [vmem:[%s7 + $0xb8] sm:$0xff]
        %v2409 = vld [vmem:[%s7 + $0xc0] sm:$0xff]
        %v2410 = vld [vmem:[%s7 + $0xc8] sm:$0xff]
        %v2411 = vld [vmem:[%s7 + $0xd0] sm:$0xff]
        %v2412 = vld [vmem:[%s7 + $0xd8] sm:$0xff]
        %v2413 = vld [vmem:[%s7 + $0xe0] sm:$0xff]
        %v2414 = vld [vmem:[%s7 + $0xe8] sm:$0xff]
        %v2415 = vld [vmem:[%s7 + $0xf0] sm:$0xff]
        %v2416 = vld [vmem:[%s7 + $0xf8] sm:$0xff]
        %v2417 = vld [vmem:[%s7 + $0x100] sm:$0xff]
        %v2418 = vld [vmem:[%s7 + $0x108] sm:$0xff]
        %v2419 = vld [vmem:[%s7 + $0x110] sm:$0xff]
        %v2420 = vld [vmem:[%s7 + $0x118] sm:$0xff]
        %v2421 = vld [vmem:[%s7 + $0x120] sm:$0xff]
        %v2422 = vld [vmem:[%s7 + $0x128] sm:$0xff]
        %v2423 = vld [vmem:[%s7 + $0x130] sm:$0xff]
        %v2424 = vld [vmem:[%s7 + $0x138] sm:$0xff]
        %v2425 = vld [vmem:[%s7 + $0x140] sm:$0xff]
        %v2426 = vld [vmem:[%s7 + $0x148] sm:$0xff]
        %v2427 = vld [vmem:[%s7 + $0x150] sm:$0xff]
        %v2428 = vld [vmem:[%s7 + $0x158] sm:$0xff]
        %v2429 = vld [vmem:[%s7 + $0x160] sm:$0xff]
        %v2430 = vld [vmem:[%s7 + $0x168] sm:$0xff]
        %v2431 = vld [vmem:[%s7 + $0x170] sm:$0xff]
        %v2432 = vld [vmem:[%s7 + $0x178] sm:$0xff]
        %v2433 = vld [vmem:[%s7 + $0x180] sm:$0xff]
        %v2434 = vld [vmem:[%s7 + $0x188] sm:$0xff]
        %v2435 = vld [vmem:[%s7 + $0x190] sm:$0xff]
        %v2436 = vld [vmem:[%s7 + $0x198] sm:$0xff]
        %v2437 = vld [vmem:[%s7 + $0x1a0] sm:$0xff]
        %v2438 = vld [vmem:[%s7 + $0x1a8] sm:$0xff]
        %v2439 = vld [vmem:[%s7 + $0x1b0] sm:$0xff]
        %v2440 = vld [vmem:[%s7 + $0x1b8] sm:$0xff]
        %v2441 = vld [vmem:[%s7 + $0x1c0] sm:$0xff]
        %v2442 = vld [vmem:[%s7 + $0x1c8] sm:$0xff]
        %v2443 = vld [vmem:[%s7 + $0x1d0] sm:$0xff]
        %v2444 = vld [vmem:[%s7 + $0x1d8] sm:$0xff]
        %v2445 = vld [vmem:[%s7 + $0x1e0] sm:$0xff]
        %v2446 = vld [vmem:[%s7 + $0x1e8] sm:$0xff]
        %v2447 = vld [vmem:[%s7 + $0x1f0] sm:$0xff]
        %v2448 = vld [vmem:[%s7 + $0x1f8] sm:$0xff]
        %v2449 = vld [vmem:[%s7 + $0x200] sm:$0xff]
        %v2450 = vld [vmem:[%s7 + $0x208] sm:$0xff]
        %v2451 = vld [vmem:[%s7 + $0x210] sm:$0xff]
        %v2452 = vld [vmem:[%s7 + $0x218] sm:$0xff]
        %v2453 = vld [vmem:[%s7 + $0x220] sm:$0xff]
        %v2454 = vld [vmem:[%s7 + $0x228] sm:$0xff]
        %v2455 = vld [vmem:[%s7 + $0x230] sm:$0xff]
        %v2456 = vld [vmem:[%s7 + $0x238] sm:$0xff]
        %v2457 = vld [vmem:[%s7 + $0x240] sm:$0xff]
        %v2458 = vld [vmem:[%s7 + $0x248] sm:$0xff]
        %v2459 = vld [vmem:[%s7 + $0x250] sm:$0xff]
        %v2460 = vld [vmem:[%s7 + $0x258] sm:$0xff]
        %v2461 = vld [vmem:[%s7 + $0x260] sm:$0xff]
        %v2462 = vld [vmem:[%s7 + $0x268] sm:$0xff]
        %v2463 = vld [vmem:[%s7 + $0x270] sm:$0xff]
        %v2464 = vld [vmem:[%s7 + $0x278] sm:$0xff]
        %v2465 = vld [vmem:[%s7 + $0x280] sm:$0xff]
        %v2466 = vld [vmem:[%s7 + $0x288] sm:$0xff]
        %v2467 = vld [vmem:[%s7 + $0x290] sm:$0xff]
        %v2468 = vld [vmem:[%s7 + $0x298] sm:$0xff]
        %v2469 = vld [vmem:[%s7 + $0x2a0] sm:$0xff]
        %v2470 = vld [vmem:[%s7 + $0x2a8] sm:$0xff]
        %v2471 = vld [vmem:[%s7 + $0x2b0] sm:$0xff]
        %v2472 = vld [vmem:[%s7 + $0x2b8] sm:$0xff]
        %v2473 = vld [vmem:[%s7 + $0x2c0] sm:$0xff]
        %v2474 = vld [vmem:[%s7 + $0x2c8] sm:$0xff]
        %v2475 = vld [vmem:[%s7 + $0x2d0] sm:$0xff]
        %v2476 = vld [vmem:[%s7 + $0x2d8] sm:$0xff]
        %v2477 = vld [vmem:[%s7 + $0x2e0] sm:$0xff]
        %v2478 = vld [vmem:[%s7 + $0x2e8] sm:$0xff]
        %v2479 = vld [vmem:[%s7 + $0x2f0] sm:$0xff]
        %v2480 = vld [vmem:[%s7 + $0x2f8] sm:$0xff]
        %v2481 = vld [vmem:[%s7 + $0x300] sm:$0xff]
        %v2482 = vld [vmem:[%s7 + $0x308] sm:$0xff]
        %v2483 = vld [vmem:[%s7 + $0x310] sm:$0xff]
        %v2484 = vld [vmem:[%s7 + $0x318] sm:$0xff]
        %v2485 = vld [vmem:[%s7 + $0x320] sm:$0xff]
        %v2486 = vld [vmem:[%s7 + $0x328] sm:$0xff]
        %v2487 = vld [vmem:[%s7 + $0x330] sm:$0xff]
        %v2488 = vld [vmem:[%s7 + $0x338] sm:$0xff]
        %v2489 = vld [vmem:[%s7 + $0x340] sm:$0xff]
        %v2490 = vld [vmem:[%s7 + $0x348] sm:$0xff]
        %v2491 = vld [vmem:[%s7 + $0x350] sm:$0xff]
        %v2492 = vld [vmem:[%s7 + $0x358] sm:$0xff]
        %v2493 = vld [vmem:[%s7 + $0x360] sm:$0xff]
        %v2494 = vld [vmem:[%s7 + $0x368] sm:$0xff]
        %v2495 = vld [vmem:[%s7 + $0x370] sm:$0xff]
        %v2496 = vld [vmem:[%s7 + $0x378] sm:$0xff]
        %v2497 = vld [vmem:[%s7 + $0x380] sm:$0xff]
        %v2498 = vld [vmem:[%s7 + $0x388] sm:$0xff]
        %v2499 = vld [vmem:[%s7 + $0x390] sm:$0xff]
        %v2500 = vld [vmem:[%s7 + $0x398] sm:$0xff]
        %v2501 = vld [vmem:[%s7 + $0x3a0] sm:$0xff]
        %v2502 = vld [vmem:[%s7 + $0x3a8] sm:$0xff]
        %v2503 = vld [vmem:[%s7 + $0x3b0] sm:$0xff]
        %v2504 = vld [vmem:[%s7 + $0x3b8] sm:$0xff]
        %v2505 = vld [vmem:[%s7 + $0x3c0] sm:$0xff]
        %v2506 = vld [vmem:[%s7 + $0x3c8] sm:$0xff]
        %v2507 = vld [vmem:[%s7 + $0x3d0] sm:$0xff]
        %v2508 = vld [vmem:[%s7 + $0x3d8] sm:$0xff]
        %v2509 = vld [vmem:[%s7 + $0x3e0] sm:$0xff]
        %v2510 = vld [vmem:[%s7 + $0x3e8] sm:$0xff]
        %v2511 = vld [vmem:[%s7 + $0x3f0] sm:$0xff]
        %v2512 = vld [vmem:[%s7 + $0x3f8] sm:$0xff]
        %v2513 = vld [vmem:[%s7 + $0x400] sm:$0xff]
        %v2514 = vld [vmem:[%s7 + $0x408] sm:$0xff]
        %v2515 = vld [vmem:[%s7 + $0x410] sm:$0xff]
        %v2516 = vld [vmem:[%s7 + $0x418] sm:$0xff]
        %v2517 = vld [vmem:[%s7 + $0x420] sm:$0xff]
        %v2518 = vld [vmem:[%s7 + $0x428] sm:$0xff]
        %v2519 = vld [vmem:[%s7 + $0x430] sm:$0xff]
        %v2520 = vld [vmem:[%s7 + $0x438] sm:$0xff]
        %v2521 = vld [vmem:[%s7 + $0x440] sm:$0xff]
        %v2522 = vld [vmem:[%s7 + $0x448] sm:$0xff]
        %v2523 = vld [vmem:[%s7 + $0x450] sm:$0xff]
        %v2524 = vld [vmem:[%s7 + $0x458] sm:$0xff]
        %v2525 = vld [vmem:[%s7 + $0x460] sm:$0xff]
        %v2526 = vld [vmem:[%s7 + $0x468] sm:$0xff]
        %v2527 = vld [vmem:[%s7 + $0x470] sm:$0xff]
        %v2528 = vld [vmem:[%s7 + $0x478] sm:$0xff]
        %v2529 = vld [vmem:[%s7 + $0x480] sm:$0xff]
        %v2530 = vld [vmem:[%s7 + $0x488] sm:$0xff]
        %v2531 = vld [vmem:[%s7 + $0x490] sm:$0xff]
        %v2532 = vld [vmem:[%s7 + $0x498] sm:$0xff]
        %v2533 = vld [vmem:[%s7 + $0x4a0] sm:$0xff]
        %v2534 = vld [vmem:[%s7 + $0x4a8] sm:$0xff]
        %v2535 = vld [vmem:[%s7 + $0x4b0] sm:$0xff]
        %v2536 = vld [vmem:[%s7 + $0x4b8] sm:$0xff]
        %v2537 = vld [vmem:[%s7 + $0x4c0] sm:$0xff]
        %v2538 = vld [vmem:[%s7 + $0x4c8] sm:$0xff]
        %v2539 = vld [vmem:[%s7 + $0x4d0] sm:$0xff]
        %v2540 = vld [vmem:[%s7 + $0x4d8] sm:$0xff]
        %v2541 = vld [vmem:[%s7 + $0x4e0] sm:$0xff]
        %v2542 = vld [vmem:[%s7 + $0x4e8] sm:$0xff]
        %v2543 = vld [vmem:[%s7 + $0x4f0] sm:$0xff]
        %v2544 = vld [vmem:[%s7 + $0x4f8] sm:$0xff]
        %v2547 = vlaneseq
        %v2548 = vshrl.u32 %v2547, 7
        %v2549 = vsub.s32 0, %v2548
        %v2550 = vrot.slane %v2383, %v2549
        %v2551 = vlaneseq
        %v2552 = vshrl.u32 %v2551, 7
        %v2553 = vsub.s32 1, %v2552
        %v2554 = vrot.slane %v2383, %v2553
        %v2555 = vlaneseq
        %v2556 = vshrl.u32 %v2555, 7
        %v2557 = vsub.s32 2, %v2556
        %v2558 = vrot.slane %v2383, %v2557
        %v2559 = vlaneseq
        %v2560 = vshrl.u32 %v2559, 7
        %v2561 = vsub.s32 3, %v2560
        %v2562 = vrot.slane %v2383, %v2561
        %v2563 = vlaneseq
        %v2564 = vshrl.u32 %v2563, 7
        %v2565 = vsub.s32 4, %v2564
        %v2566 = vrot.slane %v2383, %v2565
        %v2567 = vlaneseq
        %v2568 = vshrl.u32 %v2567, 7
        %v2569 = vsub.s32 5, %v2568
        %v2570 = vrot.slane %v2383, %v2569
        %v2571 = vlaneseq
        %v2572 = vshrl.u32 %v2571, 7
        %v2573 = vsub.s32 6, %v2572
        %v2574 = vrot.slane %v2383, %v2573
        %v2575 = vlaneseq
        %v2576 = vshrl.u32 %v2575, 7
        %v2577 = vsub.s32 7, %v2576
        %v2578 = vrot.slane %v2383, %v2577
        %v2579 = vlaneseq
        %v2580 = vshrl.u32 %v2579, 7
        %v2581 = vsub.s32 0, %v2580
        %v2582 = vrot.slane %v2384, %v2581
        %v2583 = vlaneseq
        %v2584 = vshrl.u32 %v2583, 7
        %v2585 = vsub.s32 1, %v2584
        %v2586 = vrot.slane %v2384, %v2585
        %2597 = vmatprep.subr.mxu0 0.0
        %2598 = vmatpush1.msra.mxu0 %v2385
        %2599 = vmatprep.subr.mxu0 0.0
        %2600 = vmatpush1.msra.mxu0 %v2386
        %2601 = vmatprep.subr.mxu0 0.0
        %2602 = vmatpush1.msra.mxu0 %v2387
        %2603 = vmatprep.subr.mxu0 0.0
        %2604 = vmatpush1.msra.mxu0 %v2388
        %2605 = vmatprep.subr.mxu0 0.0
        %2606 = vmatpush1.msra.mxu0 %v2389
        %2607 = vmatprep.subr.mxu0 0.0
        %2608 = vmatpush1.msra.mxu0 %v2390
        %2609 = vmatprep.subr.mxu0 0.0
        %2610 = vmatpush1.msra.mxu0 %v2391
        %2611 = vmatprep.subr.mxu0 0.0
        %2612 = vmatpush1.msra.mxu0 %v2392
        %2613 = vmatprep.subr.mxu0 0.0
        %2614 = vmatpush1.msra.mxu0 %v2393
        %2615 = vmatprep.subr.mxu0 0.0
        %2616 = vmatpush1.msra.mxu0 %v2394
        %2617 = vmatprep.subr.mxu0 0.0
        %2618 = vmatpush1.msra.mxu0 %v2395
        %2619 = vmatprep.subr.mxu0 0.0
        %2620 = vmatpush1.msra.mxu0 %v2396
        %2621 = vmatprep.subr.mxu0 0.0
        %2622 = vmatpush1.msra.mxu0 %v2397
        %2623 = vmatprep.subr.mxu0 0.0
        %2624 = vmatpush1.msra.mxu0 %v2398
        %2625 = vmatprep.subr.mxu0 0.0
        %2626 = vmatpush1.msra.mxu0 %v2399
        %2627 = vmatprep.subr.mxu0 0.0
        %2628 = vmatpush1.msra.mxu0 %v2400
        %2629 = vmatprep.subr.mxu0 0.0
        %2630 = vmatpush1.msra.mxu0 %v2401
        %2631 = vmatprep.subr.mxu0 0.0
        %2632 = vmatpush1.msra.mxu0 %v2402
        %2633 = vmatprep.subr.mxu0 0.0
        %2634 = vmatpush1.msra.mxu0 %v2403
        %2635 = vmatprep.subr.mxu0 0.0
        %2636 = vmatpush1.msra.mxu0 %v2404
        %2637 = vmatprep.subr.mxu0 0.0
        %2638 = vmatpush1.msra.mxu0 %v2405
        %2639 = vmatprep.subr.mxu0 0.0
        %2640 = vmatpush1.msra.mxu0 %v2406
        %2641 = vmatprep.subr.mxu0 0.0
        %2642 = vmatpush1.msra.mxu0 %v2407
        %2643 = vmatprep.subr.mxu0 0.0
        %2644 = vmatpush1.msra.mxu0 %v2408
        %2645 = vmatprep.subr.mxu0 0.0
        %2646 = vmatpush1.msra.mxu0 %v2409
        %2647 = vmatprep.subr.mxu0 0.0
        %2648 = vmatpush1.msra.mxu0 %v2410
        %2649 = vmatprep.subr.mxu0 0.0
        %2650 = vmatpush1.msra.mxu0 %v2411
        %2651 = vmatprep.subr.mxu0 0.0
        %2652 = vmatpush1.msra.mxu0 %v2412
        %2653 = vmatprep.subr.mxu0 0.0
        %2654 = vmatpush1.msra.mxu0 %v2413
        %2655 = vmatprep.subr.mxu0 0.0
        %2656 = vmatpush1.msra.mxu0 %v2414
        %2657 = vmatprep.subr.mxu0 0.0
        %2658 = vmatpush1.msra.mxu0 %v2415
        %2659 = vmatprep.subr.mxu0 0.0
        %2660 = vmatpush1.msra.mxu0 %v2416
        %2661 = vmatprep.mubr.f32.mxu0 %v2554
        %2662 = vmatmul.mubr.f32.gmra.mrb[0].mxu0 %v2550
        %v2663 = vpop.f32.mrb[0].mxu0
        %v2664 = vadd.f32 0.0, %v2663
        %v2665 = vpop.f32.mrb[0].mxu0
        %2666 = vdwg.mxu0
        %2667 = vmatprep.subr.mxu0 0.0
        %2668 = vmatpush1.msra.mxu0 %v2417
        %2669 = vmatprep.subr.mxu0 0.0
        %2670 = vmatpush1.msra.mxu0 %v2418
        %2671 = vmatprep.subr.mxu0 0.0
        %2672 = vmatpush1.msra.mxu0 %v2419
        %2673 = vmatprep.subr.mxu0 0.0
        %2674 = vmatpush1.msra.mxu0 %v2420
        %2675 = vmatprep.subr.mxu0 0.0
        %2676 = vmatpush1.msra.mxu0 %v2421
        %2677 = vmatprep.subr.mxu0 0.0
        %2678 = vmatpush1.msra.mxu0 %v2422
        %2679 = vmatprep.subr.mxu0 0.0
        %2680 = vmatpush1.msra.mxu0 %v2423
        %2681 = vmatprep.subr.mxu0 0.0
        %2682 = vmatpush1.msra.mxu0 %v2424
        %2683 = vmatprep.subr.mxu0 0.0
        %2684 = vmatpush1.msra.mxu0 %v2425
        %2685 = vmatprep.subr.mxu0 0.0
        %2686 = vmatpush1.msra.mxu0 %v2426
        %2687 = vmatprep.subr.mxu0 0.0
        %2688 = vmatpush1.msra.mxu0 %v2427
        %2689 = vmatprep.subr.mxu0 0.0
        %2690 = vmatpush1.msra.mxu0 %v2428
        %2691 = vmatprep.subr.mxu0 0.0
        %2692 = vmatpush1.msra.mxu0 %v2429
        %2693 = vmatprep.subr.mxu0 0.0
        %2694 = vmatpush1.msra.mxu0 %v2430
        %2695 = vmatprep.subr.mxu0 0.0
        %2696 = vmatpush1.msra.mxu0 %v2431
        %2697 = vmatprep.subr.mxu0 0.0
        %2698 = vmatpush1.msra.mxu0 %v2432
        %2699 = vmatprep.subr.mxu0 0.0
        %2700 = vmatpush1.msra.mxu0 %v2433
        %2701 = vmatprep.subr.mxu0 0.0
        %2702 = vmatpush1.msra.mxu0 %v2434
        %2703 = vmatprep.subr.mxu0 0.0
        %2704 = vmatpush1.msra.mxu0 %v2435
        %2705 = vmatprep.subr.mxu0 0.0
        %2706 = vmatpush1.msra.mxu0 %v2436
        %2707 = vmatprep.subr.mxu0 0.0
        %2708 = vmatpush1.msra.mxu0 %v2437
        %2709 = vmatprep.subr.mxu0 0.0
        %2710 = vmatpush1.msra.mxu0 %v2438
        %2711 = vmatprep.subr.mxu0 0.0
        %2712 = vmatpush1.msra.mxu0 %v2439
        %2713 = vmatprep.subr.mxu0 0.0
        %2714 = vmatpush1.msra.mxu0 %v2440
        %2715 = vmatprep.subr.mxu0 0.0
        %2716 = vmatpush1.msra.mxu0 %v2441
        %2717 = vmatprep.subr.mxu0 0.0
        %2718 = vmatpush1.msra.mxu0 %v2442
        %2719 = vmatprep.subr.mxu0 0.0
        %2720 = vmatpush1.msra.mxu0 %v2443
        %2721 = vmatprep.subr.mxu0 0.0
        %2722 = vmatpush1.msra.mxu0 %v2444
        %2723 = vmatprep.subr.mxu0 0.0
        %2724 = vmatpush1.msra.mxu0 %v2445
        %2725 = vmatprep.subr.mxu0 0.0
        %2726 = vmatpush1.msra.mxu0 %v2446
        %2727 = vmatprep.subr.mxu0 0.0
        %2728 = vmatpush1.msra.mxu0 %v2447
        %2729 = vmatprep.subr.mxu0 0.0
        %2730 = vmatpush1.msra.mxu0 %v2448
        %2731 = vmatprep.mubr.f32.mxu0 %v2562
        %2732 = vmatmul.mubr.f32.gmra.mrb[0].mxu0 %v2558
        %v2733 = vpop.f32.mrb[0].mxu0
        %v2734 = vadd.f32 %v2664, %v2733
        %v2735 = vpop.f32.mrb[0].mxu0
        %2736 = vdwg.mxu0
        %2737 = vmatprep.subr.mxu0 0.0
        %2738 = vmatpush1.msra.mxu0 %v2449
        %2739 = vmatprep.subr.mxu0 0.0
        %2740 = vmatpush1.msra.mxu0 %v2450
        %2741 = vmatprep.subr.mxu0 0.0
        %2742 = vmatpush1.msra.mxu0 %v2451
        %2743 = vmatprep.subr.mxu0 0.0
        %2744 = vmatpush1.msra.mxu0 %v2452
        %2745 = vmatprep.subr.mxu0 0.0
        %2746 = vmatpush1.msra.mxu0 %v2453
        %2747 = vmatprep.subr.mxu0 0.0
        %2748 = vmatpush1.msra.mxu0 %v2454
        %2749 = vmatprep.subr.mxu0 0.0
        %2750 = vmatpush1.msra.mxu0 %v2455
        %2751 = vmatprep.subr.mxu0 0.0
        %2752 = vmatpush1.msra.mxu0 %v2456
        %2753 = vmatprep.subr.mxu0 0.0
        %2754 = vmatpush1.msra.mxu0 %v2457
        %2755 = vmatprep.subr.mxu0 0.0
        %2756 = vmatpush1.msra.mxu0 %v2458
        %2757 = vmatprep.subr.mxu0 0.0
        %2758 = vmatpush1.msra.mxu0 %v2459
        %2759 = vmatprep.subr.mxu0 0.0
        %2760 = vmatpush1.msra.mxu0 %v2460
        %2761 = vmatprep.subr.mxu0 0.0
        %2762 = vmatpush1.msra.mxu0 %v2461
        %2763 = vmatprep.subr.mxu0 0.0
        %2764 = vmatpush1.msra.mxu0 %v2462
        %2765 = vmatprep.subr.mxu0 0.0
        %2766 = vmatpush1.msra.mxu0 %v2463
        %2767 = vmatprep.subr.mxu0 0.0
        %2768 = vmatpush1.msra.mxu0 %v2464
        %2769 = vmatprep.subr.mxu0 0.0
        %2770 = vmatpush1.msra.mxu0 %v2465
        %2771 = vmatprep.subr.mxu0 0.0
        %2772 = vmatpush1.msra.mxu0 %v2466
        %2773 = vmatprep.subr.mxu0 0.0
        %2774 = vmatpush1.msra.mxu0 %v2467
        %2775 = vmatprep.subr.mxu0 0.0
        %2776 = vmatpush1.msra.mxu0 %v2468
        %2777 = vmatprep.subr.mxu0 0.0
        %2778 = vmatpush1.msra.mxu0 %v2469
        %2779 = vmatprep.subr.mxu0 0.0
        %2780 = vmatpush1.msra.mxu0 %v2470
        %2781 = vmatprep.subr.mxu0 0.0
        %2782 = vmatpush1.msra.mxu0 %v2471
        %2783 = vmatprep.subr.mxu0 0.0
        %2784 = vmatpush1.msra.mxu0 %v2472
        %2785 = vmatprep.subr.mxu0 0.0
        %2786 = vmatpush1.msra.mxu0 %v2473
        %2787 = vmatprep.subr.mxu0 0.0
        %2788 = vmatpush1.msra.mxu0 %v2474
        %2789 = vmatprep.subr.mxu0 0.0
        %2790 = vmatpush1.msra.mxu0 %v2475
        %2791 = vmatprep.subr.mxu0 0.0
        %2792 = vmatpush1.msra.mxu0 %v2476
        %2793 = vmatprep.subr.mxu0 0.0
        %2794 = vmatpush1.msra.mxu0 %v2477
        %2795 = vmatprep.subr.mxu0 0.0
        %2796 = vmatpush1.msra.mxu0 %v2478
        %2797 = vmatprep.subr.mxu0 0.0
        %2798 = vmatpush1.msra.mxu0 %v2479
        %2799 = vmatprep.subr.mxu0 0.0
        %2800 = vmatpush1.msra.mxu0 %v2480
        %2801 = vmatprep.mubr.f32.mxu0 %v2570
        %2802 = vmatmul.mubr.f32.gmra.mrb[0].mxu0 %v2566
        %v2803 = vpop.f32.mrb[0].mxu0
        %v2804 = vadd.f32 %v2734, %v2803
        %v2805 = vpop.f32.mrb[0].mxu0
        %2806 = vdwg.mxu0
        %2807 = vmatprep.subr.mxu0 0.0
        %2808 = vmatpush1.msra.mxu0 %v2481
        %2809 = vmatprep.subr.mxu0 0.0
        %2810 = vmatpush1.msra.mxu0 %v2482
        %2811 = vmatprep.subr.mxu0 0.0
        %2812 = vmatpush1.msra.mxu0 %v2483
        %2813 = vmatprep.subr.mxu0 0.0
        %2814 = vmatpush1.msra.mxu0 %v2484
        %2815 = vmatprep.subr.mxu0 0.0
        %2816 = vmatpush1.msra.mxu0 %v2485
        %2817 = vmatprep.subr.mxu0 0.0
        %2818 = vmatpush1.msra.mxu0 %v2486
        %2819 = vmatprep.subr.mxu0 0.0
        %2820 = vmatpush1.msra.mxu0 %v2487
        %2821 = vmatprep.subr.mxu0 0.0
        %2822 = vmatpush1.msra.mxu0 %v2488
        %2823 = vmatprep.subr.mxu0 0.0
        %2824 = vmatpush1.msra.mxu0 %v2489
        %2825 = vmatprep.subr.mxu0 0.0
        %2826 = vmatpush1.msra.mxu0 %v2490
        %2827 = vmatprep.subr.mxu0 0.0
        %2828 = vmatpush1.msra.mxu0 %v2491
        %2829 = vmatprep.subr.mxu0 0.0
        %2830 = vmatpush1.msra.mxu0 %v2492
        %2831 = vmatprep.subr.mxu0 0.0
        %2832 = vmatpush1.msra.mxu0 %v2493
        %2833 = vmatprep.subr.mxu0 0.0
        %2834 = vmatpush1.msra.mxu0 %v2494
        %2835 = vmatprep.subr.mxu0 0.0
        %2836 = vmatpush1.msra.mxu0 %v2495
        %2837 = vmatprep.subr.mxu0 0.0
        %2838 = vmatpush1.msra.mxu0 %v2496
        %2839 = vmatprep.subr.mxu0 0.0
        %2840 = vmatpush1.msra.mxu0 %v2497
        %2841 = vmatprep.subr.mxu0 0.0
        %2842 = vmatpush1.msra.mxu0 %v2498
        %2843 = vmatprep.subr.mxu0 0.0
        %2844 = vmatpush1.msra.mxu0 %v2499
        %2845 = vmatprep.subr.mxu0 0.0
        %2846 = vmatpush1.msra.mxu0 %v2500
        %2847 = vmatprep.subr.mxu0 0.0
        %2848 = vmatpush1.msra.mxu0 %v2501
        %2849 = vmatprep.subr.mxu0 0.0
        %2850 = vmatpush1.msra.mxu0 %v2502
        %2851 = vmatprep.subr.mxu0 0.0
        %2852 = vmatpush1.msra.mxu0 %v2503
        %2853 = vmatprep.subr.mxu0 0.0
        %2854 = vmatpush1.msra.mxu0 %v2504
        %2855 = vmatprep.subr.mxu0 0.0
        %2856 = vmatpush1.msra.mxu0 %v2505
        %2857 = vmatprep.subr.mxu0 0.0
        %2858 = vmatpush1.msra.mxu0 %v2506
        %2859 = vmatprep.subr.mxu0 0.0
        %2860 = vmatpush1.msra.mxu0 %v2507
        %2861 = vmatprep.subr.mxu0 0.0
        %2862 = vmatpush1.msra.mxu0 %v2508
        %2863 = vmatprep.subr.mxu0 0.0
        %2864 = vmatpush1.msra.mxu0 %v2509
        %2865 = vmatprep.subr.mxu0 0.0
        %2866 = vmatpush1.msra.mxu0 %v2510
        %2867 = vmatprep.subr.mxu0 0.0
        %2868 = vmatpush1.msra.mxu0 %v2511
        %2869 = vmatprep.subr.mxu0 0.0
        %2870 = vmatpush1.msra.mxu0 %v2512
        %2871 = vmatprep.mubr.f32.mxu0 %v2578
        %2872 = vmatmul.mubr.f32.gmra.mrb[0].mxu0 %v2574
        %v2873 = vpop.f32.mrb[0].mxu0
        %v2874 = vadd.f32 %v2804, %v2873
        %v2875 = vpop.f32.mrb[0].mxu0
        %2876 = vdwg.mxu0
        %2877 = vmatprep.subr.mxu0 0.0
        %2878 = vmatpush1.msra.mxu0 %v2513
        %2879 = vmatprep.subr.mxu0 0.0
        %2880 = vmatpush1.msra.mxu0 %v2514
        %2881 = vmatprep.subr.mxu0 0.0
        %2882 = vmatpush1.msra.mxu0 %v2515
        %2883 = vmatprep.subr.mxu0 0.0
        %2884 = vmatpush1.msra.mxu0 %v2516
        %2885 = vmatprep.subr.mxu0 0.0
        %2886 = vmatpush1.msra.mxu0 %v2517
        %2887 = vmatprep.subr.mxu0 0.0
        %2888 = vmatpush1.msra.mxu0 %v2518
        %2889 = vmatprep.subr.mxu0 0.0
        %2890 = vmatpush1.msra.mxu0 %v2519
        %2891 = vmatprep.subr.mxu0 0.0
        %2892 = vmatpush1.msra.mxu0 %v2520
        %2893 = vmatprep.subr.mxu0 0.0
        %2894 = vmatpush1.msra.mxu0 %v2521
        %2895 = vmatprep.subr.mxu0 0.0
        %2896 = vmatpush1.msra.mxu0 %v2522
        %2897 = vmatprep.subr.mxu0 0.0
        %2898 = vmatpush1.msra.mxu0 %v2523
        %2899 = vmatprep.subr.mxu0 0.0
        %2900 = vmatpush1.msra.mxu0 %v2524
        %2901 = vmatprep.subr.mxu0 0.0
        %2902 = vmatpush1.msra.mxu0 %v2525
        %2903 = vmatprep.subr.mxu0 0.0
        %2904 = vmatpush1.msra.mxu0 %v2526
        %2905 = vmatprep.subr.mxu0 0.0
        %2906 = vmatpush1.msra.mxu0 %v2527
        %2907 = vmatprep.subr.mxu0 0.0
        %2908 = vmatpush1.msra.mxu0 %v2528
        %2909 = vmatprep.subr.mxu0 0.0
        %2910 = vmatpush1.msra.mxu0 %v2529
        %2911 = vmatprep.subr.mxu0 0.0
        %2912 = vmatpush1.msra.mxu0 %v2530
        %2913 = vmatprep.subr.mxu0 0.0
        %2914 = vmatpush1.msra.mxu0 %v2531
        %2915 = vmatprep.subr.mxu0 0.0
        %2916 = vmatpush1.msra.mxu0 %v2532
        %2917 = vmatprep.subr.mxu0 0.0
        %2918 = vmatpush1.msra.mxu0 %v2533
        %2919 = vmatprep.subr.mxu0 0.0
        %2920 = vmatpush1.msra.mxu0 %v2534
        %2921 = vmatprep.subr.mxu0 0.0
        %2922 = vmatpush1.msra.mxu0 %v2535
        %2923 = vmatprep.subr.mxu0 0.0
        %2924 = vmatpush1.msra.mxu0 %v2536
        %2925 = vmatprep.subr.mxu0 0.0
        %2926 = vmatpush1.msra.mxu0 %v2537
        %2927 = vmatprep.subr.mxu0 0.0
        %2928 = vmatpush1.msra.mxu0 %v2538
        %2929 = vmatprep.subr.mxu0 0.0
        %2930 = vmatpush1.msra.mxu0 %v2539
        %2931 = vmatprep.subr.mxu0 0.0
        %2932 = vmatpush1.msra.mxu0 %v2540
        %2933 = vmatprep.subr.mxu0 0.0
        %2934 = vmatpush1.msra.mxu0 %v2541
        %2935 = vmatprep.subr.mxu0 0.0
        %2936 = vmatpush1.msra.mxu0 %v2542
        %2937 = vmatprep.subr.mxu0 0.0
        %2938 = vmatpush1.msra.mxu0 %v2543
        %2939 = vmatprep.subr.mxu0 0.0
        %2940 = vmatpush1.msra.mxu0 %v2544
        %2941 = vmatprep.mubr.f32.mxu0 %v2586
        %2942 = vmatmul.mubr.f32.gmra.mrb[0].mxu0 %v2582
        %v2943 = vpop.f32.mrb[0].mxu0
        %v2944 = vadd.f32 %v2874, %v2943
        %v2945 = vpop.f32.mrb[0].mxu0
        %2946 = vdwg.mxu0
        %v2947 = vmax.f32 %v2944, 0.0
        %v2948 = vld [vmem:[%s8] sm:$0xff]
        %v2949 = vld [vmem:[%s8 + $0x8] sm:$0xff]
        %v2950 = vld [vmem:[%s8 + $0x10] sm:$0xff]
        %v2951 = vld [vmem:[%s8 + $0x18] sm:$0xff]
        %v2952 = vld [vmem:[%s8 + $0x20] sm:$0xff]
        %v2953 = vld [vmem:[%s8 + $0x28] sm:$0xff]
        %v2954 = vld [vmem:[%s8 + $0x30] sm:$0xff]
        %v2955 = vld [vmem:[%s8 + $0x38] sm:$0xff]
        %v2956 = vld [vmem:[%s8 + $0x40] sm:$0xff]
        %v2957 = vld [vmem:[%s8 + $0x48] sm:$0xff]
        %v2958 = vld [vmem:[%s8 + $0x50] sm:$0xff]
        %v2959 = vld [vmem:[%s8 + $0x58] sm:$0xff]
        %v2960 = vld [vmem:[%s8 + $0x60] sm:$0xff]
        %v2961 = vld [vmem:[%s8 + $0x68] sm:$0xff]
        %v2962 = vld [vmem:[%s8 + $0x70] sm:$0xff]
        %v2963 = vld [vmem:[%s8 + $0x78] sm:$0xff]
        %v2964 = vld [vmem:[%s8 + $0x80] sm:$0xff]
        %v2965 = vld [vmem:[%s8 + $0x88] sm:$0xff]
        %v2966 = vld [vmem:[%s8 + $0x90] sm:$0xff]
        %v2967 = vld [vmem:[%s8 + $0x98] sm:$0xff]
        %v2968 = vld [vmem:[%s8 + $0xa0] sm:$0xff]
        %v2969 = vld [vmem:[%s8 + $0xa8] sm:$0xff]
        %v2970 = vld [vmem:[%s8 + $0xb0] sm:$0xff]
        %v2971 = vld [vmem:[%s8 + $0xb8] sm:$0xff]
        %v2972 = vld [vmem:[%s8 + $0xc0] sm:$0xff]
        %v2973 = vld [vmem:[%s8 + $0xc8] sm:$0xff]
        %v2974 = vld [vmem:[%s8 + $0xd0] sm:$0xff]
        %v2975 = vld [vmem:[%s8 + $0xd8] sm:$0xff]
        %v2976 = vld [vmem:[%s8 + $0xe0] sm:$0xff]
        %v2977 = vld [vmem:[%s8 + $0xe8] sm:$0xff]
        %v2978 = vld [vmem:[%s8 + $0xf0] sm:$0xff]
        %v2979 = vld [vmem:[%s8 + $0xf8] sm:$0xff]
        %v2980 = vld [vmem:[%s8 + $0x100] sm:$0xff]
        %v2981 = vld [vmem:[%s8 + $0x108] sm:$0xff]
        %v2982 = vld [vmem:[%s8 + $0x110] sm:$0xff]
        %v2983 = vld [vmem:[%s8 + $0x118] sm:$0xff]
        %v2984 = vld [vmem:[%s8 + $0x120] sm:$0xff]
        %v2985 = vld [vmem:[%s8 + $0x128] sm:$0xff]
        %v2986 = vld [vmem:[%s8 + $0x130] sm:$0xff]
        %v2987 = vld [vmem:[%s8 + $0x138] sm:$0xff]
        %v2988 = vld [vmem:[%s8 + $0x140] sm:$0xff]
        %v2989 = vld [vmem:[%s8 + $0x148] sm:$0xff]
        %v2990 = vld [vmem:[%s8 + $0x150] sm:$0xff]
        %v2991 = vld [vmem:[%s8 + $0x158] sm:$0xff]
        %v2992 = vld [vmem:[%s8 + $0x160] sm:$0xff]
        %v2993 = vld [vmem:[%s8 + $0x168] sm:$0xff]
        %v2994 = vld [vmem:[%s8 + $0x170] sm:$0xff]
        %v2995 = vld [vmem:[%s8 + $0x178] sm:$0xff]
        %v2996 = vld [vmem:[%s8 + $0x180] sm:$0xff]
        %v2997 = vld [vmem:[%s8 + $0x188] sm:$0xff]
        %v2998 = vld [vmem:[%s8 + $0x190] sm:$0xff]
        %v2999 = vld [vmem:[%s8 + $0x198] sm:$0xff]
        %v3000 = vld [vmem:[%s8 + $0x1a0] sm:$0xff]
        %v3001 = vld [vmem:[%s8 + $0x1a8] sm:$0xff]
        %v3002 = vld [vmem:[%s8 + $0x1b0] sm:$0xff]
        %v3003 = vld [vmem:[%s8 + $0x1b8] sm:$0xff]
        %v3004 = vld [vmem:[%s8 + $0x1c0] sm:$0xff]
        %v3005 = vld [vmem:[%s8 + $0x1c8] sm:$0xff]
        %v3006 = vld [vmem:[%s8 + $0x1d0] sm:$0xff]
        %v3007 = vld [vmem:[%s8 + $0x1d8] sm:$0xff]
        %v3008 = vld [vmem:[%s8 + $0x1e0] sm:$0xff]
        %v3009 = vld [vmem:[%s8 + $0x1e8] sm:$0xff]
        %v3010 = vld [vmem:[%s8 + $0x1f0] sm:$0xff]
        %v3011 = vld [vmem:[%s8 + $0x1f8] sm:$0xff]
        %v3012 = vld [vmem:[%s8 + $0x200] sm:$0xff]
        %v3013 = vld [vmem:[%s8 + $0x208] sm:$0xff]
        %v3014 = vld [vmem:[%s8 + $0x210] sm:$0xff]
        %v3015 = vld [vmem:[%s8 + $0x218] sm:$0xff]
        %v3016 = vld [vmem:[%s8 + $0x220] sm:$0xff]
        %v3017 = vld [vmem:[%s8 + $0x228] sm:$0xff]
        %v3018 = vld [vmem:[%s8 + $0x230] sm:$0xff]
        %v3019 = vld [vmem:[%s8 + $0x238] sm:$0xff]
        %v3020 = vld [vmem:[%s8 + $0x240] sm:$0xff]
        %v3021 = vld [vmem:[%s8 + $0x248] sm:$0xff]
        %v3022 = vld [vmem:[%s8 + $0x250] sm:$0xff]
        %v3023 = vld [vmem:[%s8 + $0x258] sm:$0xff]
        %v3024 = vld [vmem:[%s8 + $0x260] sm:$0xff]
        %v3025 = vld [vmem:[%s8 + $0x268] sm:$0xff]
        %v3026 = vld [vmem:[%s8 + $0x270] sm:$0xff]
        %v3027 = vld [vmem:[%s8 + $0x278] sm:$0xff]
        %v3028 = vld [vmem:[%s8 + $0x280] sm:$0xff]
        %v3029 = vld [vmem:[%s8 + $0x288] sm:$0xff]
        %v3030 = vld [vmem:[%s8 + $0x290] sm:$0xff]
        %v3031 = vld [vmem:[%s8 + $0x298] sm:$0xff]
        %v3032 = vld [vmem:[%s8 + $0x2a0] sm:$0xff]
        %v3033 = vld [vmem:[%s8 + $0x2a8] sm:$0xff]
        %v3034 = vld [vmem:[%s8 + $0x2b0] sm:$0xff]
        %v3035 = vld [vmem:[%s8 + $0x2b8] sm:$0xff]
        %v3036 = vld [vmem:[%s8 + $0x2c0] sm:$0xff]
        %v3037 = vld [vmem:[%s8 + $0x2c8] sm:$0xff]
        %v3038 = vld [vmem:[%s8 + $0x2d0] sm:$0xff]
        %v3039 = vld [vmem:[%s8 + $0x2d8] sm:$0xff]
        %v3040 = vld [vmem:[%s8 + $0x2e0] sm:$0xff]
        %v3041 = vld [vmem:[%s8 + $0x2e8] sm:$0xff]
        %v3042 = vld [vmem:[%s8 + $0x2f0] sm:$0xff]
        %v3043 = vld [vmem:[%s8 + $0x2f8] sm:$0xff]
        %v3044 = vld [vmem:[%s8 + $0x300] sm:$0xff]
        %v3045 = vld [vmem:[%s8 + $0x308] sm:$0xff]
        %v3046 = vld [vmem:[%s8 + $0x310] sm:$0xff]
        %v3047 = vld [vmem:[%s8 + $0x318] sm:$0xff]
        %vm3048 = vcmask 654336
        %v3050 = vsel %vm3048, %v2947, 0
        %3052 = vmatprep.subr.mxu0 %v2949
        %3053 = vmatpush1.msra.mxu0 %v2948
        %3054 = vmatprep.subr.mxu0 %v2959
        %3055 = vmatpush1.msra.mxu0 %v2958
        %3056 = vmatprep.subr.mxu0 %v2969
        %3057 = vmatpush1.msra.mxu0 %v2968
        %3058 = vmatprep.subr.mxu0 %v2979
        %3059 = vmatpush1.msra.mxu0 %v2978
        %3060 = vmatprep.subr.mxu0 %v2989
        %3061 = vmatpush1.msra.mxu0 %v2988
        %3062 = vmatprep.subr.mxu0 %v2999
        %3063 = vmatpush1.msra.mxu0 %v2998
        %3064 = vmatprep.subr.mxu0 %v3009
        %3065 = vmatpush1.msra.mxu0 %v3008
        %3066 = vmatprep.subr.mxu0 %v3019
        %3067 = vmatpush1.msra.mxu0 %v3018
        %3068 = vmatprep.subr.mxu0 %v3029
        %3069 = vmatpush1.msra.mxu0 %v3028
        %3070 = vmatprep.subr.mxu0 %v3039
        %3071 = vmatpush1.msra.mxu0 %v3038
        %3072 = vmatprep.subr.mxu0 0.0
        %3073 = vmatpush1.msra.mxu0 0.0
        %3074 = vmatprep.subr.mxu0 0.0
        %3075 = vmatpush1.msra.mxu0 0.0
        %3076 = vmatprep.subr.mxu0 0.0
        %3077 = vmatpush1.msra.mxu0 0.0
        %3078 = vmatprep.subr.mxu0 0.0
        %3079 = vmatpush1.msra.mxu0 0.0
        %3080 = vmatprep.subr.mxu0 0.0
        %3081 = vmatpush1.msra.mxu0 0.0
        %3082 = vmatprep.subr.mxu0 0.0
        %3083 = vmatpush1.msra.mxu0 0.0
        %3084 = vmatprep.subr.mxu0 0.0
        %3085 = vmatpush1.msra.mxu0 0.0
        %3086 = vmatprep.subr.mxu0 0.0
        %3087 = vmatpush1.msra.mxu0 0.0
        %3088 = vmatprep.subr.mxu0 0.0
        %3089 = vmatpush1.msra.mxu0 0.0
        %3090 = vmatprep.subr.mxu0 0.0
        %3091 = vmatpush1.msra.mxu0 0.0
        %3092 = vmatprep.subr.mxu0 0.0
        %3093 = vmatpush1.msra.mxu0 0.0
        %3094 = vmatprep.subr.mxu0 0.0
        %3095 = vmatpush1.msra.mxu0 0.0
        %3096 = vmatprep.subr.mxu0 0.0
        %3097 = vmatpush1.msra.mxu0 0.0
        %3098 = vmatprep.subr.mxu0 0.0
        %3099 = vmatpush1.msra.mxu0 0.0
        %3100 = vmatprep.subr.mxu0 0.0
        %3101 = vmatpush1.msra.mxu0 0.0
        %3102 = vmatprep.subr.mxu0 0.0
        %3103 = vmatpush1.msra.mxu0 0.0
        %3104 = vmatprep.subr.mxu0 0.0
        %3105 = vmatpush1.msra.mxu0 0.0
        %3106 = vmatprep.subr.mxu0 0.0
        %3107 = vmatpush1.msra.mxu0 0.0
        %3108 = vmatprep.subr.mxu0 0.0
        %3109 = vmatpush1.msra.mxu0 0.0
        %3110 = vmatprep.subr.mxu0 0.0
        %3111 = vmatpush1.msra.mxu0 0.0
        %3112 = vmatprep.subr.mxu0 0.0
        %3113 = vmatpush1.msra.mxu0 0.0
        %3114 = vmatprep.subr.mxu0 0.0
        %3115 = vmatpush1.msra.mxu0 0.0
        %3116 = vmatprep.mubr.f32.mxu0 0.0
        %3117 = vmatmul.mubr.f32.gmra.mrb[0].mxu0 %v3050
        %v3118 = vpop.f32.mrb[0].mxu0
        %v3119 = vadd.f32 0.0, %v3118
        %v3120 = vpop.f32.mrb[0].mxu0
        %v3121 = vadd.f32 0.0, %v3120
        %3122 = vdwg.mxu0
        %3123 = vmatprep.subr.mxu0 %v2951
        %3124 = vmatpush1.msra.mxu0 %v2950
        %3125 = vmatprep.subr.mxu0 %v2961
        %3126 = vmatpush1.msra.mxu0 %v2960
        %3127 = vmatprep.subr.mxu0 %v2971
        %3128 = vmatpush1.msra.mxu0 %v2970
        %3129 = vmatprep.subr.mxu0 %v2981
        %3130 = vmatpush1.msra.mxu0 %v2980
        %3131 = vmatprep.subr.mxu0 %v2991
        %3132 = vmatpush1.msra.mxu0 %v2990
        %3133 = vmatprep.subr.mxu0 %v3001
        %3134 = vmatpush1.msra.mxu0 %v3000
        %3135 = vmatprep.subr.mxu0 %v3011
        %3136 = vmatpush1.msra.mxu0 %v3010
        %3137 = vmatprep.subr.mxu0 %v3021
        %3138 = vmatpush1.msra.mxu0 %v3020
        %3139 = vmatprep.subr.mxu0 %v3031
        %3140 = vmatpush1.msra.mxu0 %v3030
        %3141 = vmatprep.subr.mxu0 %v3041
        %3142 = vmatpush1.msra.mxu0 %v3040
        %3143 = vmatprep.subr.mxu0 0.0
        %3144 = vmatpush1.msra.mxu0 0.0
        %3145 = vmatprep.subr.mxu0 0.0
        %3146 = vmatpush1.msra.mxu0 0.0
        %3147 = vmatprep.subr.mxu0 0.0
        %3148 = vmatpush1.msra.mxu0 0.0
        %3149 = vmatprep.subr.mxu0 0.0
        %3150 = vmatpush1.msra.mxu0 0.0
        %3151 = vmatprep.subr.mxu0 0.0
        %3152 = vmatpush1.msra.mxu0 0.0
        %3153 = vmatprep.subr.mxu0 0.0
        %3154 = vmatpush1.msra.mxu0 0.0
        %3155 = vmatprep.subr.mxu0 0.0
        %3156 = vmatpush1.msra.mxu0 0.0
        %3157 = vmatprep.subr.mxu0 0.0
        %3158 = vmatpush1.msra.mxu0 0.0
        %3159 = vmatprep.subr.mxu0 0.0
        %3160 = vmatpush1.msra.mxu0 0.0
        %3161 = vmatprep.subr.mxu0 0.0
        %3162 = vmatpush1.msra.mxu0 0.0
        %3163 = vmatprep.subr.mxu0 0.0
        %3164 = vmatpush1.msra.mxu0 0.0
        %3165 = vmatprep.subr.mxu0 0.0
        %3166 = vmatpush1.msra.mxu0 0.0
        %3167 = vmatprep.subr.mxu0 0.0
        %3168 = vmatpush1.msra.mxu0 0.0
        %3169 = vmatprep.subr.mxu0 0.0
        %3170 = vmatpush1.msra.mxu0 0.0
        %3171 = vmatprep.subr.mxu0 0.0
        %3172 = vmatpush1.msra.mxu0 0.0
        %3173 = vmatprep.subr.mxu0 0.0
        %3174 = vmatpush1.msra.mxu0 0.0
        %3175 = vmatprep.subr.mxu0 0.0
        %3176 = vmatpush1.msra.mxu0 0.0
        %3177 = vmatprep.subr.mxu0 0.0
        %3178 = vmatpush1.msra.mxu0 0.0
        %3179 = vmatprep.subr.mxu0 0.0
        %3180 = vmatpush1.msra.mxu0 0.0
        %3181 = vmatprep.subr.mxu0 0.0
        %3182 = vmatpush1.msra.mxu0 0.0
        %3183 = vmatprep.subr.mxu0 0.0
        %3184 = vmatpush1.msra.mxu0 0.0
        %3185 = vmatprep.subr.mxu0 0.0
        %3186 = vmatpush1.msra.mxu0 0.0
        %3187 = vmatprep.mubr.f32.mxu0 0.0
        %3188 = vmatmul.mubr.f32.gmra.mrb[0].mxu0 %v3050
        %v3189 = vpop.f32.mrb[0].mxu0
        %v3190 = vadd.f32 0.0, %v3189
        %v3191 = vpop.f32.mrb[0].mxu0
        %v3192 = vadd.f32 0.0, %v3191
        %3193 = vdwg.mxu0
        %3194 = vmatprep.subr.mxu0 %v2953
        %3195 = vmatpush1.msra.mxu0 %v2952
        %3196 = vmatprep.subr.mxu0 %v2963
        %3197 = vmatpush1.msra.mxu0 %v2962
        %3198 = vmatprep.subr.mxu0 %v2973
        %3199 = vmatpush1.msra.mxu0 %v2972
        %3200 = vmatprep.subr.mxu0 %v2983
        %3201 = vmatpush1.msra.mxu0 %v2982
        %3202 = vmatprep.subr.mxu0 %v2993
        %3203 = vmatpush1.msra.mxu0 %v2992
        %3204 = vmatprep.subr.mxu0 %v3003
        %3205 = vmatpush1.msra.mxu0 %v3002
        %3206 = vmatprep.subr.mxu0 %v3013
        %3207 = vmatpush1.msra.mxu0 %v3012
        %3208 = vmatprep.subr.mxu0 %v3023
        %3209 = vmatpush1.msra.mxu0 %v3022
        %3210 = vmatprep.subr.mxu0 %v3033
        %3211 = vmatpush1.msra.mxu0 %v3032
        %3212 = vmatprep.subr.mxu0 %v3043
        %3213 = vmatpush1.msra.mxu0 %v3042
        %3214 = vmatprep.subr.mxu0 0.0
        %3215 = vmatpush1.msra.mxu0 0.0
        %3216 = vmatprep.subr.mxu0 0.0
        %3217 = vmatpush1.msra.mxu0 0.0
        %3218 = vmatprep.subr.mxu0 0.0
        %3219 = vmatpush1.msra.mxu0 0.0
        %3220 = vmatprep.subr.mxu0 0.0
        %3221 = vmatpush1.msra.mxu0 0.0
        %3222 = vmatprep.subr.mxu0 0.0
        %3223 = vmatpush1.msra.mxu0 0.0
        %3224 = vmatprep.subr.mxu0 0.0
        %3225 = vmatpush1.msra.mxu0 0.0
        %3226 = vmatprep.subr.mxu0 0.0
        %3227 = vmatpush1.msra.mxu0 0.0
        %3228 = vmatprep.subr.mxu0 0.0
        %3229 = vmatpush1.msra.mxu0 0.0
        %3230 = vmatprep.subr.mxu0 0.0
        %3231 = vmatpush1.msra.mxu0 0.0
        %3232 = vmatprep.subr.mxu0 0.0
        %3233 = vmatpush1.msra.mxu0 0.0
        %3234 = vmatprep.subr.mxu0 0.0
        %3235 = vmatpush1.msra.mxu0 0.0
        %3236 = vmatprep.subr.mxu0 0.0
        %3237 = vmatpush1.msra.mxu0 0.0
        %3238 = vmatprep.subr.mxu0 0.0
        %3239 = vmatpush1.msra.mxu0 0.0
        %3240 = vmatprep.subr.mxu0 0.0
        %3241 = vmatpush1.msra.mxu0 0.0
        %3242 = vmatprep.subr.mxu0 0.0
        %3243 = vmatpush1.msra.mxu0 0.0
        %3244 = vmatprep.subr.mxu0 0.0
        %3245 = vmatpush1.msra.mxu0 0.0
        %3246 = vmatprep.subr.mxu0 0.0
        %3247 = vmatpush1.msra.mxu0 0.0
        %3248 = vmatprep.subr.mxu0 0.0
        %3249 = vmatpush1.msra.mxu0 0.0
        %3250 = vmatprep.subr.mxu0 0.0
        %3251 = vmatpush1.msra.mxu0 0.0
        %3252 = vmatprep.subr.mxu0 0.0
        %3253 = vmatpush1.msra.mxu0 0.0
        %3254 = vmatprep.subr.mxu0 0.0
        %3255 = vmatpush1.msra.mxu0 0.0
        %3256 = vmatprep.subr.mxu0 0.0
        %3257 = vmatpush1.msra.mxu0 0.0
        %3258 = vmatprep.mubr.f32.mxu0 0.0
        %3259 = vmatmul.mubr.f32.gmra.mrb[0].mxu0 %v3050
        %v3260 = vpop.f32.mrb[0].mxu0
        %v3261 = vadd.f32 0.0, %v3260
        %v3262 = vpop.f32.mrb[0].mxu0
        %v3263 = vadd.f32 0.0, %v3262
        %3264 = vdwg.mxu0
        %3265 = vmatprep.subr.mxu0 %v2955
        %3266 = vmatpush1.msra.mxu0 %v2954
        %3267 = vmatprep.subr.mxu0 %v2965
        %3268 = vmatpush1.msra.mxu0 %v2964
        %3269 = vmatprep.subr.mxu0 %v2975
        %3270 = vmatpush1.msra.mxu0 %v2974
        %3271 = vmatprep.subr.mxu0 %v2985
        %3272 = vmatpush1.msra.mxu0 %v2984
        %3273 = vmatprep.subr.mxu0 %v2995
        %3274 = vmatpush1.msra.mxu0 %v2994
        %3275 = vmatprep.subr.mxu0 %v3005
        %3276 = vmatpush1.msra.mxu0 %v3004
        %3277 = vmatprep.subr.mxu0 %v3015
        %3278 = vmatpush1.msra.mxu0 %v3014
        %3279 = vmatprep.subr.mxu0 %v3025
        %3280 = vmatpush1.msra.mxu0 %v3024
        %3281 = vmatprep.subr.mxu0 %v3035
        %3282 = vmatpush1.msra.mxu0 %v3034
        %3283 = vmatprep.subr.mxu0 %v3045
        %3284 = vmatpush1.msra.mxu0 %v3044
        %3285 = vmatprep.subr.mxu0 0.0
        %3286 = vmatpush1.msra.mxu0 0.0
        %3287 = vmatprep.subr.mxu0 0.0
        %3288 = vmatpush1.msra.mxu0 0.0
        %3289 = vmatprep.subr.mxu0 0.0
        %3290 = vmatpush1.msra.mxu0 0.0
        %3291 = vmatprep.subr.mxu0 0.0
        %3292 = vmatpush1.msra.mxu0 0.0
        %3293 = vmatprep.subr.mxu0 0.0
        %3294 = vmatpush1.msra.mxu0 0.0
        %3295 = vmatprep.subr.mxu0 0.0
        %3296 = vmatpush1.msra.mxu0 0.0
        %3297 = vmatprep.subr.mxu0 0.0
        %3298 = vmatpush1.msra.mxu0 0.0
        %3299 = vmatprep.subr.mxu0 0.0
        %3300 = vmatpush1.msra.mxu0 0.0
        %3301 = vmatprep.subr.mxu0 0.0
        %3302 = vmatpush1.msra.mxu0 0.0
        %3303 = vmatprep.subr.mxu0 0.0
        %3304 = vmatpush1.msra.mxu0 0.0
        %3305 = vmatprep.subr.mxu0 0.0
        %3306 = vmatpush1.msra.mxu0 0.0
        %3307 = vmatprep.subr.mxu0 0.0
        %3308 = vmatpush1.msra.mxu0 0.0
        %3309 = vmatprep.subr.mxu0 0.0
        %3310 = vmatpush1.msra.mxu0 0.0
        %3311 = vmatprep.subr.mxu0 0.0
        %3312 = vmatpush1.msra.mxu0 0.0
        %3313 = vmatprep.subr.mxu0 0.0
        %3314 = vmatpush1.msra.mxu0 0.0
        %3315 = vmatprep.subr.mxu0 0.0
        %3316 = vmatpush1.msra.mxu0 0.0
        %3317 = vmatprep.subr.mxu0 0.0
        %3318 = vmatpush1.msra.mxu0 0.0
        %3319 = vmatprep.subr.mxu0 0.0
        %3320 = vmatpush1.msra.mxu0 0.0
        %3321 = vmatprep.subr.mxu0 0.0
        %3322 = vmatpush1.msra.mxu0 0.0
        %3323 = vmatprep.subr.mxu0 0.0
        %3324 = vmatpush1.msra.mxu0 0.0
        %3325 = vmatprep.subr.mxu0 0.0
        %3326 = vmatpush1.msra.mxu0 0.0
        %3327 = vmatprep.subr.mxu0 0.0
        %3328 = vmatpush1.msra.mxu0 0.0
        %3329 = vmatprep.mubr.f32.mxu0 0.0
        %3330 = vmatmul.mubr.f32.gmra.mrb[0].mxu0 %v3050
        %v3331 = vpop.f32.mrb[0].mxu0
        %v3332 = vadd.f32 0.0, %v3331
        %v3333 = vpop.f32.mrb[0].mxu0
        %v3334 = vadd.f32 0.0, %v3333
        %3335 = vdwg.mxu0
        %3336 = vmatprep.subr.mxu0 %v2957
        %3337 = vmatpush1.msra.mxu0 %v2956
        %3338 = vmatprep.subr.mxu0 %v2967
        %3339 = vmatpush1.msra.mxu0 %v2966
        %3340 = vmatprep.subr.mxu0 %v2977
        %3341 = vmatpush1.msra.mxu0 %v2976
        %3342 = vmatprep.subr.mxu0 %v2987
        %3343 = vmatpush1.msra.mxu0 %v2986
        %3344 = vmatprep.subr.mxu0 %v2997
        %3345 = vmatpush1.msra.mxu0 %v2996
        %3346 = vmatprep.subr.mxu0 %v3007
        %3347 = vmatpush1.msra.mxu0 %v3006
        %3348 = vmatprep.subr.mxu0 %v3017
        %3349 = vmatpush1.msra.mxu0 %v3016
        %3350 = vmatprep.subr.mxu0 %v3027
        %3351 = vmatpush1.msra.mxu0 %v3026
        %3352 = vmatprep.subr.mxu0 %v3037
        %3353 = vmatpush1.msra.mxu0 %v3036
        %3354 = vmatprep.subr.mxu0 %v3047
        %3355 = vmatpush1.msra.mxu0 %v3046
        %3356 = vmatprep.subr.mxu0 0.0
        %3357 = vmatpush1.msra.mxu0 0.0
        %3358 = vmatprep.subr.mxu0 0.0
        %3359 = vmatpush1.msra.mxu0 0.0
        %3360 = vmatprep.subr.mxu0 0.0
        %3361 = vmatpush1.msra.mxu0 0.0
        %3362 = vmatprep.subr.mxu0 0.0
        %3363 = vmatpush1.msra.mxu0 0.0
        %3364 = vmatprep.subr.mxu0 0.0
        %3365 = vmatpush1.msra.mxu0 0.0
        %3366 = vmatprep.subr.mxu0 0.0
        %3367 = vmatpush1.msra.mxu0 0.0
        %3368 = vmatprep.subr.mxu0 0.0
        %3369 = vmatpush1.msra.mxu0 0.0
        %3370 = vmatprep.subr.mxu0 0.0
        %3371 = vmatpush1.msra.mxu0 0.0
        %3372 = vmatprep.subr.mxu0 0.0
        %3373 = vmatpush1.msra.mxu0 0.0
        %3374 = vmatprep.subr.mxu0 0.0
        %3375 = vmatpush1.msra.mxu0 0.0
        %3376 = vmatprep.subr.mxu0 0.0
        %3377 = vmatpush1.msra.mxu0 0.0
        %3378 = vmatprep.subr.mxu0 0.0
        %3379 = vmatpush1.msra.mxu0 0.0
        %3380 = vmatprep.subr.mxu0 0.0
        %3381 = vmatpush1.msra.mxu0 0.0
        %3382 = vmatprep.subr.mxu0 0.0
        %3383 = vmatpush1.msra.mxu0 0.0
        %3384 = vmatprep.subr.mxu0 0.0
        %3385 = vmatpush1.msra.mxu0 0.0
        %3386 = vmatprep.subr.mxu0 0.0
        %3387 = vmatpush1.msra.mxu0 0.0
        %3388 = vmatprep.subr.mxu0 0.0
        %3389 = vmatpush1.msra.mxu0 0.0
        %3390 = vmatprep.subr.mxu0 0.0
        %3391 = vmatpush1.msra.mxu0 0.0
        %3392 = vmatprep.subr.mxu0 0.0
        %3393 = vmatpush1.msra.mxu0 0.0
        %3394 = vmatprep.subr.mxu0 0.0
        %3395 = vmatpush1.msra.mxu0 0.0
        %3396 = vmatprep.subr.mxu0 0.0
        %3397 = vmatpush1.msra.mxu0 0.0
        %3398 = vmatprep.subr.mxu0 0.0
        %3399 = vmatpush1.msra.mxu0 0.0
        %3400 = vmatprep.mubr.f32.mxu0 0.0
        %3401 = vmatmul.mubr.f32.gmra.mrb[0].mxu0 %v3050
        %v3402 = vpop.f32.mrb[0].mxu0
        %v3403 = vadd.f32 0.0, %v3402
        %v3404 = vpop.f32.mrb[0].mxu0
        %v3405 = vadd.f32 0.0, %v3404
        %3406 = vdwg.mxu0
        %v3407 = vxor.u32 %v3119, 2147483648
        %v3408 = vxor.u32 %v3121, 2147483648
        %v3409 = vxor.u32 %v3190, 2147483648
        %v3410 = vxor.u32 %v3192, 2147483648
        %v3411 = vxor.u32 %v3261, 2147483648
        %v3412 = vxor.u32 %v3263, 2147483648
        %v3413 = vxor.u32 %v3332, 2147483648
        %v3414 = vxor.u32 %v3334, 2147483648
        %v3415 = vxor.u32 %v3403, 2147483648
        %v3416 = vxor.u32 %v3405, 2147483648
        %v3417 = vmul.f32 %v3407, 1.442695
        %v3418 = vpow.pop %v3417
        %v3419 = vmul.f32 %v3408, 1.442695
        %v3420 = vpow.pop %v3419
        %v3421 = vmul.f32 %v3409, 1.442695
        %v3422 = vpow.pop %v3421
        %v3423 = vmul.f32 %v3410, 1.442695
        %v3424 = vpow.pop %v3423
        %v3425 = vmul.f32 %v3411, 1.442695
        %v3426 = vpow.pop %v3425
        %v3427 = vmul.f32 %v3412, 1.442695
        %v3428 = vpow.pop %v3427
        %v3429 = vmul.f32 %v3413, 1.442695
        %v3430 = vpow.pop %v3429
        %v3431 = vmul.f32 %v3414, 1.442695
        %v3432 = vpow.pop %v3431
        %v3433 = vmul.f32 %v3415, 1.442695
        %v3434 = vpow.pop %v3433
        %v3435 = vmul.f32 %v3416, 1.442695
        %v3436 = vpow.pop %v3435
        %v3437 = vadd.f32 %v3418, 1.0
        %v3438 = vadd.f32 %v3420, 1.0
        %v3439 = vadd.f32 %v3422, 1.0
        %v3440 = vadd.f32 %v3424, 1.0
        %v3441 = vadd.f32 %v3426, 1.0
        %v3442 = vadd.f32 %v3428, 1.0
        %v3443 = vadd.f32 %v3430, 1.0
        %v3444 = vadd.f32 %v3432, 1.0
        %v3445 = vadd.f32 %v3434, 1.0
        %v3446 = vadd.f32 %v3436, 1.0
        %v3447 = vrcp.pop %v3437
        %v3448 = vmul.f32 1.0, %v3447
        %v3449 = vrcp.pop %v3438
        %v3450 = vmul.f32 1.0, %v3449
        %v3451 = vrcp.pop %v3439
        %v3452 = vmul.f32 1.0, %v3451
        %v3453 = vrcp.pop %v3440
        %v3454 = vmul.f32 1.0, %v3453
        %v3455 = vrcp.pop %v3441
        %v3456 = vmul.f32 1.0, %v3455
        %v3457 = vrcp.pop %v3442
        %v3458 = vmul.f32 1.0, %v3457
        %v3459 = vrcp.pop %v3443
        %v3460 = vmul.f32 1.0, %v3459
        %v3461 = vrcp.pop %v3444
        %v3462 = vmul.f32 1.0, %v3461
        %v3463 = vrcp.pop %v3445
        %v3464 = vmul.f32 1.0, %v3463
        %v3465 = vrcp.pop %v3446
        %v3466 = vmul.f32 1.0, %v3465
        %v3477 = vcombine.low %v3448, %v3450
        %v3478 = vcombine.low %v3452, %v3454
        %v3479 = vcombine.low %v3456, %v3458
        %v3480 = vcombine.low %v3460, %v3462
        %v3482 = vunpack.c.l.s4 1966171168
        %v3483 = vunpack.c.0.s8 %v3482
        %v3484 = vlaneseq
        %v3485 = vshrl.u32 %v3484, 7
        %v3486 = vsub.s32 %v3483, %v3485
        %v3487 = vrot.slane %v3477, %v3486
        %v3489 = vunpack.c.l.s4 1966171168
        %v3490 = vunpack.c.0.s8 %v3489
        %v3491 = vlaneseq
        %v3492 = vshrl.u32 %v3491, 7
        %v3493 = vsub.s32 %v3490, %v3492
        %v3494 = vrot.slane %v3478, %v3493
        %v3496 = vunpack.c.l.s4 1966171168
        %v3497 = vunpack.c.0.s8 %v3496
        %v3498 = vlaneseq
        %v3499 = vshrl.u32 %v3498, 7
        %v3500 = vsub.s32 %v3497, %v3499
        %v3501 = vrot.slane %v3479, %v3500
        %v3503 = vunpack.c.l.s4 1966171168
        %v3504 = vunpack.c.0.s8 %v3503
        %v3505 = vlaneseq
        %v3506 = vshrl.u32 %v3505, 7
        %v3507 = vsub.s32 %v3504, %v3506
        %v3508 = vrot.slane %v3480, %v3507
        %v3509 = vcombine.low %v3487, %v3494
        %v3510 = vcombine.low %v3501, %v3508
        %v3512 = vunpack.c.l.s4 1966171168
        %v3513 = vunpack.c.0.s8 %v3512
        %v3514 = vlaneseq
        %v3515 = vshrl.u32 %v3514, 7
        %v3516 = vsub.s32 %v3513, %v3515
        %v3517 = vrot.slane %v3509, %v3516
        %v3519 = vunpack.c.l.s4 1966171168
        %v3520 = vunpack.c.0.s8 %v3519
        %v3521 = vlaneseq
        %v3522 = vshrl.u32 %v3521, 7
        %v3523 = vsub.s32 %v3520, %v3522
        %v3524 = vrot.slane %v3510, %v3523
        %v3525 = vcombine.low %v3517, %v3524
        %v3526 = vcombine.low %v3464, %v3466
        %v3528 = vunpack.c.l.s4 1966171168
        %v3529 = vunpack.c.0.s8 %v3528
        %v3530 = vlaneseq
        %v3531 = vshrl.u32 %v3530, 7
        %v3532 = vsub.s32 %v3529, %v3531
        %v3533 = vrot.slane %v3526, %v3532
        %v3535 = vunpack.c.l.s4 1966171168
        %v3536 = vunpack.c.0.s8 %v3535
        %v3537 = vlaneseq
        %v3538 = vshrl.u32 %v3537, 7
        %v3539 = vsub.s32 %v3536, %v3538
        %v3540 = vrot.slane %v3533, %v3539
        %v3543 = vmul.f32 %v2383, %v3525
        %v3544 = vmul.f32 %v2384, %v3540
        %v3545 = vld [vmem:[%s9] sm:$0xff]
        %v3546 = vld [vmem:[%s9 + $0x8] sm:$0xff]
        %v3547 = vld [vmem:[%s9 + $0x10] sm:$0xff]
        %v3548 = vld [vmem:[%s9 + $0x18] sm:$0xff]
        %v3549 = vld [vmem:[%s9 + $0x20] sm:$0xff]
        %v3550 = vld [vmem:[%s9 + $0x28] sm:$0xff]
        %v3551 = vld [vmem:[%s9 + $0x30] sm:$0xff]
        %v3552 = vld [vmem:[%s9 + $0x38] sm:$0xff]
        %v3553 = vld [vmem:[%s9 + $0x40] sm:$0xff]
        %v3554 = vld [vmem:[%s9 + $0x48] sm:$0xff]
        %v3555 = vld [vmem:[%s9 + $0x50] sm:$0xff]
        %v3556 = vld [vmem:[%s9 + $0x58] sm:$0xff]
        %v3557 = vld [vmem:[%s9 + $0x60] sm:$0xff]
        %v3558 = vld [vmem:[%s9 + $0x68] sm:$0xff]
        %v3559 = vld [vmem:[%s9 + $0x70] sm:$0xff]
        %v3560 = vld [vmem:[%s9 + $0x78] sm:$0xff]
        %v3561 = vld [vmem:[%s9 + $0x80] sm:$0xff]
        %v3562 = vld [vmem:[%s9 + $0x88] sm:$0xff]
        %v3563 = vld [vmem:[%s9 + $0x90] sm:$0xff]
        %v3564 = vld [vmem:[%s9 + $0x98] sm:$0xff]
        %v3565 = vld [vmem:[%s9 + $0xa0] sm:$0xff]
        %v3566 = vld [vmem:[%s9 + $0xa8] sm:$0xff]
        %v3567 = vld [vmem:[%s9 + $0xb0] sm:$0xff]
        %v3568 = vld [vmem:[%s9 + $0xb8] sm:$0xff]
        %v3569 = vld [vmem:[%s9 + $0xc0] sm:$0xff]
        %v3570 = vld [vmem:[%s9 + $0xc8] sm:$0xff]
        %v3571 = vld [vmem:[%s9 + $0xd0] sm:$0xff]
        %v3572 = vld [vmem:[%s9 + $0xd8] sm:$0xff]
        %v3573 = vld [vmem:[%s9 + $0xe0] sm:$0xff]
        %v3574 = vld [vmem:[%s9 + $0xe8] sm:$0xff]
        %v3575 = vld [vmem:[%s9 + $0xf0] sm:$0xff]
        %v3576 = vld [vmem:[%s9 + $0xf8] sm:$0xff]
        %v3577 = vld [vmem:[%s9 + $0x100] sm:$0xff]
        %v3578 = vld [vmem:[%s9 + $0x108] sm:$0xff]
        %v3579 = vld [vmem:[%s9 + $0x110] sm:$0xff]
        %v3580 = vld [vmem:[%s9 + $0x118] sm:$0xff]
        %v3581 = vld [vmem:[%s9 + $0x120] sm:$0xff]
        %v3582 = vld [vmem:[%s9 + $0x128] sm:$0xff]
        %v3583 = vld [vmem:[%s9 + $0x130] sm:$0xff]
        %v3584 = vld [vmem:[%s9 + $0x138] sm:$0xff]
        %v3585 = vld [vmem:[%s9 + $0x140] sm:$0xff]
        %v3586 = vld [vmem:[%s9 + $0x148] sm:$0xff]
        %v3587 = vld [vmem:[%s9 + $0x150] sm:$0xff]
        %v3588 = vld [vmem:[%s9 + $0x158] sm:$0xff]
        %v3589 = vld [vmem:[%s9 + $0x160] sm:$0xff]
        %v3590 = vld [vmem:[%s9 + $0x168] sm:$0xff]
        %v3591 = vld [vmem:[%s9 + $0x170] sm:$0xff]
        %v3592 = vld [vmem:[%s9 + $0x178] sm:$0xff]
        %v3593 = vld [vmem:[%s9 + $0x180] sm:$0xff]
        %v3594 = vld [vmem:[%s9 + $0x188] sm:$0xff]
        %v3595 = vld [vmem:[%s9 + $0x190] sm:$0xff]
        %v3596 = vld [vmem:[%s9 + $0x198] sm:$0xff]
        %v3597 = vld [vmem:[%s9 + $0x1a0] sm:$0xff]
        %v3598 = vld [vmem:[%s9 + $0x1a8] sm:$0xff]
        %v3599 = vld [vmem:[%s9 + $0x1b0] sm:$0xff]
        %v3600 = vld [vmem:[%s9 + $0x1b8] sm:$0xff]
        %v3601 = vld [vmem:[%s9 + $0x1c0] sm:$0xff]
        %v3602 = vld [vmem:[%s9 + $0x1c8] sm:$0xff]
        %v3603 = vld [vmem:[%s9 + $0x1d0] sm:$0xff]
        %v3604 = vld [vmem:[%s9 + $0x1d8] sm:$0xff]
        %v3605 = vld [vmem:[%s9 + $0x1e0] sm:$0xff]
        %v3606 = vld [vmem:[%s9 + $0x1e8] sm:$0xff]
        %v3607 = vld [vmem:[%s9 + $0x1f0] sm:$0xff]
        %v3608 = vld [vmem:[%s9 + $0x1f8] sm:$0xff]
        %v3609 = vld [vmem:[%s9 + $0x200] sm:$0xff]
        %v3610 = vld [vmem:[%s9 + $0x208] sm:$0xff]
        %v3611 = vld [vmem:[%s9 + $0x210] sm:$0xff]
        %v3612 = vld [vmem:[%s9 + $0x218] sm:$0xff]
        %v3613 = vld [vmem:[%s9 + $0x220] sm:$0xff]
        %v3614 = vld [vmem:[%s9 + $0x228] sm:$0xff]
        %v3615 = vld [vmem:[%s9 + $0x230] sm:$0xff]
        %v3616 = vld [vmem:[%s9 + $0x238] sm:$0xff]
        %v3617 = vld [vmem:[%s9 + $0x240] sm:$0xff]
        %v3618 = vld [vmem:[%s9 + $0x248] sm:$0xff]
        %v3619 = vld [vmem:[%s9 + $0x250] sm:$0xff]
        %v3620 = vld [vmem:[%s9 + $0x258] sm:$0xff]
        %v3621 = vld [vmem:[%s9 + $0x260] sm:$0xff]
        %v3622 = vld [vmem:[%s9 + $0x268] sm:$0xff]
        %v3623 = vld [vmem:[%s9 + $0x270] sm:$0xff]
        %v3624 = vld [vmem:[%s9 + $0x278] sm:$0xff]
        %v3625 = vld [vmem:[%s9 + $0x280] sm:$0xff]
        %v3626 = vld [vmem:[%s9 + $0x288] sm:$0xff]
        %v3627 = vld [vmem:[%s9 + $0x290] sm:$0xff]
        %v3628 = vld [vmem:[%s9 + $0x298] sm:$0xff]
        %v3629 = vld [vmem:[%s9 + $0x2a0] sm:$0xff]
        %v3630 = vld [vmem:[%s9 + $0x2a8] sm:$0xff]
        %v3631 = vld [vmem:[%s9 + $0x2b0] sm:$0xff]
        %v3632 = vld [vmem:[%s9 + $0x2b8] sm:$0xff]
        %v3633 = vld [vmem:[%s9 + $0x2c0] sm:$0xff]
        %v3634 = vld [vmem:[%s9 + $0x2c8] sm:$0xff]
        %v3635 = vld [vmem:[%s9 + $0x2d0] sm:$0xff]
        %v3636 = vld [vmem:[%s9 + $0x2d8] sm:$0xff]
        %v3637 = vld [vmem:[%s9 + $0x2e0] sm:$0xff]
        %v3638 = vld [vmem:[%s9 + $0x2e8] sm:$0xff]
        %v3639 = vld [vmem:[%s9 + $0x2f0] sm:$0xff]
        %v3640 = vld [vmem:[%s9 + $0x2f8] sm:$0xff]
        %v3641 = vld [vmem:[%s9 + $0x300] sm:$0xff]
        %v3642 = vld [vmem:[%s9 + $0x308] sm:$0xff]
        %v3643 = vld [vmem:[%s9 + $0x310] sm:$0xff]
        %v3644 = vld [vmem:[%s9 + $0x318] sm:$0xff]
        %v3645 = vld [vmem:[%s9 + $0x320] sm:$0xff]
        %v3646 = vld [vmem:[%s9 + $0x328] sm:$0xff]
        %v3647 = vld [vmem:[%s9 + $0x330] sm:$0xff]
        %v3648 = vld [vmem:[%s9 + $0x338] sm:$0xff]
        %v3649 = vld [vmem:[%s9 + $0x340] sm:$0xff]
        %v3650 = vld [vmem:[%s9 + $0x348] sm:$0xff]
        %v3651 = vld [vmem:[%s9 + $0x350] sm:$0xff]
        %v3652 = vld [vmem:[%s9 + $0x358] sm:$0xff]
        %v3653 = vld [vmem:[%s9 + $0x360] sm:$0xff]
        %v3654 = vld [vmem:[%s9 + $0x368] sm:$0xff]
        %v3655 = vld [vmem:[%s9 + $0x370] sm:$0xff]
        %v3656 = vld [vmem:[%s9 + $0x378] sm:$0xff]
        %v3657 = vld [vmem:[%s9 + $0x380] sm:$0xff]
        %v3658 = vld [vmem:[%s9 + $0x388] sm:$0xff]
        %v3659 = vld [vmem:[%s9 + $0x390] sm:$0xff]
        %v3660 = vld [vmem:[%s9 + $0x398] sm:$0xff]
        %v3661 = vld [vmem:[%s9 + $0x3a0] sm:$0xff]
        %v3662 = vld [vmem:[%s9 + $0x3a8] sm:$0xff]
        %v3663 = vld [vmem:[%s9 + $0x3b0] sm:$0xff]
        %v3664 = vld [vmem:[%s9 + $0x3b8] sm:$0xff]
        %v3665 = vld [vmem:[%s9 + $0x3c0] sm:$0xff]
        %v3666 = vld [vmem:[%s9 + $0x3c8] sm:$0xff]
        %v3667 = vld [vmem:[%s9 + $0x3d0] sm:$0xff]
        %v3668 = vld [vmem:[%s9 + $0x3d8] sm:$0xff]
        %v3669 = vld [vmem:[%s9 + $0x3e0] sm:$0xff]
        %v3670 = vld [vmem:[%s9 + $0x3e8] sm:$0xff]
        %v3671 = vld [vmem:[%s9 + $0x3f0] sm:$0xff]
        %v3672 = vld [vmem:[%s9 + $0x3f8] sm:$0xff]
        %v3673 = vld [vmem:[%s9 + $0x400] sm:$0xff]
        %v3674 = vld [vmem:[%s9 + $0x408] sm:$0xff]
        %v3675 = vld [vmem:[%s9 + $0x410] sm:$0xff]
        %v3676 = vld [vmem:[%s9 + $0x418] sm:$0xff]
        %v3677 = vld [vmem:[%s9 + $0x420] sm:$0xff]
        %v3678 = vld [vmem:[%s9 + $0x428] sm:$0xff]
        %v3679 = vld [vmem:[%s9 + $0x430] sm:$0xff]
        %v3680 = vld [vmem:[%s9 + $0x438] sm:$0xff]
        %v3681 = vld [vmem:[%s9 + $0x440] sm:$0xff]
        %v3682 = vld [vmem:[%s9 + $0x448] sm:$0xff]
        %v3683 = vld [vmem:[%s9 + $0x450] sm:$0xff]
        %v3684 = vld [vmem:[%s9 + $0x458] sm:$0xff]
        %v3685 = vld [vmem:[%s9 + $0x460] sm:$0xff]
        %v3686 = vld [vmem:[%s9 + $0x468] sm:$0xff]
        %v3687 = vld [vmem:[%s9 + $0x470] sm:$0xff]
        %v3688 = vld [vmem:[%s9 + $0x478] sm:$0xff]
        %v3689 = vld [vmem:[%s9 + $0x480] sm:$0xff]
        %v3690 = vld [vmem:[%s9 + $0x488] sm:$0xff]
        %v3691 = vld [vmem:[%s9 + $0x490] sm:$0xff]
        %v3692 = vld [vmem:[%s9 + $0x498] sm:$0xff]
        %v3693 = vld [vmem:[%s9 + $0x4a0] sm:$0xff]
        %v3694 = vld [vmem:[%s9 + $0x4a8] sm:$0xff]
        %v3695 = vld [vmem:[%s9 + $0x4b0] sm:$0xff]
        %v3696 = vld [vmem:[%s9 + $0x4b8] sm:$0xff]
        %v3697 = vld [vmem:[%s9 + $0x4c0] sm:$0xff]
        %v3698 = vld [vmem:[%s9 + $0x4c8] sm:$0xff]
        %v3699 = vld [vmem:[%s9 + $0x4d0] sm:$0xff]
        %v3700 = vld [vmem:[%s9 + $0x4d8] sm:$0xff]
        %v3701 = vld [vmem:[%s9 + $0x4e0] sm:$0xff]
        %v3702 = vld [vmem:[%s9 + $0x4e8] sm:$0xff]
        %v3703 = vld [vmem:[%s9 + $0x4f0] sm:$0xff]
        %v3704 = vld [vmem:[%s9 + $0x4f8] sm:$0xff]
        %v3705 = vld [vmem:[%s9 + $0x500] sm:$0xff]
        %v3706 = vld [vmem:[%s9 + $0x508] sm:$0xff]
        %v3707 = vld [vmem:[%s9 + $0x510] sm:$0xff]
        %v3708 = vld [vmem:[%s9 + $0x518] sm:$0xff]
        %v3709 = vld [vmem:[%s9 + $0x520] sm:$0xff]
        %v3710 = vld [vmem:[%s9 + $0x528] sm:$0xff]
        %v3711 = vld [vmem:[%s9 + $0x530] sm:$0xff]
        %v3712 = vld [vmem:[%s9 + $0x538] sm:$0xff]
        %v3713 = vld [vmem:[%s9 + $0x540] sm:$0xff]
        %v3714 = vld [vmem:[%s9 + $0x548] sm:$0xff]
        %v3715 = vld [vmem:[%s9 + $0x550] sm:$0xff]
        %v3716 = vld [vmem:[%s9 + $0x558] sm:$0xff]
        %v3717 = vld [vmem:[%s9 + $0x560] sm:$0xff]
        %v3718 = vld [vmem:[%s9 + $0x568] sm:$0xff]
        %v3719 = vld [vmem:[%s9 + $0x570] sm:$0xff]
        %v3720 = vld [vmem:[%s9 + $0x578] sm:$0xff]
        %v3721 = vld [vmem:[%s9 + $0x580] sm:$0xff]
        %v3722 = vld [vmem:[%s9 + $0x588] sm:$0xff]
        %v3723 = vld [vmem:[%s9 + $0x590] sm:$0xff]
        %v3724 = vld [vmem:[%s9 + $0x598] sm:$0xff]
        %v3725 = vld [vmem:[%s9 + $0x5a0] sm:$0xff]
        %v3726 = vld [vmem:[%s9 + $0x5a8] sm:$0xff]
        %v3727 = vld [vmem:[%s9 + $0x5b0] sm:$0xff]
        %v3728 = vld [vmem:[%s9 + $0x5b8] sm:$0xff]
        %v3729 = vld [vmem:[%s9 + $0x5c0] sm:$0xff]
        %v3730 = vld [vmem:[%s9 + $0x5c8] sm:$0xff]
        %v3731 = vld [vmem:[%s9 + $0x5d0] sm:$0xff]
        %v3732 = vld [vmem:[%s9 + $0x5d8] sm:$0xff]
        %v3733 = vld [vmem:[%s9 + $0x5e0] sm:$0xff]
        %v3734 = vld [vmem:[%s9 + $0x5e8] sm:$0xff]
        %v3735 = vld [vmem:[%s9 + $0x5f0] sm:$0xff]
        %v3736 = vld [vmem:[%s9 + $0x5f8] sm:$0xff]
        %v3737 = vld [vmem:[%s9 + $0x600] sm:$0xff]
        %v3738 = vld [vmem:[%s9 + $0x608] sm:$0xff]
        %v3739 = vld [vmem:[%s9 + $0x610] sm:$0xff]
        %v3740 = vld [vmem:[%s9 + $0x618] sm:$0xff]
        %v3741 = vld [vmem:[%s9 + $0x620] sm:$0xff]
        %v3742 = vld [vmem:[%s9 + $0x628] sm:$0xff]
        %v3743 = vld [vmem:[%s9 + $0x630] sm:$0xff]
        %v3744 = vld [vmem:[%s9 + $0x638] sm:$0xff]
        %v3745 = vld [vmem:[%s9 + $0x640] sm:$0xff]
        %v3746 = vld [vmem:[%s9 + $0x648] sm:$0xff]
        %v3747 = vld [vmem:[%s9 + $0x650] sm:$0xff]
        %v3748 = vld [vmem:[%s9 + $0x658] sm:$0xff]
        %v3749 = vld [vmem:[%s9 + $0x660] sm:$0xff]
        %v3750 = vld [vmem:[%s9 + $0x668] sm:$0xff]
        %v3751 = vld [vmem:[%s9 + $0x670] sm:$0xff]
        %v3752 = vld [vmem:[%s9 + $0x678] sm:$0xff]
        %v3753 = vld [vmem:[%s9 + $0x680] sm:$0xff]
        %v3754 = vld [vmem:[%s9 + $0x688] sm:$0xff]
        %v3755 = vld [vmem:[%s9 + $0x690] sm:$0xff]
        %v3756 = vld [vmem:[%s9 + $0x698] sm:$0xff]
        %v3757 = vld [vmem:[%s9 + $0x6a0] sm:$0xff]
        %v3758 = vld [vmem:[%s9 + $0x6a8] sm:$0xff]
        %v3759 = vld [vmem:[%s9 + $0x6b0] sm:$0xff]
        %v3760 = vld [vmem:[%s9 + $0x6b8] sm:$0xff]
        %v3761 = vld [vmem:[%s9 + $0x6c0] sm:$0xff]
        %v3762 = vld [vmem:[%s9 + $0x6c8] sm:$0xff]
        %v3763 = vld [vmem:[%s9 + $0x6d0] sm:$0xff]
        %v3764 = vld [vmem:[%s9 + $0x6d8] sm:$0xff]
        %v3765 = vld [vmem:[%s9 + $0x6e0] sm:$0xff]
        %v3766 = vld [vmem:[%s9 + $0x6e8] sm:$0xff]
        %v3767 = vld [vmem:[%s9 + $0x6f0] sm:$0xff]
        %v3768 = vld [vmem:[%s9 + $0x6f8] sm:$0xff]
        %v3769 = vld [vmem:[%s9 + $0x700] sm:$0xff]
        %v3770 = vld [vmem:[%s9 + $0x708] sm:$0xff]
        %v3771 = vld [vmem:[%s9 + $0x710] sm:$0xff]
        %v3772 = vld [vmem:[%s9 + $0x718] sm:$0xff]
        %v3773 = vld [vmem:[%s9 + $0x720] sm:$0xff]
        %v3774 = vld [vmem:[%s9 + $0x728] sm:$0xff]
        %v3775 = vld [vmem:[%s9 + $0x730] sm:$0xff]
        %v3776 = vld [vmem:[%s9 + $0x738] sm:$0xff]
        %v3777 = vld [vmem:[%s9 + $0x740] sm:$0xff]
        %v3778 = vld [vmem:[%s9 + $0x748] sm:$0xff]
        %v3779 = vld [vmem:[%s9 + $0x750] sm:$0xff]
        %v3780 = vld [vmem:[%s9 + $0x758] sm:$0xff]
        %v3781 = vld [vmem:[%s9 + $0x760] sm:$0xff]
        %v3782 = vld [vmem:[%s9 + $0x768] sm:$0xff]
        %v3783 = vld [vmem:[%s9 + $0x770] sm:$0xff]
        %v3784 = vld [vmem:[%s9 + $0x778] sm:$0xff]
        %v3785 = vld [vmem:[%s9 + $0x780] sm:$0xff]
        %v3786 = vld [vmem:[%s9 + $0x788] sm:$0xff]
        %v3787 = vld [vmem:[%s9 + $0x790] sm:$0xff]
        %v3788 = vld [vmem:[%s9 + $0x798] sm:$0xff]
        %v3789 = vld [vmem:[%s9 + $0x7a0] sm:$0xff]
        %v3790 = vld [vmem:[%s9 + $0x7a8] sm:$0xff]
        %v3791 = vld [vmem:[%s9 + $0x7b0] sm:$0xff]
        %v3792 = vld [vmem:[%s9 + $0x7b8] sm:$0xff]
        %v3793 = vld [vmem:[%s9 + $0x7c0] sm:$0xff]
        %v3794 = vld [vmem:[%s9 + $0x7c8] sm:$0xff]
        %v3795 = vld [vmem:[%s9 + $0x7d0] sm:$0xff]
        %v3796 = vld [vmem:[%s9 + $0x7d8] sm:$0xff]
        %v3797 = vld [vmem:[%s9 + $0x7e0] sm:$0xff]
        %v3798 = vld [vmem:[%s9 + $0x7e8] sm:$0xff]
        %v3799 = vld [vmem:[%s9 + $0x7f0] sm:$0xff]
        %v3800 = vld [vmem:[%s9 + $0x7f8] sm:$0xff]
        %v3801 = vld [vmem:[%s9 + $0x800] sm:$0xff]
        %v3802 = vld [vmem:[%s9 + $0x808] sm:$0xff]
        %v3803 = vld [vmem:[%s9 + $0x810] sm:$0xff]
        %v3804 = vld [vmem:[%s9 + $0x818] sm:$0xff]
        %v3805 = vld [vmem:[%s9 + $0x820] sm:$0xff]
        %v3806 = vld [vmem:[%s9 + $0x828] sm:$0xff]
        %v3807 = vld [vmem:[%s9 + $0x830] sm:$0xff]
        %v3808 = vld [vmem:[%s9 + $0x838] sm:$0xff]
        %v3809 = vld [vmem:[%s9 + $0x840] sm:$0xff]
        %v3810 = vld [vmem:[%s9 + $0x848] sm:$0xff]
        %v3811 = vld [vmem:[%s9 + $0x850] sm:$0xff]
        %v3812 = vld [vmem:[%s9 + $0x858] sm:$0xff]
        %v3813 = vld [vmem:[%s9 + $0x860] sm:$0xff]
        %v3814 = vld [vmem:[%s9 + $0x868] sm:$0xff]
        %v3815 = vld [vmem:[%s9 + $0x870] sm:$0xff]
        %v3816 = vld [vmem:[%s9 + $0x878] sm:$0xff]
        %v3817 = vld [vmem:[%s9 + $0x880] sm:$0xff]
        %v3818 = vld [vmem:[%s9 + $0x888] sm:$0xff]
        %v3819 = vld [vmem:[%s9 + $0x890] sm:$0xff]
        %v3820 = vld [vmem:[%s9 + $0x898] sm:$0xff]
        %v3821 = vld [vmem:[%s9 + $0x8a0] sm:$0xff]
        %v3822 = vld [vmem:[%s9 + $0x8a8] sm:$0xff]
        %v3823 = vld [vmem:[%s9 + $0x8b0] sm:$0xff]
        %v3824 = vld [vmem:[%s9 + $0x8b8] sm:$0xff]
        %v3825 = vld [vmem:[%s9 + $0x8c0] sm:$0xff]
        %v3826 = vld [vmem:[%s9 + $0x8c8] sm:$0xff]
        %v3827 = vld [vmem:[%s9 + $0x8d0] sm:$0xff]
        %v3828 = vld [vmem:[%s9 + $0x8d8] sm:$0xff]
        %v3829 = vld [vmem:[%s9 + $0x8e0] sm:$0xff]
        %v3830 = vld [vmem:[%s9 + $0x8e8] sm:$0xff]
        %v3831 = vld [vmem:[%s9 + $0x8f0] sm:$0xff]
        %v3832 = vld [vmem:[%s9 + $0x8f8] sm:$0xff]
        %v3833 = vld [vmem:[%s9 + $0x900] sm:$0xff]
        %v3834 = vld [vmem:[%s9 + $0x908] sm:$0xff]
        %v3835 = vld [vmem:[%s9 + $0x910] sm:$0xff]
        %v3836 = vld [vmem:[%s9 + $0x918] sm:$0xff]
        %v3837 = vld [vmem:[%s9 + $0x920] sm:$0xff]
        %v3838 = vld [vmem:[%s9 + $0x928] sm:$0xff]
        %v3839 = vld [vmem:[%s9 + $0x930] sm:$0xff]
        %v3840 = vld [vmem:[%s9 + $0x938] sm:$0xff]
        %v3841 = vld [vmem:[%s9 + $0x940] sm:$0xff]
        %v3842 = vld [vmem:[%s9 + $0x948] sm:$0xff]
        %v3843 = vld [vmem:[%s9 + $0x950] sm:$0xff]
        %v3844 = vld [vmem:[%s9 + $0x958] sm:$0xff]
        %v3845 = vld [vmem:[%s9 + $0x960] sm:$0xff]
        %v3846 = vld [vmem:[%s9 + $0x968] sm:$0xff]
        %v3847 = vld [vmem:[%s9 + $0x970] sm:$0xff]
        %v3848 = vld [vmem:[%s9 + $0x978] sm:$0xff]
        %v3849 = vld [vmem:[%s9 + $0x980] sm:$0xff]
        %v3850 = vld [vmem:[%s9 + $0x988] sm:$0xff]
        %v3851 = vld [vmem:[%s9 + $0x990] sm:$0xff]
        %v3852 = vld [vmem:[%s9 + $0x998] sm:$0xff]
        %v3853 = vld [vmem:[%s9 + $0x9a0] sm:$0xff]
        %v3854 = vld [vmem:[%s9 + $0x9a8] sm:$0xff]
        %v3855 = vld [vmem:[%s9 + $0x9b0] sm:$0xff]
        %v3856 = vld [vmem:[%s9 + $0x9b8] sm:$0xff]
        %v3857 = vld [vmem:[%s9 + $0x9c0] sm:$0xff]
        %v3858 = vld [vmem:[%s9 + $0x9c8] sm:$0xff]
        %v3859 = vld [vmem:[%s9 + $0x9d0] sm:$0xff]
        %v3860 = vld [vmem:[%s9 + $0x9d8] sm:$0xff]
        %v3861 = vld [vmem:[%s9 + $0x9e0] sm:$0xff]
        %v3862 = vld [vmem:[%s9 + $0x9e8] sm:$0xff]
        %v3863 = vld [vmem:[%s9 + $0x9f0] sm:$0xff]
        %v3864 = vld [vmem:[%s9 + $0x9f8] sm:$0xff]
        %v3865 = vld [vmem:[%s9 + $0xa00] sm:$0xff]
        %v3866 = vld [vmem:[%s9 + $0xa08] sm:$0xff]
        %v3867 = vld [vmem:[%s9 + $0xa10] sm:$0xff]
        %v3868 = vld [vmem:[%s9 + $0xa18] sm:$0xff]
        %v3869 = vld [vmem:[%s9 + $0xa20] sm:$0xff]
        %v3870 = vld [vmem:[%s9 + $0xa28] sm:$0xff]
        %v3871 = vld [vmem:[%s9 + $0xa30] sm:$0xff]
        %v3872 = vld [vmem:[%s9 + $0xa38] sm:$0xff]
        %v3873 = vld [vmem:[%s9 + $0xa40] sm:$0xff]
        %v3874 = vld [vmem:[%s9 + $0xa48] sm:$0xff]
        %v3875 = vld [vmem:[%s9 + $0xa50] sm:$0xff]
        %v3876 = vld [vmem:[%s9 + $0xa58] sm:$0xff]
        %v3877 = vld [vmem:[%s9 + $0xa60] sm:$0xff]
        %v3878 = vld [vmem:[%s9 + $0xa68] sm:$0xff]
        %v3879 = vld [vmem:[%s9 + $0xa70] sm:$0xff]
        %v3880 = vld [vmem:[%s9 + $0xa78] sm:$0xff]
        %v3881 = vld [vmem:[%s9 + $0xa80] sm:$0xff]
        %v3882 = vld [vmem:[%s9 + $0xa88] sm:$0xff]
        %v3883 = vld [vmem:[%s9 + $0xa90] sm:$0xff]
        %v3884 = vld [vmem:[%s9 + $0xa98] sm:$0xff]
        %v3885 = vld [vmem:[%s9 + $0xaa0] sm:$0xff]
        %v3886 = vld [vmem:[%s9 + $0xaa8] sm:$0xff]
        %v3887 = vld [vmem:[%s9 + $0xab0] sm:$0xff]
        %v3888 = vld [vmem:[%s9 + $0xab8] sm:$0xff]
        %v3889 = vld [vmem:[%s9 + $0xac0] sm:$0xff]
        %v3890 = vld [vmem:[%s9 + $0xac8] sm:$0xff]
        %v3891 = vld [vmem:[%s9 + $0xad0] sm:$0xff]
        %v3892 = vld [vmem:[%s9 + $0xad8] sm:$0xff]
        %v3893 = vld [vmem:[%s9 + $0xae0] sm:$0xff]
        %v3894 = vld [vmem:[%s9 + $0xae8] sm:$0xff]
        %v3895 = vld [vmem:[%s9 + $0xaf0] sm:$0xff]
        %v3896 = vld [vmem:[%s9 + $0xaf8] sm:$0xff]
        %v3897 = vld [vmem:[%s9 + $0xb00] sm:$0xff]
        %v3898 = vld [vmem:[%s9 + $0xb08] sm:$0xff]
        %v3899 = vld [vmem:[%s9 + $0xb10] sm:$0xff]
        %v3900 = vld [vmem:[%s9 + $0xb18] sm:$0xff]
        %v3901 = vld [vmem:[%s9 + $0xb20] sm:$0xff]
        %v3902 = vld [vmem:[%s9 + $0xb28] sm:$0xff]
        %v3903 = vld [vmem:[%s9 + $0xb30] sm:$0xff]
        %v3904 = vld [vmem:[%s9 + $0xb38] sm:$0xff]
        %v3905 = vld [vmem:[%s9 + $0xb40] sm:$0xff]
        %v3906 = vld [vmem:[%s9 + $0xb48] sm:$0xff]
        %v3907 = vld [vmem:[%s9 + $0xb50] sm:$0xff]
        %v3908 = vld [vmem:[%s9 + $0xb58] sm:$0xff]
        %v3909 = vld [vmem:[%s9 + $0xb60] sm:$0xff]
        %v3910 = vld [vmem:[%s9 + $0xb68] sm:$0xff]
        %v3911 = vld [vmem:[%s9 + $0xb70] sm:$0xff]
        %v3912 = vld [vmem:[%s9 + $0xb78] sm:$0xff]
        %v3913 = vld [vmem:[%s9 + $0xb80] sm:$0xff]
        %v3914 = vld [vmem:[%s9 + $0xb88] sm:$0xff]
        %v3915 = vld [vmem:[%s9 + $0xb90] sm:$0xff]
        %v3916 = vld [vmem:[%s9 + $0xb98] sm:$0xff]
        %v3917 = vld [vmem:[%s9 + $0xba0] sm:$0xff]
        %v3918 = vld [vmem:[%s9 + $0xba8] sm:$0xff]
        %v3919 = vld [vmem:[%s9 + $0xbb0] sm:$0xff]
        %v3920 = vld [vmem:[%s9 + $0xbb8] sm:$0xff]
        %v3921 = vld [vmem:[%s9 + $0xbc0] sm:$0xff]
        %v3922 = vld [vmem:[%s9 + $0xbc8] sm:$0xff]
        %v3923 = vld [vmem:[%s9 + $0xbd0] sm:$0xff]
        %v3924 = vld [vmem:[%s9 + $0xbd8] sm:$0xff]
        %v3925 = vld [vmem:[%s9 + $0xbe0] sm:$0xff]
        %v3926 = vld [vmem:[%s9 + $0xbe8] sm:$0xff]
        %v3927 = vld [vmem:[%s9 + $0xbf0] sm:$0xff]
        %v3928 = vld [vmem:[%s9 + $0xbf8] sm:$0xff]
        %v3929 = vld [vmem:[%s9 + $0xc00] sm:$0xff]
        %v3930 = vld [vmem:[%s9 + $0xc08] sm:$0xff]
        %v3931 = vld [vmem:[%s9 + $0xc10] sm:$0xff]
        %v3932 = vld [vmem:[%s9 + $0xc18] sm:$0xff]
        %v3933 = vld [vmem:[%s9 + $0xc20] sm:$0xff]
        %v3934 = vld [vmem:[%s9 + $0xc28] sm:$0xff]
        %v3935 = vld [vmem:[%s9 + $0xc30] sm:$0xff]
        %v3936 = vld [vmem:[%s9 + $0xc38] sm:$0xff]
        %v3937 = vld [vmem:[%s9 + $0xc40] sm:$0xff]
        %v3938 = vld [vmem:[%s9 + $0xc48] sm:$0xff]
        %v3939 = vld [vmem:[%s9 + $0xc50] sm:$0xff]
        %v3940 = vld [vmem:[%s9 + $0xc58] sm:$0xff]
        %v3941 = vld [vmem:[%s9 + $0xc60] sm:$0xff]
        %v3942 = vld [vmem:[%s9 + $0xc68] sm:$0xff]
        %v3943 = vld [vmem:[%s9 + $0xc70] sm:$0xff]
        %v3944 = vld [vmem:[%s9 + $0xc78] sm:$0xff]
        %v3945 = vld [vmem:[%s9 + $0xc80] sm:$0xff]
        %v3946 = vld [vmem:[%s9 + $0xc88] sm:$0xff]
        %v3947 = vld [vmem:[%s9 + $0xc90] sm:$0xff]
        %v3948 = vld [vmem:[%s9 + $0xc98] sm:$0xff]
        %v3949 = vld [vmem:[%s9 + $0xca0] sm:$0xff]
        %v3950 = vld [vmem:[%s9 + $0xca8] sm:$0xff]
        %v3951 = vld [vmem:[%s9 + $0xcb0] sm:$0xff]
        %v3952 = vld [vmem:[%s9 + $0xcb8] sm:$0xff]
        %v3953 = vld [vmem:[%s9 + $0xcc0] sm:$0xff]
        %v3954 = vld [vmem:[%s9 + $0xcc8] sm:$0xff]
        %v3955 = vld [vmem:[%s9 + $0xcd0] sm:$0xff]
        %v3956 = vld [vmem:[%s9 + $0xcd8] sm:$0xff]
        %v3957 = vld [vmem:[%s9 + $0xce0] sm:$0xff]
        %v3958 = vld [vmem:[%s9 + $0xce8] sm:$0xff]
        %v3959 = vld [vmem:[%s9 + $0xcf0] sm:$0xff]
        %v3960 = vld [vmem:[%s9 + $0xcf8] sm:$0xff]
        %v3961 = vld [vmem:[%s9 + $0xd00] sm:$0xff]
        %v3962 = vld [vmem:[%s9 + $0xd08] sm:$0xff]
        %v3963 = vld [vmem:[%s9 + $0xd10] sm:$0xff]
        %v3964 = vld [vmem:[%s9 + $0xd18] sm:$0xff]
        %v3965 = vld [vmem:[%s9 + $0xd20] sm:$0xff]
        %v3966 = vld [vmem:[%s9 + $0xd28] sm:$0xff]
        %v3967 = vld [vmem:[%s9 + $0xd30] sm:$0xff]
        %v3968 = vld [vmem:[%s9 + $0xd38] sm:$0xff]
        %v3969 = vld [vmem:[%s9 + $0xd40] sm:$0xff]
        %v3970 = vld [vmem:[%s9 + $0xd48] sm:$0xff]
        %v3971 = vld [vmem:[%s9 + $0xd50] sm:$0xff]
        %v3972 = vld [vmem:[%s9 + $0xd58] sm:$0xff]
        %v3973 = vld [vmem:[%s9 + $0xd60] sm:$0xff]
        %v3974 = vld [vmem:[%s9 + $0xd68] sm:$0xff]
        %v3975 = vld [vmem:[%s9 + $0xd70] sm:$0xff]
        %v3976 = vld [vmem:[%s9 + $0xd78] sm:$0xff]
        %v3977 = vld [vmem:[%s9 + $0xd80] sm:$0xff]
        %v3978 = vld [vmem:[%s9 + $0xd88] sm:$0xff]
        %v3979 = vld [vmem:[%s9 + $0xd90] sm:$0xff]
        %v3980 = vld [vmem:[%s9 + $0xd98] sm:$0xff]
        %v3981 = vld [vmem:[%s9 + $0xda0] sm:$0xff]
        %v3982 = vld [vmem:[%s9 + $0xda8] sm:$0xff]
        %v3983 = vld [vmem:[%s9 + $0xdb0] sm:$0xff]
        %v3984 = vld [vmem:[%s9 + $0xdb8] sm:$0xff]
        %v3985 = vld [vmem:[%s9 + $0xdc0] sm:$0xff]
        %v3986 = vld [vmem:[%s9 + $0xdc8] sm:$0xff]
        %v3987 = vld [vmem:[%s9 + $0xdd0] sm:$0xff]
        %v3988 = vld [vmem:[%s9 + $0xdd8] sm:$0xff]
        %v3989 = vld [vmem:[%s9 + $0xde0] sm:$0xff]
        %v3990 = vld [vmem:[%s9 + $0xde8] sm:$0xff]
        %v3991 = vld [vmem:[%s9 + $0xdf0] sm:$0xff]
        %v3992 = vld [vmem:[%s9 + $0xdf8] sm:$0xff]
        %v3993 = vld [vmem:[%s9 + $0xe00] sm:$0xff]
        %v3994 = vld [vmem:[%s9 + $0xe08] sm:$0xff]
        %v3995 = vld [vmem:[%s9 + $0xe10] sm:$0xff]
        %v3996 = vld [vmem:[%s9 + $0xe18] sm:$0xff]
        %v3997 = vld [vmem:[%s9 + $0xe20] sm:$0xff]
        %v3998 = vld [vmem:[%s9 + $0xe28] sm:$0xff]
        %v3999 = vld [vmem:[%s9 + $0xe30] sm:$0xff]
        %v4000 = vld [vmem:[%s9 + $0xe38] sm:$0xff]
        %v4001 = vld [vmem:[%s9 + $0xe40] sm:$0xff]
        %v4002 = vld [vmem:[%s9 + $0xe48] sm:$0xff]
        %v4003 = vld [vmem:[%s9 + $0xe50] sm:$0xff]
        %v4004 = vld [vmem:[%s9 + $0xe58] sm:$0xff]
        %v4005 = vld [vmem:[%s9 + $0xe60] sm:$0xff]
        %v4006 = vld [vmem:[%s9 + $0xe68] sm:$0xff]
        %v4007 = vld [vmem:[%s9 + $0xe70] sm:$0xff]
        %v4008 = vld [vmem:[%s9 + $0xe78] sm:$0xff]
        %v4009 = vld [vmem:[%s9 + $0xe80] sm:$0xff]
        %v4010 = vld [vmem:[%s9 + $0xe88] sm:$0xff]
        %v4011 = vld [vmem:[%s9 + $0xe90] sm:$0xff]
        %v4012 = vld [vmem:[%s9 + $0xe98] sm:$0xff]
        %v4013 = vld [vmem:[%s9 + $0xea0] sm:$0xff]
        %v4014 = vld [vmem:[%s9 + $0xea8] sm:$0xff]
        %v4015 = vld [vmem:[%s9 + $0xeb0] sm:$0xff]
        %v4016 = vld [vmem:[%s9 + $0xeb8] sm:$0xff]
        %v4017 = vld [vmem:[%s9 + $0xec0] sm:$0xff]
        %v4018 = vld [vmem:[%s9 + $0xec8] sm:$0xff]
        %v4019 = vld [vmem:[%s9 + $0xed0] sm:$0xff]
        %v4020 = vld [vmem:[%s9 + $0xed8] sm:$0xff]
        %v4021 = vld [vmem:[%s9 + $0xee0] sm:$0xff]
        %v4022 = vld [vmem:[%s9 + $0xee8] sm:$0xff]
        %v4023 = vld [vmem:[%s9 + $0xef0] sm:$0xff]
        %v4024 = vld [vmem:[%s9 + $0xef8] sm:$0xff]
        %v4025 = vld [vmem:[%s9 + $0xf00] sm:$0xff]
        %v4026 = vld [vmem:[%s9 + $0xf08] sm:$0xff]
        %v4027 = vld [vmem:[%s9 + $0xf10] sm:$0xff]
        %v4028 = vld [vmem:[%s9 + $0xf18] sm:$0xff]
        %v4029 = vld [vmem:[%s9 + $0xf20] sm:$0xff]
        %v4030 = vld [vmem:[%s9 + $0xf28] sm:$0xff]
        %v4031 = vld [vmem:[%s9 + $0xf30] sm:$0xff]
        %v4032 = vld [vmem:[%s9 + $0xf38] sm:$0xff]
        %v4033 = vld [vmem:[%s9 + $0xf40] sm:$0xff]
        %v4034 = vld [vmem:[%s9 + $0xf48] sm:$0xff]
        %v4035 = vld [vmem:[%s9 + $0xf50] sm:$0xff]
        %v4036 = vld [vmem:[%s9 + $0xf58] sm:$0xff]
        %v4037 = vld [vmem:[%s9 + $0xf60] sm:$0xff]
        %v4038 = vld [vmem:[%s9 + $0xf68] sm:$0xff]
        %v4039 = vld [vmem:[%s9 + $0xf70] sm:$0xff]
        %v4040 = vld [vmem:[%s9 + $0xf78] sm:$0xff]
        %v4041 = vld [vmem:[%s9 + $0xf80] sm:$0xff]
        %v4042 = vld [vmem:[%s9 + $0xf88] sm:$0xff]
        %v4043 = vld [vmem:[%s9 + $0xf90] sm:$0xff]
        %v4044 = vld [vmem:[%s9 + $0xf98] sm:$0xff]
        %v4045 = vld [vmem:[%s9 + $0xfa0] sm:$0xff]
        %v4046 = vld [vmem:[%s9 + $0xfa8] sm:$0xff]
        %v4047 = vld [vmem:[%s9 + $0xfb0] sm:$0xff]
        %v4048 = vld [vmem:[%s9 + $0xfb8] sm:$0xff]
        %v4049 = vld [vmem:[%s9 + $0xfc0] sm:$0xff]
        %v4050 = vld [vmem:[%s9 + $0xfc8] sm:$0xff]
        %v4051 = vld [vmem:[%s9 + $0xfd0] sm:$0xff]
        %v4052 = vld [vmem:[%s9 + $0xfd8] sm:$0xff]
        %v4053 = vld [vmem:[%s9 + $0xfe0] sm:$0xff]
        %v4054 = vld [vmem:[%s9 + $0xfe8] sm:$0xff]
        %v4055 = vld [vmem:[%s9 + $0xff0] sm:$0xff]
        %v4056 = vld [vmem:[%s9 + $0xff8] sm:$0xff]
        %v4057 = vld [vmem:[%s9 + $0x1000] sm:$0xff]
        %v4058 = vld [vmem:[%s9 + $0x1008] sm:$0xff]
        %v4059 = vld [vmem:[%s9 + $0x1010] sm:$0xff]
        %v4060 = vld [vmem:[%s9 + $0x1018] sm:$0xff]
        %v4061 = vld [vmem:[%s9 + $0x1020] sm:$0xff]
        %v4062 = vld [vmem:[%s9 + $0x1028] sm:$0xff]
        %v4063 = vld [vmem:[%s9 + $0x1030] sm:$0xff]
        %v4064 = vld [vmem:[%s9 + $0x1038] sm:$0xff]
        %v4065 = vld [vmem:[%s9 + $0x1040] sm:$0xff]
        %v4066 = vld [vmem:[%s9 + $0x1048] sm:$0xff]
        %v4067 = vld [vmem:[%s9 + $0x1050] sm:$0xff]
        %v4068 = vld [vmem:[%s9 + $0x1058] sm:$0xff]
        %v4069 = vld [vmem:[%s9 + $0x1060] sm:$0xff]
        %v4070 = vld [vmem:[%s9 + $0x1068] sm:$0xff]
        %v4071 = vld [vmem:[%s9 + $0x1070] sm:$0xff]
        %v4072 = vld [vmem:[%s9 + $0x1078] sm:$0xff]
        %v4073 = vld [vmem:[%s9 + $0x1080] sm:$0xff]
        %v4074 = vld [vmem:[%s9 + $0x1088] sm:$0xff]
        %v4075 = vld [vmem:[%s9 + $0x1090] sm:$0xff]
        %v4076 = vld [vmem:[%s9 + $0x1098] sm:$0xff]
        %v4077 = vld [vmem:[%s9 + $0x10a0] sm:$0xff]
        %v4078 = vld [vmem:[%s9 + $0x10a8] sm:$0xff]
        %v4079 = vld [vmem:[%s9 + $0x10b0] sm:$0xff]
        %v4080 = vld [vmem:[%s9 + $0x10b8] sm:$0xff]
        %v4081 = vld [vmem:[%s9 + $0x10c0] sm:$0xff]
        %v4082 = vld [vmem:[%s9 + $0x10c8] sm:$0xff]
        %v4083 = vld [vmem:[%s9 + $0x10d0] sm:$0xff]
        %v4084 = vld [vmem:[%s9 + $0x10d8] sm:$0xff]
        %v4085 = vld [vmem:[%s9 + $0x10e0] sm:$0xff]
        %v4086 = vld [vmem:[%s9 + $0x10e8] sm:$0xff]
        %v4087 = vld [vmem:[%s9 + $0x10f0] sm:$0xff]
        %v4088 = vld [vmem:[%s9 + $0x10f8] sm:$0xff]
        %v4089 = vld [vmem:[%s9 + $0x1100] sm:$0xff]
        %v4090 = vld [vmem:[%s9 + $0x1108] sm:$0xff]
        %v4091 = vld [vmem:[%s9 + $0x1110] sm:$0xff]
        %v4092 = vld [vmem:[%s9 + $0x1118] sm:$0xff]
        %v4093 = vld [vmem:[%s9 + $0x1120] sm:$0xff]
        %v4094 = vld [vmem:[%s9 + $0x1128] sm:$0xff]
        %v4095 = vld [vmem:[%s9 + $0x1130] sm:$0xff]
        %v4096 = vld [vmem:[%s9 + $0x1138] sm:$0xff]
        %v4097 = vld [vmem:[%s9 + $0x1140] sm:$0xff]
        %v4098 = vld [vmem:[%s9 + $0x1148] sm:$0xff]
        %v4099 = vld [vmem:[%s9 + $0x1150] sm:$0xff]
        %v4100 = vld [vmem:[%s9 + $0x1158] sm:$0xff]
        %v4101 = vld [vmem:[%s9 + $0x1160] sm:$0xff]
        %v4102 = vld [vmem:[%s9 + $0x1168] sm:$0xff]
        %v4103 = vld [vmem:[%s9 + $0x1170] sm:$0xff]
        %v4104 = vld [vmem:[%s9 + $0x1178] sm:$0xff]
        %v4105 = vld [vmem:[%s9 + $0x1180] sm:$0xff]
        %v4106 = vld [vmem:[%s9 + $0x1188] sm:$0xff]
        %v4107 = vld [vmem:[%s9 + $0x1190] sm:$0xff]
        %v4108 = vld [vmem:[%s9 + $0x1198] sm:$0xff]
        %v4109 = vld [vmem:[%s9 + $0x11a0] sm:$0xff]
        %v4110 = vld [vmem:[%s9 + $0x11a8] sm:$0xff]
        %v4111 = vld [vmem:[%s9 + $0x11b0] sm:$0xff]
        %v4112 = vld [vmem:[%s9 + $0x11b8] sm:$0xff]
        %v4113 = vld [vmem:[%s9 + $0x11c0] sm:$0xff]
        %v4114 = vld [vmem:[%s9 + $0x11c8] sm:$0xff]
        %v4115 = vld [vmem:[%s9 + $0x11d0] sm:$0xff]
        %v4116 = vld [vmem:[%s9 + $0x11d8] sm:$0xff]
        %v4117 = vld [vmem:[%s9 + $0x11e0] sm:$0xff]
        %v4118 = vld [vmem:[%s9 + $0x11e8] sm:$0xff]
        %v4119 = vld [vmem:[%s9 + $0x11f0] sm:$0xff]
        %v4120 = vld [vmem:[%s9 + $0x11f8] sm:$0xff]
        %v4121 = vld [vmem:[%s9 + $0x1200] sm:$0xff]
        %v4122 = vld [vmem:[%s9 + $0x1208] sm:$0xff]
        %v4123 = vld [vmem:[%s9 + $0x1210] sm:$0xff]
        %v4124 = vld [vmem:[%s9 + $0x1218] sm:$0xff]
        %v4125 = vld [vmem:[%s9 + $0x1220] sm:$0xff]
        %v4126 = vld [vmem:[%s9 + $0x1228] sm:$0xff]
        %v4127 = vld [vmem:[%s9 + $0x1230] sm:$0xff]
        %v4128 = vld [vmem:[%s9 + $0x1238] sm:$0xff]
        %v4129 = vld [vmem:[%s9 + $0x1240] sm:$0xff]
        %v4130 = vld [vmem:[%s9 + $0x1248] sm:$0xff]
        %v4131 = vld [vmem:[%s9 + $0x1250] sm:$0xff]
        %v4132 = vld [vmem:[%s9 + $0x1258] sm:$0xff]
        %v4133 = vld [vmem:[%s9 + $0x1260] sm:$0xff]
        %v4134 = vld [vmem:[%s9 + $0x1268] sm:$0xff]
        %v4135 = vld [vmem:[%s9 + $0x1270] sm:$0xff]
        %v4136 = vld [vmem:[%s9 + $0x1278] sm:$0xff]
        %v4137 = vld [vmem:[%s9 + $0x1280] sm:$0xff]
        %v4138 = vld [vmem:[%s9 + $0x1288] sm:$0xff]
        %v4139 = vld [vmem:[%s9 + $0x1290] sm:$0xff]
        %v4140 = vld [vmem:[%s9 + $0x1298] sm:$0xff]
        %v4141 = vld [vmem:[%s9 + $0x12a0] sm:$0xff]
        %v4142 = vld [vmem:[%s9 + $0x12a8] sm:$0xff]
        %v4143 = vld [vmem:[%s9 + $0x12b0] sm:$0xff]
        %v4144 = vld [vmem:[%s9 + $0x12b8] sm:$0xff]
        %v4145 = vld [vmem:[%s9 + $0x12c0] sm:$0xff]
        %v4146 = vld [vmem:[%s9 + $0x12c8] sm:$0xff]
        %v4147 = vld [vmem:[%s9 + $0x12d0] sm:$0xff]
        %v4148 = vld [vmem:[%s9 + $0x12d8] sm:$0xff]
        %v4149 = vld [vmem:[%s9 + $0x12e0] sm:$0xff]
        %v4150 = vld [vmem:[%s9 + $0x12e8] sm:$0xff]
        %v4151 = vld [vmem:[%s9 + $0x12f0] sm:$0xff]
        %v4152 = vld [vmem:[%s9 + $0x12f8] sm:$0xff]
        %v4153 = vld [vmem:[%s9 + $0x1300] sm:$0xff]
        %v4154 = vld [vmem:[%s9 + $0x1308] sm:$0xff]
        %v4155 = vld [vmem:[%s9 + $0x1310] sm:$0xff]
        %v4156 = vld [vmem:[%s9 + $0x1318] sm:$0xff]
        %v4157 = vld [vmem:[%s9 + $0x1320] sm:$0xff]
        %v4158 = vld [vmem:[%s9 + $0x1328] sm:$0xff]
        %v4159 = vld [vmem:[%s9 + $0x1330] sm:$0xff]
        %v4160 = vld [vmem:[%s9 + $0x1338] sm:$0xff]
        %v4161 = vld [vmem:[%s9 + $0x1340] sm:$0xff]
        %v4162 = vld [vmem:[%s9 + $0x1348] sm:$0xff]
        %v4163 = vld [vmem:[%s9 + $0x1350] sm:$0xff]
        %v4164 = vld [vmem:[%s9 + $0x1358] sm:$0xff]
        %v4165 = vld [vmem:[%s9 + $0x1360] sm:$0xff]
        %v4166 = vld [vmem:[%s9 + $0x1368] sm:$0xff]
        %v4167 = vld [vmem:[%s9 + $0x1370] sm:$0xff]
        %v4168 = vld [vmem:[%s9 + $0x1378] sm:$0xff]
        %v4169 = vld [vmem:[%s9 + $0x1380] sm:$0xff]
        %v4170 = vld [vmem:[%s9 + $0x1388] sm:$0xff]
        %v4171 = vld [vmem:[%s9 + $0x1390] sm:$0xff]
        %v4172 = vld [vmem:[%s9 + $0x1398] sm:$0xff]
        %v4173 = vld [vmem:[%s9 + $0x13a0] sm:$0xff]
        %v4174 = vld [vmem:[%s9 + $0x13a8] sm:$0xff]
        %v4175 = vld [vmem:[%s9 + $0x13b0] sm:$0xff]
        %v4176 = vld [vmem:[%s9 + $0x13b8] sm:$0xff]
        %v4177 = vld [vmem:[%s9 + $0x13c0] sm:$0xff]
        %v4178 = vld [vmem:[%s9 + $0x13c8] sm:$0xff]
        %v4179 = vld [vmem:[%s9 + $0x13d0] sm:$0xff]
        %v4180 = vld [vmem:[%s9 + $0x13d8] sm:$0xff]
        %v4181 = vld [vmem:[%s9 + $0x13e0] sm:$0xff]
        %v4182 = vld [vmem:[%s9 + $0x13e8] sm:$0xff]
        %v4183 = vld [vmem:[%s9 + $0x13f0] sm:$0xff]
        %v4184 = vld [vmem:[%s9 + $0x13f8] sm:$0xff]
        %v4185 = vld [vmem:[%s10] sm:$0xf]
        %v4188 = vlaneseq
        %v4189 = vshrl.u32 %v4188, 7
        %v4190 = vsub.s32 0, %v4189
        %v4191 = vrot.slane %v3543, %v4190
        %v4192 = vlaneseq
        %v4193 = vshrl.u32 %v4192, 7
        %v4194 = vsub.s32 1, %v4193
        %v4195 = vrot.slane %v3543, %v4194
        %v4196 = vlaneseq
        %v4197 = vshrl.u32 %v4196, 7
        %v4198 = vsub.s32 2, %v4197
        %v4199 = vrot.slane %v3543, %v4198
        %v4200 = vlaneseq
        %v4201 = vshrl.u32 %v4200, 7
        %v4202 = vsub.s32 3, %v4201
        %v4203 = vrot.slane %v3543, %v4202
        %v4204 = vlaneseq
        %v4205 = vshrl.u32 %v4204, 7
        %v4206 = vsub.s32 4, %v4205
        %v4207 = vrot.slane %v3543, %v4206
        %v4208 = vlaneseq
        %v4209 = vshrl.u32 %v4208, 7
        %v4210 = vsub.s32 5, %v4209
        %v4211 = vrot.slane %v3543, %v4210
        %v4212 = vlaneseq
        %v4213 = vshrl.u32 %v4212, 7
        %v4214 = vsub.s32 6, %v4213
        %v4215 = vrot.slane %v3543, %v4214
        %v4216 = vlaneseq
        %v4217 = vshrl.u32 %v4216, 7
        %v4218 = vsub.s32 7, %v4217
        %v4219 = vrot.slane %v3543, %v4218
        %v4220 = vlaneseq
        %v4221 = vshrl.u32 %v4220, 7
        %v4222 = vsub.s32 0, %v4221
        %v4223 = vrot.slane %v3544, %v4222
        %v4224 = vlaneseq
        %v4225 = vshrl.u32 %v4224, 7
        %v4226 = vsub.s32 1, %v4225
        %v4227 = vrot.slane %v3544, %v4226
        %v4239 = vlaneseq
        %v4240 = vshrl.u32 %v4239, 7
        %v4241 = vsub.s32 0, %v4240
        %v4242 = vrot.slane %v4185, %v4241
        %v4243 = vlaneseq
        %v4244 = vshrl.u32 %v4243, 7
        %v4245 = vsub.s32 1, %v4244
        %v4246 = vrot.slane %v4185, %v4245
        %v4247 = vlaneseq
        %v4248 = vshrl.u32 %v4247, 7
        %v4249 = vsub.s32 2, %v4248
        %v4250 = vrot.slane %v4185, %v4249
        %v4251 = vlaneseq
        %v4252 = vshrl.u32 %v4251, 7
        %v4253 = vsub.s32 3, %v4252
        %v4254 = vrot.slane %v4185, %v4253
        %4259 = vmatprep.subr.mxu0 %v3546
        %4260 = vmatpush1.msra.mxu0 %v3545
        %4261 = vmatprep.subr.mxu0 %v3550
        %4262 = vmatpush1.msra.mxu0 %v3549
        %4263 = vmatprep.subr.mxu0 %v3554
        %4264 = vmatpush1.msra.mxu0 %v3553
        %4265 = vmatprep.subr.mxu0 %v3558
        %4266 = vmatpush1.msra.mxu0 %v3557
        %4267 = vmatprep.subr.mxu0 %v3562
        %4268 = vmatpush1.msra.mxu0 %v3561
        %4269 = vmatprep.subr.mxu0 %v3566
        %4270 = vmatpush1.msra.mxu0 %v3565
        %4271 = vmatprep.subr.mxu0 %v3570
        %4272 = vmatpush1.msra.mxu0 %v3569
        %4273 = vmatprep.subr.mxu0 %v3574
        %4274 = vmatpush1.msra.mxu0 %v3573
        %4275 = vmatprep.subr.mxu0 %v3578
        %4276 = vmatpush1.msra.mxu0 %v3577
        %4277 = vmatprep.subr.mxu0 %v3582
        %4278 = vmatpush1.msra.mxu0 %v3581
        %4279 = vmatprep.subr.mxu0 %v3586
        %4280 = vmatpush1.msra.mxu0 %v3585
        %4281 = vmatprep.subr.mxu0 %v3590
        %4282 = vmatpush1.msra.mxu0 %v3589
        %4283 = vmatprep.subr.mxu0 %v3594
        %4284 = vmatpush1.msra.mxu0 %v3593
        %4285 = vmatprep.subr.mxu0 %v3598
        %4286 = vmatpush1.msra.mxu0 %v3597
        %4287 = vmatprep.subr.mxu0 %v3602
        %4288 = vmatpush1.msra.mxu0 %v3601
        %4289 = vmatprep.subr.mxu0 %v3606
        %4290 = vmatpush1.msra.mxu0 %v3605
        %4291 = vmatprep.subr.mxu0 %v3610
        %4292 = vmatpush1.msra.mxu0 %v3609
        %4293 = vmatprep.subr.mxu0 %v3614
        %4294 = vmatpush1.msra.mxu0 %v3613
        %4295 = vmatprep.subr.mxu0 %v3618
        %4296 = vmatpush1.msra.mxu0 %v3617
        %4297 = vmatprep.subr.mxu0 %v3622
        %4298 = vmatpush1.msra.mxu0 %v3621
        %4299 = vmatprep.subr.mxu0 %v3626
        %4300 = vmatpush1.msra.mxu0 %v3625
        %4301 = vmatprep.subr.mxu0 %v3630
        %4302 = vmatpush1.msra.mxu0 %v3629
        %4303 = vmatprep.subr.mxu0 %v3634
        %4304 = vmatpush1.msra.mxu0 %v3633
        %4305 = vmatprep.subr.mxu0 %v3638
        %4306 = vmatpush1.msra.mxu0 %v3637
        %4307 = vmatprep.subr.mxu0 %v3642
        %4308 = vmatpush1.msra.mxu0 %v3641
        %4309 = vmatprep.subr.mxu0 %v3646
        %4310 = vmatpush1.msra.mxu0 %v3645
        %4311 = vmatprep.subr.mxu0 %v3650
        %4312 = vmatpush1.msra.mxu0 %v3649
        %4313 = vmatprep.subr.mxu0 %v3654
        %4314 = vmatpush1.msra.mxu0 %v3653
        %4315 = vmatprep.subr.mxu0 %v3658
        %4316 = vmatpush1.msra.mxu0 %v3657
        %4317 = vmatprep.subr.mxu0 %v3662
        %4318 = vmatpush1.msra.mxu0 %v3661
        %4319 = vmatprep.subr.mxu0 %v3666
        %4320 = vmatpush1.msra.mxu0 %v3665
        %4321 = vmatprep.subr.mxu0 %v3670
        %4322 = vmatpush1.msra.mxu0 %v3669
        %4323 = vmatprep.mubr.f32.mxu0 %v4195
        %4324 = vmatmul.mubr.f32.gmra.mrb[0].mxu0 %v4191
        %v4325 = vpop.f32.mrb[0].mxu0
        %v4326 = vadd.f32 %v4242, %v4325
        %v4327 = vpop.f32.mrb[0].mxu0
        %v4328 = vadd.f32 %v4246, %v4327
        %4329 = vdwg.mxu0
        %4330 = vmatprep.subr.mxu0 %v3674
        %4331 = vmatpush1.msra.mxu0 %v3673
        %4332 = vmatprep.subr.mxu0 %v3678
        %4333 = vmatpush1.msra.mxu0 %v3677
        %4334 = vmatprep.subr.mxu0 %v3682
        %4335 = vmatpush1.msra.mxu0 %v3681
        %4336 = vmatprep.subr.mxu0 %v3686
        %4337 = vmatpush1.msra.mxu0 %v3685
        %4338 = vmatprep.subr.mxu0 %v3690
        %4339 = vmatpush1.msra.mxu0 %v3689
        %4340 = vmatprep.subr.mxu0 %v3694
        %4341 = vmatpush1.msra.mxu0 %v3693
        %4342 = vmatprep.subr.mxu0 %v3698
        %4343 = vmatpush1.msra.mxu0 %v3697
        %4344 = vmatprep.subr.mxu0 %v3702
        %4345 = vmatpush1.msra.mxu0 %v3701
        %4346 = vmatprep.subr.mxu0 %v3706
        %4347 = vmatpush1.msra.mxu0 %v3705
        %4348 = vmatprep.subr.mxu0 %v3710
        %4349 = vmatpush1.msra.mxu0 %v3709
        %4350 = vmatprep.subr.mxu0 %v3714
        %4351 = vmatpush1.msra.mxu0 %v3713
        %4352 = vmatprep.subr.mxu0 %v3718
        %4353 = vmatpush1.msra.mxu0 %v3717
        %4354 = vmatprep.subr.mxu0 %v3722
        %4355 = vmatpush1.msra.mxu0 %v3721
        %4356 = vmatprep.subr.mxu0 %v3726
        %4357 = vmatpush1.msra.mxu0 %v3725
        %4358 = vmatprep.subr.mxu0 %v3730
        %4359 = vmatpush1.msra.mxu0 %v3729
        %4360 = vmatprep.subr.mxu0 %v3734
        %4361 = vmatpush1.msra.mxu0 %v3733
        %4362 = vmatprep.subr.mxu0 %v3738
        %4363 = vmatpush1.msra.mxu0 %v3737
        %4364 = vmatprep.subr.mxu0 %v3742
        %4365 = vmatpush1.msra.mxu0 %v3741
        %4366 = vmatprep.subr.mxu0 %v3746
        %4367 = vmatpush1.msra.mxu0 %v3745
        %4368 = vmatprep.subr.mxu0 %v3750
        %4369 = vmatpush1.msra.mxu0 %v3749
        %4370 = vmatprep.subr.mxu0 %v3754
        %4371 = vmatpush1.msra.mxu0 %v3753
        %4372 = vmatprep.subr.mxu0 %v3758
        %4373 = vmatpush1.msra.mxu0 %v3757
        %4374 = vmatprep.subr.mxu0 %v3762
        %4375 = vmatpush1.msra.mxu0 %v3761
        %4376 = vmatprep.subr.mxu0 %v3766
        %4377 = vmatpush1.msra.mxu0 %v3765
        %4378 = vmatprep.subr.mxu0 %v3770
        %4379 = vmatpush1.msra.mxu0 %v3769
        %4380 = vmatprep.subr.mxu0 %v3774
        %4381 = vmatpush1.msra.mxu0 %v3773
        %4382 = vmatprep.subr.mxu0 %v3778
        %4383 = vmatpush1.msra.mxu0 %v3777
        %4384 = vmatprep.subr.mxu0 %v3782
        %4385 = vmatpush1.msra.mxu0 %v3781
        %4386 = vmatprep.subr.mxu0 %v3786
        %4387 = vmatpush1.msra.mxu0 %v3785
        %4388 = vmatprep.subr.mxu0 %v3790
        %4389 = vmatpush1.msra.mxu0 %v3789
        %4390 = vmatprep.subr.mxu0 %v3794
        %4391 = vmatpush1.msra.mxu0 %v3793
        %4392 = vmatprep.subr.mxu0 %v3798
        %4393 = vmatpush1.msra.mxu0 %v3797
        %4394 = vmatprep.mubr.f32.mxu0 %v4203
        %4395 = vmatmul.mubr.f32.gmra.mrb[0].mxu0 %v4199
        %v4396 = vpop.f32.mrb[0].mxu0
        %v4397 = vadd.f32 %v4326, %v4396
        %v4398 = vpop.f32.mrb[0].mxu0
        %v4399 = vadd.f32 %v4328, %v4398
        %4400 = vdwg.mxu0
        %4401 = vmatprep.subr.mxu0 %v3802
        %4402 = vmatpush1.msra.mxu0 %v3801
        %4403 = vmatprep.subr.mxu0 %v3806
        %4404 = vmatpush1.msra.mxu0 %v3805
        %4405 = vmatprep.subr.mxu0 %v3810
        %4406 = vmatpush1.msra.mxu0 %v3809
        %4407 = vmatprep.subr.mxu0 %v3814
        %4408 = vmatpush1.msra.mxu0 %v3813
        %4409 = vmatprep.subr.mxu0 %v3818
        %4410 = vmatpush1.msra.mxu0 %v3817
        %4411 = vmatprep.subr.mxu0 %v3822
        %4412 = vmatpush1.msra.mxu0 %v3821
        %4413 = vmatprep.subr.mxu0 %v3826
        %4414 = vmatpush1.msra.mxu0 %v3825
        %4415 = vmatprep.subr.mxu0 %v3830
        %4416 = vmatpush1.msra.mxu0 %v3829
        %4417 = vmatprep.subr.mxu0 %v3834
        %4418 = vmatpush1.msra.mxu0 %v3833
        %4419 = vmatprep.subr.mxu0 %v3838
        %4420 = vmatpush1.msra.mxu0 %v3837
        %4421 = vmatprep.subr.mxu0 %v3842
        %4422 = vmatpush1.msra.mxu0 %v3841
        %4423 = vmatprep.subr.mxu0 %v3846
        %4424 = vmatpush1.msra.mxu0 %v3845
        %4425 = vmatprep.subr.mxu0 %v3850
        %4426 = vmatpush1.msra.mxu0 %v3849
        %4427 = vmatprep.subr.mxu0 %v3854
        %4428 = vmatpush1.msra.mxu0 %v3853
        %4429 = vmatprep.subr.mxu0 %v3858
        %4430 = vmatpush1.msra.mxu0 %v3857
        %4431 = vmatprep.subr.mxu0 %v3862
        %4432 = vmatpush1.msra.mxu0 %v3861
        %4433 = vmatprep.subr.mxu0 %v3866
        %4434 = vmatpush1.msra.mxu0 %v3865
        %4435 = vmatprep.subr.mxu0 %v3870
        %4436 = vmatpush1.msra.mxu0 %v3869
        %4437 = vmatprep.subr.mxu0 %v3874
        %4438 = vmatpush1.msra.mxu0 %v3873
        %4439 = vmatprep.subr.mxu0 %v3878
        %4440 = vmatpush1.msra.mxu0 %v3877
        %4441 = vmatprep.subr.mxu0 %v3882
        %4442 = vmatpush1.msra.mxu0 %v3881
        %4443 = vmatprep.subr.mxu0 %v3886
        %4444 = vmatpush1.msra.mxu0 %v3885
        %4445 = vmatprep.subr.mxu0 %v3890
        %4446 = vmatpush1.msra.mxu0 %v3889
        %4447 = vmatprep.subr.mxu0 %v3894
        %4448 = vmatpush1.msra.mxu0 %v3893
        %4449 = vmatprep.subr.mxu0 %v3898
        %4450 = vmatpush1.msra.mxu0 %v3897
        %4451 = vmatprep.subr.mxu0 %v3902
        %4452 = vmatpush1.msra.mxu0 %v3901
        %4453 = vmatprep.subr.mxu0 %v3906
        %4454 = vmatpush1.msra.mxu0 %v3905
        %4455 = vmatprep.subr.mxu0 %v3910
        %4456 = vmatpush1.msra.mxu0 %v3909
        %4457 = vmatprep.subr.mxu0 %v3914
        %4458 = vmatpush1.msra.mxu0 %v3913
        %4459 = vmatprep.subr.mxu0 %v3918
        %4460 = vmatpush1.msra.mxu0 %v3917
        %4461 = vmatprep.subr.mxu0 %v3922
        %4462 = vmatpush1.msra.mxu0 %v3921
        %4463 = vmatprep.subr.mxu0 %v3926
        %4464 = vmatpush1.msra.mxu0 %v3925
        %4465 = vmatprep.mubr.f32.mxu0 %v4211
        %4466 = vmatmul.mubr.f32.gmra.mrb[0].mxu0 %v4207
        %v4467 = vpop.f32.mrb[0].mxu0
        %v4468 = vadd.f32 %v4397, %v4467
        %v4469 = vpop.f32.mrb[0].mxu0
        %v4470 = vadd.f32 %v4399, %v4469
        %4471 = vdwg.mxu0
        %4472 = vmatprep.subr.mxu0 %v3930
        %4473 = vmatpush1.msra.mxu0 %v3929
        %4474 = vmatprep.subr.mxu0 %v3934
        %4475 = vmatpush1.msra.mxu0 %v3933
        %4476 = vmatprep.subr.mxu0 %v3938
        %4477 = vmatpush1.msra.mxu0 %v3937
        %4478 = vmatprep.subr.mxu0 %v3942
        %4479 = vmatpush1.msra.mxu0 %v3941
        %4480 = vmatprep.subr.mxu0 %v3946
        %4481 = vmatpush1.msra.mxu0 %v3945
        %4482 = vmatprep.subr.mxu0 %v3950
        %4483 = vmatpush1.msra.mxu0 %v3949
        %4484 = vmatprep.subr.mxu0 %v3954
        %4485 = vmatpush1.msra.mxu0 %v3953
        %4486 = vmatprep.subr.mxu0 %v3958
        %4487 = vmatpush1.msra.mxu0 %v3957
        %4488 = vmatprep.subr.mxu0 %v3962
        %4489 = vmatpush1.msra.mxu0 %v3961
        %4490 = vmatprep.subr.mxu0 %v3966
        %4491 = vmatpush1.msra.mxu0 %v3965
        %4492 = vmatprep.subr.mxu0 %v3970
        %4493 = vmatpush1.msra.mxu0 %v3969
        %4494 = vmatprep.subr.mxu0 %v3974
        %4495 = vmatpush1.msra.mxu0 %v3973
        %4496 = vmatprep.subr.mxu0 %v3978
        %4497 = vmatpush1.msra.mxu0 %v3977
        %4498 = vmatprep.subr.mxu0 %v3982
        %4499 = vmatpush1.msra.mxu0 %v3981
        %4500 = vmatprep.subr.mxu0 %v3986
        %4501 = vmatpush1.msra.mxu0 %v3985
        %4502 = vmatprep.subr.mxu0 %v3990
        %4503 = vmatpush1.msra.mxu0 %v3989
        %4504 = vmatprep.subr.mxu0 %v3994
        %4505 = vmatpush1.msra.mxu0 %v3993
        %4506 = vmatprep.subr.mxu0 %v3998
        %4507 = vmatpush1.msra.mxu0 %v3997
        %4508 = vmatprep.subr.mxu0 %v4002
        %4509 = vmatpush1.msra.mxu0 %v4001
        %4510 = vmatprep.subr.mxu0 %v4006
        %4511 = vmatpush1.msra.mxu0 %v4005
        %4512 = vmatprep.subr.mxu0 %v4010
        %4513 = vmatpush1.msra.mxu0 %v4009
        %4514 = vmatprep.subr.mxu0 %v4014
        %4515 = vmatpush1.msra.mxu0 %v4013
        %4516 = vmatprep.subr.mxu0 %v4018
        %4517 = vmatpush1.msra.mxu0 %v4017
        %4518 = vmatprep.subr.mxu0 %v4022
        %4519 = vmatpush1.msra.mxu0 %v4021
        %4520 = vmatprep.subr.mxu0 %v4026
        %4521 = vmatpush1.msra.mxu0 %v4025
        %4522 = vmatprep.subr.mxu0 %v4030
        %4523 = vmatpush1.msra.mxu0 %v4029
        %4524 = vmatprep.subr.mxu0 %v4034
        %4525 = vmatpush1.msra.mxu0 %v4033
        %4526 = vmatprep.subr.mxu0 %v4038
        %4527 = vmatpush1.msra.mxu0 %v4037
        %4528 = vmatprep.subr.mxu0 %v4042
        %4529 = vmatpush1.msra.mxu0 %v4041
        %4530 = vmatprep.subr.mxu0 %v4046
        %4531 = vmatpush1.msra.mxu0 %v4045
        %4532 = vmatprep.subr.mxu0 %v4050
        %4533 = vmatpush1.msra.mxu0 %v4049
        %4534 = vmatprep.subr.mxu0 %v4054
        %4535 = vmatpush1.msra.mxu0 %v4053
        %4536 = vmatprep.mubr.f32.mxu0 %v4219
        %4537 = vmatmul.mubr.f32.gmra.mrb[0].mxu0 %v4215
        %v4538 = vpop.f32.mrb[0].mxu0
        %v4539 = vadd.f32 %v4468, %v4538
        %v4540 = vpop.f32.mrb[0].mxu0
        %v4541 = vadd.f32 %v4470, %v4540
        %4542 = vdwg.mxu0
        %4543 = vmatprep.subr.mxu0 %v4058
        %4544 = vmatpush1.msra.mxu0 %v4057
        %4545 = vmatprep.subr.mxu0 %v4062
        %4546 = vmatpush1.msra.mxu0 %v4061
        %4547 = vmatprep.subr.mxu0 %v4066
        %4548 = vmatpush1.msra.mxu0 %v4065
        %4549 = vmatprep.subr.mxu0 %v4070
        %4550 = vmatpush1.msra.mxu0 %v4069
        %4551 = vmatprep.subr.mxu0 %v4074
        %4552 = vmatpush1.msra.mxu0 %v4073
        %4553 = vmatprep.subr.mxu0 %v4078
        %4554 = vmatpush1.msra.mxu0 %v4077
        %4555 = vmatprep.subr.mxu0 %v4082
        %4556 = vmatpush1.msra.mxu0 %v4081
        %4557 = vmatprep.subr.mxu0 %v4086
        %4558 = vmatpush1.msra.mxu0 %v4085
        %4559 = vmatprep.subr.mxu0 %v4090
        %4560 = vmatpush1.msra.mxu0 %v4089
        %4561 = vmatprep.subr.mxu0 %v4094
        %4562 = vmatpush1.msra.mxu0 %v4093
        %4563 = vmatprep.subr.mxu0 %v4098
        %4564 = vmatpush1.msra.mxu0 %v4097
        %4565 = vmatprep.subr.mxu0 %v4102
        %4566 = vmatpush1.msra.mxu0 %v4101
        %4567 = vmatprep.subr.mxu0 %v4106
        %4568 = vmatpush1.msra.mxu0 %v4105
        %4569 = vmatprep.subr.mxu0 %v4110
        %4570 = vmatpush1.msra.mxu0 %v4109
        %4571 = vmatprep.subr.mxu0 %v4114
        %4572 = vmatpush1.msra.mxu0 %v4113
        %4573 = vmatprep.subr.mxu0 %v4118
        %4574 = vmatpush1.msra.mxu0 %v4117
        %4575 = vmatprep.subr.mxu0 %v4122
        %4576 = vmatpush1.msra.mxu0 %v4121
        %4577 = vmatprep.subr.mxu0 %v4126
        %4578 = vmatpush1.msra.mxu0 %v4125
        %4579 = vmatprep.subr.mxu0 %v4130
        %4580 = vmatpush1.msra.mxu0 %v4129
        %4581 = vmatprep.subr.mxu0 %v4134
        %4582 = vmatpush1.msra.mxu0 %v4133
        %4583 = vmatprep.subr.mxu0 %v4138
        %4584 = vmatpush1.msra.mxu0 %v4137
        %4585 = vmatprep.subr.mxu0 %v4142
        %4586 = vmatpush1.msra.mxu0 %v4141
        %4587 = vmatprep.subr.mxu0 %v4146
        %4588 = vmatpush1.msra.mxu0 %v4145
        %4589 = vmatprep.subr.mxu0 %v4150
        %4590 = vmatpush1.msra.mxu0 %v4149
        %4591 = vmatprep.subr.mxu0 %v4154
        %4592 = vmatpush1.msra.mxu0 %v4153
        %4593 = vmatprep.subr.mxu0 %v4158
        %4594 = vmatpush1.msra.mxu0 %v4157
        %4595 = vmatprep.subr.mxu0 %v4162
        %4596 = vmatpush1.msra.mxu0 %v4161
        %4597 = vmatprep.subr.mxu0 %v4166
        %4598 = vmatpush1.msra.mxu0 %v4165
        %4599 = vmatprep.subr.mxu0 %v4170
        %4600 = vmatpush1.msra.mxu0 %v4169
        %4601 = vmatprep.subr.mxu0 %v4174
        %4602 = vmatpush1.msra.mxu0 %v4173
        %4603 = vmatprep.subr.mxu0 %v4178
        %4604 = vmatpush1.msra.mxu0 %v4177
        %4605 = vmatprep.subr.mxu0 %v4182
        %4606 = vmatpush1.msra.mxu0 %v4181
        %4607 = vmatprep.mubr.f32.mxu0 %v4227
        %4608 = vmatmul.mubr.f32.gmra.mrb[0].mxu0 %v4223
        %v4609 = vpop.f32.mrb[0].mxu0
        %v4610 = vadd.f32 %v4539, %v4609
        %v4611 = vpop.f32.mrb[0].mxu0
        %v4612 = vadd.f32 %v4541, %v4611
        %4613 = vdwg.mxu0
        %4614 = vmatprep.subr.mxu0 %v3548
        %4615 = vmatpush1.msra.mxu0 %v3547
        %4616 = vmatprep.subr.mxu0 %v3552
        %4617 = vmatpush1.msra.mxu0 %v3551
        %4618 = vmatprep.subr.mxu0 %v3556
        %4619 = vmatpush1.msra.mxu0 %v3555
        %4620 = vmatprep.subr.mxu0 %v3560
        %4621 = vmatpush1.msra.mxu0 %v3559
        %4622 = vmatprep.subr.mxu0 %v3564
        %4623 = vmatpush1.msra.mxu0 %v3563
        %4624 = vmatprep.subr.mxu0 %v3568
        %4625 = vmatpush1.msra.mxu0 %v3567
        %4626 = vmatprep.subr.mxu0 %v3572
        %4627 = vmatpush1.msra.mxu0 %v3571
        %4628 = vmatprep.subr.mxu0 %v3576
        %4629 = vmatpush1.msra.mxu0 %v3575
        %4630 = vmatprep.subr.mxu0 %v3580
        %4631 = vmatpush1.msra.mxu0 %v3579
        %4632 = vmatprep.subr.mxu0 %v3584
        %4633 = vmatpush1.msra.mxu0 %v3583
        %4634 = vmatprep.subr.mxu0 %v3588
        %4635 = vmatpush1.msra.mxu0 %v3587
        %4636 = vmatprep.subr.mxu0 %v3592
        %4637 = vmatpush1.msra.mxu0 %v3591
        %4638 = vmatprep.subr.mxu0 %v3596
        %4639 = vmatpush1.msra.mxu0 %v3595
        %4640 = vmatprep.subr.mxu0 %v3600
        %4641 = vmatpush1.msra.mxu0 %v3599
        %4642 = vmatprep.subr.mxu0 %v3604
        %4643 = vmatpush1.msra.mxu0 %v3603
        %4644 = vmatprep.subr.mxu0 %v3608
        %4645 = vmatpush1.msra.mxu0 %v3607
        %4646 = vmatprep.subr.mxu0 %v3612
        %4647 = vmatpush1.msra.mxu0 %v3611
        %4648 = vmatprep.subr.mxu0 %v3616
        %4649 = vmatpush1.msra.mxu0 %v3615
        %4650 = vmatprep.subr.mxu0 %v3620
        %4651 = vmatpush1.msra.mxu0 %v3619
        %4652 = vmatprep.subr.mxu0 %v3624
        %4653 = vmatpush1.msra.mxu0 %v3623
        %4654 = vmatprep.subr.mxu0 %v3628
        %4655 = vmatpush1.msra.mxu0 %v3627
        %4656 = vmatprep.subr.mxu0 %v3632
        %4657 = vmatpush1.msra.mxu0 %v3631
        %4658 = vmatprep.subr.mxu0 %v3636
        %4659 = vmatpush1.msra.mxu0 %v3635
        %4660 = vmatprep.subr.mxu0 %v3640
        %4661 = vmatpush1.msra.mxu0 %v3639
        %4662 = vmatprep.subr.mxu0 %v3644
        %4663 = vmatpush1.msra.mxu0 %v3643
        %4664 = vmatprep.subr.mxu0 %v3648
        %4665 = vmatpush1.msra.mxu0 %v3647
        %4666 = vmatprep.subr.mxu0 %v3652
        %4667 = vmatpush1.msra.mxu0 %v3651
        %4668 = vmatprep.subr.mxu0 %v3656
        %4669 = vmatpush1.msra.mxu0 %v3655
        %4670 = vmatprep.subr.mxu0 %v3660
        %4671 = vmatpush1.msra.mxu0 %v3659
        %4672 = vmatprep.subr.mxu0 %v3664
        %4673 = vmatpush1.msra.mxu0 %v3663
        %4674 = vmatprep.subr.mxu0 %v3668
        %4675 = vmatpush1.msra.mxu0 %v3667
        %4676 = vmatprep.subr.mxu0 %v3672
        %4677 = vmatpush1.msra.mxu0 %v3671
        %4678 = vmatprep.mubr.f32.mxu0 %v4195
        %4679 = vmatmul.mubr.f32.gmra.mrb[0].mxu0 %v4191
        %v4680 = vpop.f32.mrb[0].mxu0
        %v4681 = vadd.f32 %v4250, %v4680
        %v4682 = vpop.f32.mrb[0].mxu0
        %v4683 = vadd.f32 %v4254, %v4682
        %4684 = vdwg.mxu0
        %4685 = vmatprep.subr.mxu0 %v3676
        %4686 = vmatpush1.msra.mxu0 %v3675
        %4687 = vmatprep.subr.mxu0 %v3680
        %4688 = vmatpush1.msra.mxu0 %v3679
        %4689 = vmatprep.subr.mxu0 %v3684
        %4690 = vmatpush1.msra.mxu0 %v3683
        %4691 = vmatprep.subr.mxu0 %v3688
        %4692 = vmatpush1.msra.mxu0 %v3687
        %4693 = vmatprep.subr.mxu0 %v3692
        %4694 = vmatpush1.msra.mxu0 %v3691
        %4695 = vmatprep.subr.mxu0 %v3696
        %4696 = vmatpush1.msra.mxu0 %v3695
        %4697 = vmatprep.subr.mxu0 %v3700
        %4698 = vmatpush1.msra.mxu0 %v3699
        %4699 = vmatprep.subr.mxu0 %v3704
        %4700 = vmatpush1.msra.mxu0 %v3703
        %4701 = vmatprep.subr.mxu0 %v3708
        %4702 = vmatpush1.msra.mxu0 %v3707
        %4703 = vmatprep.subr.mxu0 %v3712
        %4704 = vmatpush1.msra.mxu0 %v3711
        %4705 = vmatprep.subr.mxu0 %v3716
        %4706 = vmatpush1.msra.mxu0 %v3715
        %4707 = vmatprep.subr.mxu0 %v3720
        %4708 = vmatpush1.msra.mxu0 %v3719
        %4709 = vmatprep.subr.mxu0 %v3724
        %4710 = vmatpush1.msra.mxu0 %v3723
        %4711 = vmatprep.subr.mxu0 %v3728
        %4712 = vmatpush1.msra.mxu0 %v3727
        %4713 = vmatprep.subr.mxu0 %v3732
        %4714 = vmatpush1.msra.mxu0 %v3731
        %4715 = vmatprep.subr.mxu0 %v3736
        %4716 = vmatpush1.msra.mxu0 %v3735
        %4717 = vmatprep.subr.mxu0 %v3740
        %4718 = vmatpush1.msra.mxu0 %v3739
        %4719 = vmatprep.subr.mxu0 %v3744
        %4720 = vmatpush1.msra.mxu0 %v3743
        %4721 = vmatprep.subr.mxu0 %v3748
        %4722 = vmatpush1.msra.mxu0 %v3747
        %4723 = vmatprep.subr.mxu0 %v3752
        %4724 = vmatpush1.msra.mxu0 %v3751
        %4725 = vmatprep.subr.mxu0 %v3756
        %4726 = vmatpush1.msra.mxu0 %v3755
        %4727 = vmatprep.subr.mxu0 %v3760
        %4728 = vmatpush1.msra.mxu0 %v3759
        %4729 = vmatprep.subr.mxu0 %v3764
        %4730 = vmatpush1.msra.mxu0 %v3763
        %4731 = vmatprep.subr.mxu0 %v3768
        %4732 = vmatpush1.msra.mxu0 %v3767
        %4733 = vmatprep.subr.mxu0 %v3772
        %4734 = vmatpush1.msra.mxu0 %v3771
        %4735 = vmatprep.subr.mxu0 %v3776
        %4736 = vmatpush1.msra.mxu0 %v3775
        %4737 = vmatprep.subr.mxu0 %v3780
        %4738 = vmatpush1.msra.mxu0 %v3779
        %4739 = vmatprep.subr.mxu0 %v3784
        %4740 = vmatpush1.msra.mxu0 %v3783
        %4741 = vmatprep.subr.mxu0 %v3788
        %4742 = vmatpush1.msra.mxu0 %v3787
        %4743 = vmatprep.subr.mxu0 %v3792
        %4744 = vmatpush1.msra.mxu0 %v3791
        %4745 = vmatprep.subr.mxu0 %v3796
        %4746 = vmatpush1.msra.mxu0 %v3795
        %4747 = vmatprep.subr.mxu0 %v3800
        %4748 = vmatpush1.msra.mxu0 %v3799
        %4749 = vmatprep.mubr.f32.mxu0 %v4203
        %4750 = vmatmul.mubr.f32.gmra.mrb[0].mxu0 %v4199
        %v4751 = vpop.f32.mrb[0].mxu0
        %v4752 = vadd.f32 %v4681, %v4751
        %v4753 = vpop.f32.mrb[0].mxu0
        %v4754 = vadd.f32 %v4683, %v4753
        %4755 = vdwg.mxu0
        %4756 = vmatprep.subr.mxu0 %v3804
        %4757 = vmatpush1.msra.mxu0 %v3803
        %4758 = vmatprep.subr.mxu0 %v3808
        %4759 = vmatpush1.msra.mxu0 %v3807
        %4760 = vmatprep.subr.mxu0 %v3812
        %4761 = vmatpush1.msra.mxu0 %v3811
        %4762 = vmatprep.subr.mxu0 %v3816
        %4763 = vmatpush1.msra.mxu0 %v3815
        %4764 = vmatprep.subr.mxu0 %v3820
        %4765 = vmatpush1.msra.mxu0 %v3819
        %4766 = vmatprep.subr.mxu0 %v3824
        %4767 = vmatpush1.msra.mxu0 %v3823
        %4768 = vmatprep.subr.mxu0 %v3828
        %4769 = vmatpush1.msra.mxu0 %v3827
        %4770 = vmatprep.subr.mxu0 %v3832
        %4771 = vmatpush1.msra.mxu0 %v3831
        %4772 = vmatprep.subr.mxu0 %v3836
        %4773 = vmatpush1.msra.mxu0 %v3835
        %4774 = vmatprep.subr.mxu0 %v3840
        %4775 = vmatpush1.msra.mxu0 %v3839
        %4776 = vmatprep.subr.mxu0 %v3844
        %4777 = vmatpush1.msra.mxu0 %v3843
        %4778 = vmatprep.subr.mxu0 %v3848
        %4779 = vmatpush1.msra.mxu0 %v3847
        %4780 = vmatprep.subr.mxu0 %v3852
        %4781 = vmatpush1.msra.mxu0 %v3851
        %4782 = vmatprep.subr.mxu0 %v3856
        %4783 = vmatpush1.msra.mxu0 %v3855
        %4784 = vmatprep.subr.mxu0 %v3860
        %4785 = vmatpush1.msra.mxu0 %v3859
        %4786 = vmatprep.subr.mxu0 %v3864
        %4787 = vmatpush1.msra.mxu0 %v3863
        %4788 = vmatprep.subr.mxu0 %v3868
        %4789 = vmatpush1.msra.mxu0 %v3867
        %4790 = vmatprep.subr.mxu0 %v3872
        %4791 = vmatpush1.msra.mxu0 %v3871
        %4792 = vmatprep.subr.mxu0 %v3876
        %4793 = vmatpush1.msra.mxu0 %v3875
        %4794 = vmatprep.subr.mxu0 %v3880
        %4795 = vmatpush1.msra.mxu0 %v3879
        %4796 = vmatprep.subr.mxu0 %v3884
        %4797 = vmatpush1.msra.mxu0 %v3883
        %4798 = vmatprep.subr.mxu0 %v3888
        %4799 = vmatpush1.msra.mxu0 %v3887
        %4800 = vmatprep.subr.mxu0 %v3892
        %4801 = vmatpush1.msra.mxu0 %v3891
        %4802 = vmatprep.subr.mxu0 %v3896
        %4803 = vmatpush1.msra.mxu0 %v3895
        %4804 = vmatprep.subr.mxu0 %v3900
        %4805 = vmatpush1.msra.mxu0 %v3899
        %4806 = vmatprep.subr.mxu0 %v3904
        %4807 = vmatpush1.msra.mxu0 %v3903
        %4808 = vmatprep.subr.mxu0 %v3908
        %4809 = vmatpush1.msra.mxu0 %v3907
        %4810 = vmatprep.subr.mxu0 %v3912
        %4811 = vmatpush1.msra.mxu0 %v3911
        %4812 = vmatprep.subr.mxu0 %v3916
        %4813 = vmatpush1.msra.mxu0 %v3915
        %4814 = vmatprep.subr.mxu0 %v3920
        %4815 = vmatpush1.msra.mxu0 %v3919
        %4816 = vmatprep.subr.mxu0 %v3924
        %4817 = vmatpush1.msra.mxu0 %v3923
        %4818 = vmatprep.subr.mxu0 %v3928
        %4819 = vmatpush1.msra.mxu0 %v3927
        %4820 = vmatprep.mubr.f32.mxu0 %v4211
        %4821 = vmatmul.mubr.f32.gmra.mrb[0].mxu0 %v4207
        %v4822 = vpop.f32.mrb[0].mxu0
        %v4823 = vadd.f32 %v4752, %v4822
        %v4824 = vpop.f32.mrb[0].mxu0
        %v4825 = vadd.f32 %v4754, %v4824
        %4826 = vdwg.mxu0
        %4827 = vmatprep.subr.mxu0 %v3932
        %4828 = vmatpush1.msra.mxu0 %v3931
        %4829 = vmatprep.subr.mxu0 %v3936
        %4830 = vmatpush1.msra.mxu0 %v3935
        %4831 = vmatprep.subr.mxu0 %v3940
        %4832 = vmatpush1.msra.mxu0 %v3939
        %4833 = vmatprep.subr.mxu0 %v3944
        %4834 = vmatpush1.msra.mxu0 %v3943
        %4835 = vmatprep.subr.mxu0 %v3948
        %4836 = vmatpush1.msra.mxu0 %v3947
        %4837 = vmatprep.subr.mxu0 %v3952
        %4838 = vmatpush1.msra.mxu0 %v3951
        %4839 = vmatprep.subr.mxu0 %v3956
        %4840 = vmatpush1.msra.mxu0 %v3955
        %4841 = vmatprep.subr.mxu0 %v3960
        %4842 = vmatpush1.msra.mxu0 %v3959
        %4843 = vmatprep.subr.mxu0 %v3964
        %4844 = vmatpush1.msra.mxu0 %v3963
        %4845 = vmatprep.subr.mxu0 %v3968
        %4846 = vmatpush1.msra.mxu0 %v3967
        %4847 = vmatprep.subr.mxu0 %v3972
        %4848 = vmatpush1.msra.mxu0 %v3971
        %4849 = vmatprep.subr.mxu0 %v3976
        %4850 = vmatpush1.msra.mxu0 %v3975
        %4851 = vmatprep.subr.mxu0 %v3980
        %4852 = vmatpush1.msra.mxu0 %v3979
        %4853 = vmatprep.subr.mxu0 %v3984
        %4854 = vmatpush1.msra.mxu0 %v3983
        %4855 = vmatprep.subr.mxu0 %v3988
        %4856 = vmatpush1.msra.mxu0 %v3987
        %4857 = vmatprep.subr.mxu0 %v3992
        %4858 = vmatpush1.msra.mxu0 %v3991
        %4859 = vmatprep.subr.mxu0 %v3996
        %4860 = vmatpush1.msra.mxu0 %v3995
        %4861 = vmatprep.subr.mxu0 %v4000
        %4862 = vmatpush1.msra.mxu0 %v3999
        %4863 = vmatprep.subr.mxu0 %v4004
        %4864 = vmatpush1.msra.mxu0 %v4003
        %4865 = vmatprep.subr.mxu0 %v4008
        %4866 = vmatpush1.msra.mxu0 %v4007
        %4867 = vmatprep.subr.mxu0 %v4012
        %4868 = vmatpush1.msra.mxu0 %v4011
        %4869 = vmatprep.subr.mxu0 %v4016
        %4870 = vmatpush1.msra.mxu0 %v4015
        %4871 = vmatprep.subr.mxu0 %v4020
        %4872 = vmatpush1.msra.mxu0 %v4019
        %4873 = vmatprep.subr.mxu0 %v4024
        %4874 = vmatpush1.msra.mxu0 %v4023
        %4875 = vmatprep.subr.mxu0 %v4028
        %4876 = vmatpush1.msra.mxu0 %v4027
        %4877 = vmatprep.subr.mxu0 %v4032
        %4878 = vmatpush1.msra.mxu0 %v4031
        %4879 = vmatprep.subr.mxu0 %v4036
        %4880 = vmatpush1.msra.mxu0 %v4035
        %4881 = vmatprep.subr.mxu0 %v4040
        %4882 = vmatpush1.msra.mxu0 %v4039
        %4883 = vmatprep.subr.mxu0 %v4044
        %4884 = vmatpush1.msra.mxu0 %v4043
        %4885 = vmatprep.subr.mxu0 %v4048
        %4886 = vmatpush1.msra.mxu0 %v4047
        %4887 = vmatprep.subr.mxu0 %v4052
        %4888 = vmatpush1.msra.mxu0 %v4051
        %4889 = vmatprep.subr.mxu0 %v4056
        %4890 = vmatpush1.msra.mxu0 %v4055
        %4891 = vmatprep.mubr.f32.mxu0 %v4219
        %4892 = vmatmul.mubr.f32.gmra.mrb[0].mxu0 %v4215
        %v4893 = vpop.f32.mrb[0].mxu0
        %v4894 = vadd.f32 %v4823, %v4893
        %v4895 = vpop.f32.mrb[0].mxu0
        %v4896 = vadd.f32 %v4825, %v4895
        %4897 = vdwg.mxu0
        %4898 = vmatprep.subr.mxu0 %v4060
        %4899 = vmatpush1.msra.mxu0 %v4059
        %4900 = vmatprep.subr.mxu0 %v4064
        %4901 = vmatpush1.msra.mxu0 %v4063
        %4902 = vmatprep.subr.mxu0 %v4068
        %4903 = vmatpush1.msra.mxu0 %v4067
        %4904 = vmatprep.subr.mxu0 %v4072
        %4905 = vmatpush1.msra.mxu0 %v4071
        %4906 = vmatprep.subr.mxu0 %v4076
        %4907 = vmatpush1.msra.mxu0 %v4075
        %4908 = vmatprep.subr.mxu0 %v4080
        %4909 = vmatpush1.msra.mxu0 %v4079
        %4910 = vmatprep.subr.mxu0 %v4084
        %4911 = vmatpush1.msra.mxu0 %v4083
        %4912 = vmatprep.subr.mxu0 %v4088
        %4913 = vmatpush1.msra.mxu0 %v4087
        %4914 = vmatprep.subr.mxu0 %v4092
        %4915 = vmatpush1.msra.mxu0 %v4091
        %4916 = vmatprep.subr.mxu0 %v4096
        %4917 = vmatpush1.msra.mxu0 %v4095
        %4918 = vmatprep.subr.mxu0 %v4100
        %4919 = vmatpush1.msra.mxu0 %v4099
        %4920 = vmatprep.subr.mxu0 %v4104
        %4921 = vmatpush1.msra.mxu0 %v4103
        %4922 = vmatprep.subr.mxu0 %v4108
        %4923 = vmatpush1.msra.mxu0 %v4107
        %4924 = vmatprep.subr.mxu0 %v4112
        %4925 = vmatpush1.msra.mxu0 %v4111
        %4926 = vmatprep.subr.mxu0 %v4116
        %4927 = vmatpush1.msra.mxu0 %v4115
        %4928 = vmatprep.subr.mxu0 %v4120
        %4929 = vmatpush1.msra.mxu0 %v4119
        %4930 = vmatprep.subr.mxu0 %v4124
        %4931 = vmatpush1.msra.mxu0 %v4123
        %4932 = vmatprep.subr.mxu0 %v4128
        %4933 = vmatpush1.msra.mxu0 %v4127
        %4934 = vmatprep.subr.mxu0 %v4132
        %4935 = vmatpush1.msra.mxu0 %v4131
        %4936 = vmatprep.subr.mxu0 %v4136
        %4937 = vmatpush1.msra.mxu0 %v4135
        %4938 = vmatprep.subr.mxu0 %v4140
        %4939 = vmatpush1.msra.mxu0 %v4139
        %4940 = vmatprep.subr.mxu0 %v4144
        %4941 = vmatpush1.msra.mxu0 %v4143
        %4942 = vmatprep.subr.mxu0 %v4148
        %4943 = vmatpush1.msra.mxu0 %v4147
        %4944 = vmatprep.subr.mxu0 %v4152
        %4945 = vmatpush1.msra.mxu0 %v4151
        %4946 = vmatprep.subr.mxu0 %v4156
        %4947 = vmatpush1.msra.mxu0 %v4155
        %4948 = vmatprep.subr.mxu0 %v4160
        %4949 = vmatpush1.msra.mxu0 %v4159
        %4950 = vmatprep.subr.mxu0 %v4164
        %4951 = vmatpush1.msra.mxu0 %v4163
        %4952 = vmatprep.subr.mxu0 %v4168
        %4953 = vmatpush1.msra.mxu0 %v4167
        %4954 = vmatprep.subr.mxu0 %v4172
        %4955 = vmatpush1.msra.mxu0 %v4171
        %4956 = vmatprep.subr.mxu0 %v4176
        %4957 = vmatpush1.msra.mxu0 %v4175
        %4958 = vmatprep.subr.mxu0 %v4180
        %4959 = vmatpush1.msra.mxu0 %v4179
        %4960 = vmatprep.subr.mxu0 %v4184
        %4961 = vmatpush1.msra.mxu0 %v4183
        %4962 = vmatprep.mubr.f32.mxu0 %v4227
        %4963 = vmatmul.mubr.f32.gmra.mrb[0].mxu0 %v4223
        %v4964 = vpop.f32.mrb[0].mxu0
        %v4965 = vadd.f32 %v4894, %v4964
        %v4966 = vpop.f32.mrb[0].mxu0
        %v4967 = vadd.f32 %v4896, %v4966
        %4968 = vdwg.mxu0
        %v4969 = vmax.f32 %v4610, 0.0
        %v4970 = vmax.f32 %v4612, 0.0
        %v4971 = vmax.f32 %v4965, 0.0
        %v4972 = vmax.f32 %v4967, 0.0
        %v4973 = vld [vmem:[%s11] sm:$0xf]
        %v4975 = vlaneseq
        %v4976 = vshrl.u32 %v4975, 7
        %v4977 = vsub.s32 0, %v4976
        %v4978 = vrot.slane %v4973, %v4977
        %v4979 = vlaneseq
        %v4980 = vshrl.u32 %v4979, 7
        %v4981 = vsub.s32 1, %v4980
        %v4982 = vrot.slane %v4973, %v4981
        %v4983 = vlaneseq
        %v4984 = vshrl.u32 %v4983, 7
        %v4985 = vsub.s32 2, %v4984
        %v4986 = vrot.slane %v4973, %v4985
        %v4987 = vlaneseq
        %v4988 = vshrl.u32 %v4987, 7
        %v4989 = vsub.s32 3, %v4988
        %v4990 = vrot.slane %v4973, %v4989
        %v4995 = vmul.f32 %v4969, %v4978
        %v4996 = vmul.f32 %v4970, %v4982
        %v4997 = vmul.f32 %v4971, %v4986
        %v4998 = vmul.f32 %v4972, %v4990
        %vm4999 = vcmask 1040384
        %v5000 = vsel %vm4999, %v4995, 0.0
        %v5001 = vsel %vm4999, %v4996, 0.0
        %v5002 = vadd.f32 %v5000, %v5001
        %v5003 = vsel %vm4999, %v4997, 0.0
        %v5004 = vadd.f32 %v5002, %v5003
        %v5005 = vsel %vm4999, %v4998, 0.0
        %v5006 = vadd.f32 %v5004, %v5005
        %5007 = vadd.xlane.f32.xlu0 %v5006
        %v5008 = vpop.xlane.xlu0 %5007
        %v5009 = vld [vmem:[#allocation3] sm:$0x1]
        %v5010 = vadd.f32 %v5008, %v5009
        %v5011 = vxor.u32 %v5010, 2147483648
        %v5012 = vmul.f32 %v5011, 1.442695
        %v5013 = vpow.pop %v5012
        %v5014 = vadd.f32 %v5013, 1.0
        %v5015 = vrcp.pop %v5014
        %v5016 = vmul.f32 1.0, %v5015
        %vm5017 = vcmask 0
        %5018 = vst.msk [vmem:[%s466] sm:$0x1] %vm5017, %v5016
      $region80: #{efficientnet_with_se_forward.1} parent=71 // pred_fallthru
        _
      %p5019 = scmp.lt.s32.totalorder %s30, 1
      %s5020 = scalar_select %p5019, %s30, 1
      %s5021 = scalar_lea.vmem %s13, %s5020
      // Predicated region
      $region81: #{efficientnet_with_se_forward.1} parent=71 // pred_check
        %p5022 = pneg %p336
      $region82: #{efficientnet_with_se_forward.1} parent=71 // pred_check_branch
        %5024 = sbr.rel (%p5022) target = $region84
      $region83: #{efficientnet_with_se_forward.1} parent=71 // pred_region
        _
      $region84: #{efficientnet_with_se_forward.1} parent=71 // pred_fallthru
        _
    $region72: #{efficientnet_with_se_forward.1} parent=5 // pred_fallthru
      _
    %p5025 = scmp.le.s32.totalorder 2, %s21
    // Predicated region
    $region85: #{efficientnet_with_se_forward.1} parent=5 // pred_check
      %p5026 = pneg %p5025
    $region86: #{efficientnet_with_se_forward.1} parent=5 // pred_check_branch
      %5028 = sbr.rel (%p5026) target = $region88
    $region87: #{efficientnet_with_se_forward.1} parent=5 // pred_region
      %s5029 = ssub.s32 %s21, 2
      // Predicated region
      $region89: #{efficientnet_with_se_forward.1} parent=87 // pred_check
        %p5030 = pneg %p342
      $region90: #{efficientnet_with_se_forward.1} parent=87 // pred_check_branch
        %5032 = sbr.rel (%p5030) target = $region92
      $region91: #{efficientnet_with_se_forward.1} parent=87 // pred_region
        %p5033 = scmp.lt.s32.totalorder %s32, 1
        %s5034 = scalar_select %p5033, %s32, 1
        %s5035 = scalar_lea.vmem %s13, %s5034
      $region92: #{efficientnet_with_se_forward.1} parent=87 // pred_fallthru
        _
    $region88: #{efficientnet_with_se_forward.1} parent=5 // pred_fallthru
      _
  $region6: #{efficientnet_with_se_forward.1} parent=0 // loop_footer
    %s25 = sadd.s32 1, %s21
  $region7: #{efficientnet_with_se_forward.1} parent=0 // loop_footer_branch
    %20 = sbr.rel target = $region3
  $region8: #{efficientnet_with_se_forward.1} parent=0 // loop_exit
    _

</llo_original>
